<compile_context>
chip_gen: v5e
topology: v5e:2x2
jax: 0.10.0
libtpu: 0.0.40
codegen_flags: <defaults>
</compile_context>

<pallas_src>
import functools

import jax
import jax.numpy as jnp
import numpy as np
from jax.experimental import pallas as pl
from jax.experimental.pallas import tpu as pltpu

# Geometry implied by the PyTorch module (input 4x16x16).
H = W = 16
C_IN = 4
K1, OC1, OC1_PAD = 5, 25, 32      # conv_1: 4 -> 25 (padded to 32 channels)
K2, OC2 = 3, 16                   # conv_2: 25 -> 16
KC1 = K1 * C_IN                   # 20: kw-packed conv_1 contraction lanes
# Row counts in the "flattened rows with garbage margins" representation
# (row index r = h*W + w, original stride W = 16 kept through every layer):
M1 = 11 * W + 11 + 1              # 188: conv_1 rows (valid where h, w < 12)
M2 = 9 * W + 9 + 1                # 154: conv_2 rows (valid where h, w < 10)
MP = 8 * W + 8 + 1                # 137: pooled rows (useful at r = 32*ph + 2*pw)
OUT_PAD = 128                     # lane-dense final store (n_outputs padded)


def fused_dql_kernel(x_ref, w1_ref, b1_ref, w2_ref, b2_ref,
                     wl1_ref, bl1_ref, wl2_ref, bl2_ref,
                     o_ref, h1_s, h2_s, pm_s):
    """Entire DQL_Model forward for one batch element (grid step)."""
    # ---- conv_1 (4->25, k=5, VALID): kw pre-packed into lanes, so only the
    # 5 kh taps remain; every slice starts at a sublane-aligned row (kh*16).
    acc1 = jnp.zeros((M1, OC1_PAD), jnp.float32)
    for kh in range(K1):
        off = kh * W
        acc1 = acc1 + jnp.dot(x_ref[off:off + M1, :],               # (M1, 20)
                              w1_ref[kh],                           # (20, 32)
                              preferred_element_type=jnp.float32)
    h1_s[...] = jnp.maximum(acc1 + b1_ref[...], 0.0)
    # drop_1: identity at inference.

    # ---- conv_2 (25->16, k=3, VALID) + bias + ReLU ----
    acc2 = jnp.zeros((M2, OC2), jnp.float32)
    for kh in range(K2):
        for kw in range(K2):
            off = kh * W + kw
            acc2 = acc2 + jnp.dot(h1_s[off:off + M2, :],            # (M2, 32)
                                  w2_ref[kh * K2 + kw],             # (32, 16)
                                  preferred_element_type=jnp.float32)
    h2_s[...] = jnp.maximum(acc2 + b2_ref[...], 0.0)

    # ---- MaxPool2d(2): elementwise max of the four 2x2 taps (shifted slices) ----
    pm_s[...] = jnp.maximum(
        jnp.maximum(h2_s[0:MP, :], h2_s[1:MP + 1, :]),
        jnp.maximum(h2_s[W:MP + W, :], h2_s[W + 1:MP + W + 1, :]))

    # ---- flatten (ph, pw, c) + lin_1 + ReLU (accumulated per pooled position) ----
    n_hidden = bl1_ref.shape[1]
    acc3 = jnp.zeros((1, n_hidden), jnp.float32)
    for ph in range(5):
        for pw in range(5):
            r = 32 * ph + 2 * pw                                    # pooled row
            acc3 = acc3 + jnp.dot(pm_s[r:r + 1, :],                 # (1, 16)
                                  wl1_ref[ph * 5 + pw],             # (16, n_hidden)
                                  preferred_element_type=jnp.float32)
    hid = jnp.maximum(acc3 + bl1_ref[...], 0.0)
    # drop_2: identity at inference.

    # ---- lin_2 (lane-dense padded output) ----
    o_ref[...] = (jnp.dot(hid, wl2_ref[...], preferred_element_type=jnp.float32)
                  + bl2_ref[...])


def prepare_params(params):
    """One-time prep: transpose / flatten / zero-pad PyTorch-layout weights into
    the lane-major (K, N) shapes the fused kernel consumes."""
    w1, b1, w2, b2, wl1, bl1, wl2, bl2 = params
    n_hidden = wl1.shape[0]
    n_out = wl2.shape[0]
    # conv_1: (OC, C, KH, KW) -> (KH, KW*C, OC_pad), matching the kw-packed
    # input lanes (lane index = kw*C_IN + c).
    w1p = jnp.transpose(w1, (2, 3, 1, 0)).reshape(K1, KC1, OC1)
    w1p = jnp.pad(w1p, ((0, 0), (0, 0), (0, OC1_PAD - OC1)))
    b1p = jnp.pad(b1, (0, OC1_PAD - OC1)).reshape(1, OC1_PAD)
    # conv_2: (OC, C, KH, KW) -> (KH*KW, C_pad, OC); pad rows are zero so the
    # (zero) padded conv_1 channels contribute nothing.
    w2p = jnp.transpose(w2, (2, 3, 1, 0)).reshape(K2 * K2, OC1, OC2)
    w2p = jnp.pad(w2p, ((0, 0), (0, OC1_PAD - OC1), (0, 0)))
    b2p = b2.reshape(1, OC2)
    # lin_1: wl1 columns follow PyTorch's (c, ph, pw) Flatten; reorder to the
    # kernel's per-pooled-position blocks: (25, 16, n_hidden).
    wl1p = (wl1.reshape(n_hidden, OC2, 5, 5)
               .transpose(0, 2, 3, 1)            # (n_hidden, ph, pw, c)
               .reshape(n_hidden, 25, OC2)
               .transpose(1, 2, 0))              # (25, 16, n_hidden)
    bl1p = bl1.reshape(1, n_hidden)
    # lin_2: pad outputs to a 128-lane slab (sliced back in the wrapper).
    wl2p = jnp.pad(wl2.T, ((0, 0), (0, OUT_PAD - n_out)))
    bl2p = jnp.pad(bl2, (0, OUT_PAD - n_out)).reshape(1, OUT_PAD)
    return (w1p, b1p, w2p, b2p, wl1p, bl1p, wl2p, bl2p)


@functools.partial(jax.jit, static_argnames=("n_outputs",))
def dql_forward(x_nchw, prepped, n_outputs=6):
    """Fused Pallas implementation of DQL_Model.forward (inference). x is NCHW."""
    w1p, b1p, w2p, b2p, wl1p, bl1p, wl2p, bl2p = prepped
    B = x_nchw.shape[0]
    assert x_nchw.shape[1:] == (C_IN, H, W)
    n_hidden = bl1p.shape[1]

    # NCHW -> rows r = h*W + w with channels in lanes, then pack the 5 conv_1
    # kw taps into lanes: x_packed[b, r, kw*C + c] = x_rows[b, r + kw, c].
    # (Tiny one-off layout ops; keeps every in-kernel conv_1 slice
    # sublane-aligned and cuts conv_1 from 25 to 5 matmuls.)
    x_rows = x_nchw.transpose(0, 2, 3, 1).reshape(B, H * W, C_IN)
    x_packed = jnp.concatenate(
        [jnp.pad(x_rows[:, kw:, :], ((0, 0), (0, kw), (0, 0)))
         for kw in range(K1)], axis=-1)                    # (B, 256, 20)

    out = pl.pallas_call(
        fused_dql_kernel,
        out_shape=jax.ShapeDtypeStruct((B, 1, OUT_PAD), jnp.float32),
        grid=(B,),
        in_specs=[
            pl.BlockSpec((None, H * W, KC1), lambda b: (b, 0, 0)),
            pl.BlockSpec((K1, KC1, OC1_PAD), lambda b: (0, 0, 0)),
            pl.BlockSpec((1, OC1_PAD), lambda b: (0, 0)),
            pl.BlockSpec((K2 * K2, OC1_PAD, OC2), lambda b: (0, 0, 0)),
            pl.BlockSpec((1, OC2), lambda b: (0, 0)),
            pl.BlockSpec((25, OC2, n_hidden), lambda b: (0, 0, 0)),
            pl.BlockSpec((1, n_hidden), lambda b: (0, 0)),
            pl.BlockSpec((n_hidden, OUT_PAD), lambda b: (0, 0)),
            pl.BlockSpec((1, OUT_PAD), lambda b: (0, 0)),
        ],
        out_specs=pl.BlockSpec((None, 1, OUT_PAD), lambda b: (b, 0, 0)),
        scratch_shapes=[
            pltpu.VMEM((M1, OC1_PAD), jnp.float32),   # conv_1 output (VMEM-resident)
            pltpu.VMEM((M2, OC2), jnp.float32),       # conv_2 output
            pltpu.VMEM((MP, OC2), jnp.float32),       # 2x2 max taps
        ],
        compiler_params=pltpu.CompilerParams(
            dimension_semantics=("parallel",)),
    )(x_packed, w1p, b1p, w2p, b2p, wl1p, bl1p, wl2p, bl2p)
    return out[:, 0, :n_outputs]


def make_params(key, n_hidden=128, n_outputs=6):
    """Deterministic synthetic parameters with PyTorch shapes / xavier bounds."""
    def xavier(k, shape, fan_in, fan_out):
        bound = float(np.sqrt(6.0 / (fan_in + fan_out)))
        return jax.random.uniform(k, shape, jnp.float32, -bound, bound)

    ks = jax.random.split(key, 8)
    w1 = xavier(ks[0], (25, 4, 5, 5), 4 * 25, 25 * 25)
    b1 = jax.random.uniform(ks[1], (25,), jnp.float32, -0.1, 0.1)
    w2 = xavier(ks[2], (16, 25, 3, 3), 25 * 9, 16 * 9)
    b2 = jax.random.uniform(ks[3], (16,), jnp.float32, -0.1, 0.1)
    wl1 = xavier(ks[4], (n_hidden, 400), 400, n_hidden)
    bl1 = jax.random.uniform(ks[5], (n_hidden,), jnp.float32, -0.05, 0.05)
    wl2 = xavier(ks[6], (n_outputs, n_hidden), n_hidden, n_outputs)
    bl2 = jax.random.uniform(ks[7], (n_outputs,), jnp.float32, -0.05, 0.05)
    return (w1, b1, w2, b2, wl1, bl1, wl2, bl2)


def reference_forward(x_nchw, params):
    """Pure-JAX reference with exact PyTorch NCHW conventions (parity check)."""
    w1, b1, w2, b2, wl1, bl1, wl2, bl2 = params
    dn = ('NCHW', 'OIHW', 'NCHW')
    y = jax.lax.conv_general_dilated(x_nchw, w1, (1, 1), 'VALID', dimension_numbers=dn)
    y = jnp.maximum(y + b1[None, :, None, None], 0.0)
    y = jax.lax.conv_general_dilated(y, w2, (1, 1), 'VALID', dimension_numbers=dn)
    y = jnp.maximum(y + b2[None, :, None, None], 0.0)
    y = jax.lax.reduce_window(y, -jnp.inf, jax.lax.max,
                              (1, 1, 2, 2), (1, 1, 2, 2), 'VALID')
    y = y.reshape(y.shape[0], -1)                       # PyTorch Flatten: (c, h, w)
    y = jnp.maximum(y @ wl1.T + bl1, 0.0)
    return y @ wl2.T + bl2


if __name__ == "__main__":
    key = jax.random.PRNGKey(0)
    kx, kp = jax.random.split(key)
    x = jax.random.normal(kx, (2, 4, 16, 16), jnp.float32)   # NCHW, like PyTorch
    params = make_params(kp)
    prepped = prepare_params(params)                          # one-time weight prep

    out = dql_forward(x, prepped)
    out = jax.block_until_ready(out)
    assert out.shape == (2, 6) and out.dtype == jnp.float32

    ref = reference_forward(x, params)
    np.testing.assert_allclose(np.asarray(out), np.asarray(ref), rtol=1e-4, atol=2e-4)

    print("KERNEL_OK")
</pallas_src>

<mosaic_0001>
module attributes {stable_mosaic.version = 11 : i64} {
  func.func @fused_dql_kernel(%arg0: i32, %arg1: memref<1x256x20xf32, #tpu.memory_space<vmem>>, %arg2: memref<5x20x32xf32, #tpu.memory_space<vmem>>, %arg3: memref<1x32xf32, #tpu.memory_space<vmem>>, %arg4: memref<9x32x16xf32, #tpu.memory_space<vmem>>, %arg5: memref<1x16xf32, #tpu.memory_space<vmem>>, %arg6: memref<25x16x128xf32, #tpu.memory_space<vmem>>, %arg7: memref<1x128xf32, #tpu.memory_space<vmem>>, %arg8: memref<128x128xf32, #tpu.memory_space<vmem>>, %arg9: memref<1x128xf32, #tpu.memory_space<vmem>>, %arg10: memref<1x1x128xf32, #tpu.memory_space<vmem>>, %arg11: memref<188x32xf32, #tpu.memory_space<vmem>>, %arg12: memref<154x16xf32, #tpu.memory_space<vmem>>, %arg13: memref<137x16xf32, #tpu.memory_space<vmem>>) attributes {dimension_semantics = [#tpu.dimension_semantics<parallel>], iteration_bounds = array<i64: 2>, scalar_prefetch = 0 : i64, scratch_operands = 3 : i64, tpu.core_type = #tpu.core_type<tc>, window_params = [{transform_indices = @transform_0, window_bounds = array<i64: 1, 256, 20>}, {pipeline_mode = #tpu.pipeline_mode<synchronous>, transform_indices = @transform_1, window_bounds = array<i64: 5, 20, 32>}, {pipeline_mode = #tpu.pipeline_mode<synchronous>, transform_indices = @transform_2, window_bounds = array<i64: 1, 32>}, {pipeline_mode = #tpu.pipeline_mode<synchronous>, transform_indices = @transform_3, window_bounds = array<i64: 9, 32, 16>}, {pipeline_mode = #tpu.pipeline_mode<synchronous>, transform_indices = @transform_4, window_bounds = array<i64: 1, 16>}, {pipeline_mode = #tpu.pipeline_mode<synchronous>, transform_indices = @transform_5, window_bounds = array<i64: 25, 16, 128>}, {pipeline_mode = #tpu.pipeline_mode<synchronous>, transform_indices = @transform_6, window_bounds = array<i64: 1, 128>}, {pipeline_mode = #tpu.pipeline_mode<synchronous>, transform_indices = @transform_7, window_bounds = array<i64: 128, 128>}, {pipeline_mode = #tpu.pipeline_mode<synchronous>, transform_indices = @transform_8, window_bounds = array<i64: 1, 128>}, {transform_indices = @transform_9, window_bounds = array<i64: 1, 1, 128>}]} {
    %cst = arith.constant 0.000000e+00 : f32
    %0 = vector.broadcast %cst : f32 to vector<188x32xf32>
    %c0 = arith.constant 0 : index
    %c0_0 = arith.constant 0 : index
    %c0_1 = arith.constant 0 : index
    %1 = vector.load %arg1[%c0, %c0_0, %c0_1] : memref<1x256x20xf32, #tpu.memory_space<vmem>>, vector<1x188x20xf32>
    %2 = vector.shape_cast %1 : vector<1x188x20xf32> to vector<188x20xf32>
    %c0_2 = arith.constant 0 : index
    %c0_3 = arith.constant 0 : index
    %c0_4 = arith.constant 0 : index
    %3 = vector.load %arg2[%c0_2, %c0_3, %c0_4] : memref<5x20x32xf32, #tpu.memory_space<vmem>>, vector<1x20x32xf32>
    %4 = vector.shape_cast %3 : vector<1x20x32xf32> to vector<20x32xf32>
    %cst_5 = arith.constant dense<0.000000e+00> : vector<188x32xf32>
    %5 = tpu.matmul %2, %4, %cst_5 {dimension_numbers = #tpu.dot_dimension_numbers<[1], [0], [0], [1], [0, 0, 1, 1], [], []>} : vector<188x20xf32>, vector<20x32xf32>, vector<188x32xf32> -> vector<188x32xf32>
    %6 = arith.addf %0, %5 : vector<188x32xf32>
    %c0_6 = arith.constant 0 : index
    %c16 = arith.constant 16 : index
    %c0_7 = arith.constant 0 : index
    %7 = vector.load %arg1[%c0_6, %c16, %c0_7] : memref<1x256x20xf32, #tpu.memory_space<vmem>>, vector<1x188x20xf32>
    %8 = vector.shape_cast %7 : vector<1x188x20xf32> to vector<188x20xf32>
    %c1 = arith.constant 1 : index
    %c0_8 = arith.constant 0 : index
    %c0_9 = arith.constant 0 : index
    %9 = vector.load %arg2[%c1, %c0_8, %c0_9] : memref<5x20x32xf32, #tpu.memory_space<vmem>>, vector<1x20x32xf32>
    %10 = vector.shape_cast %9 : vector<1x20x32xf32> to vector<20x32xf32>
    %cst_10 = arith.constant dense<0.000000e+00> : vector<188x32xf32>
    %11 = tpu.matmul %8, %10, %cst_10 {dimension_numbers = #tpu.dot_dimension_numbers<[1], [0], [0], [1], [0, 0, 1, 1], [], []>} : vector<188x20xf32>, vector<20x32xf32>, vector<188x32xf32> -> vector<188x32xf32>
    %12 = arith.addf %6, %11 : vector<188x32xf32>
    %c0_11 = arith.constant 0 : index
    %c32 = arith.constant 32 : index
    %c0_12 = arith.constant 0 : index
    %13 = vector.load %arg1[%c0_11, %c32, %c0_12] : memref<1x256x20xf32, #tpu.memory_space<vmem>>, vector<1x188x20xf32>
    %14 = vector.shape_cast %13 : vector<1x188x20xf32> to vector<188x20xf32>
    %c2 = arith.constant 2 : index
    %c0_13 = arith.constant 0 : index
    %c0_14 = arith.constant 0 : index
    %15 = vector.load %arg2[%c2, %c0_13, %c0_14] : memref<5x20x32xf32, #tpu.memory_space<vmem>>, vector<1x20x32xf32>
    %16 = vector.shape_cast %15 : vector<1x20x32xf32> to vector<20x32xf32>
    %cst_15 = arith.constant dense<0.000000e+00> : vector<188x32xf32>
    %17 = tpu.matmul %14, %16, %cst_15 {dimension_numbers = #tpu.dot_dimension_numbers<[1], [0], [0], [1], [0, 0, 1, 1], [], []>} : vector<188x20xf32>, vector<20x32xf32>, vector<188x32xf32> -> vector<188x32xf32>
    %18 = arith.addf %12, %17 : vector<188x32xf32>
    %c0_16 = arith.constant 0 : index
    %c48 = arith.constant 48 : index
    %c0_17 = arith.constant 0 : index
    %19 = vector.load %arg1[%c0_16, %c48, %c0_17] : memref<1x256x20xf32, #tpu.memory_space<vmem>>, vector<1x188x20xf32>
    %20 = vector.shape_cast %19 : vector<1x188x20xf32> to vector<188x20xf32>
    %c3 = arith.constant 3 : index
    %c0_18 = arith.constant 0 : index
    %c0_19 = arith.constant 0 : index
    %21 = vector.load %arg2[%c3, %c0_18, %c0_19] : memref<5x20x32xf32, #tpu.memory_space<vmem>>, vector<1x20x32xf32>
    %22 = vector.shape_cast %21 : vector<1x20x32xf32> to vector<20x32xf32>
    %cst_20 = arith.constant dense<0.000000e+00> : vector<188x32xf32>
    %23 = tpu.matmul %20, %22, %cst_20 {dimension_numbers = #tpu.dot_dimension_numbers<[1], [0], [0], [1], [0, 0, 1, 1], [], []>} : vector<188x20xf32>, vector<20x32xf32>, vector<188x32xf32> -> vector<188x32xf32>
    %24 = arith.addf %18, %23 : vector<188x32xf32>
    %c0_21 = arith.constant 0 : index
    %c64 = arith.constant 64 : index
    %c0_22 = arith.constant 0 : index
    %25 = vector.load %arg1[%c0_21, %c64, %c0_22] : memref<1x256x20xf32, #tpu.memory_space<vmem>>, vector<1x188x20xf32>
    %26 = vector.shape_cast %25 : vector<1x188x20xf32> to vector<188x20xf32>
    %c4 = arith.constant 4 : index
    %c0_23 = arith.constant 0 : index
    %c0_24 = arith.constant 0 : index
    %27 = vector.load %arg2[%c4, %c0_23, %c0_24] : memref<5x20x32xf32, #tpu.memory_space<vmem>>, vector<1x20x32xf32>
    %28 = vector.shape_cast %27 : vector<1x20x32xf32> to vector<20x32xf32>
    %cst_25 = arith.constant dense<0.000000e+00> : vector<188x32xf32>
    %29 = tpu.matmul %26, %28, %cst_25 {dimension_numbers = #tpu.dot_dimension_numbers<[1], [0], [0], [1], [0, 0, 1, 1], [], []>} : vector<188x20xf32>, vector<20x32xf32>, vector<188x32xf32> -> vector<188x32xf32>
    %30 = arith.addf %24, %29 : vector<188x32xf32>
    %c0_26 = arith.constant 0 : index
    %c0_27 = arith.constant 0 : index
    %31 = vector.load %arg3[%c0_26, %c0_27] : memref<1x32xf32, #tpu.memory_space<vmem>>, vector<1x32xf32>
    %32 = vector.broadcast %31 : vector<1x32xf32> to vector<188x32xf32>
    %33 = arith.addf %30, %32 : vector<188x32xf32>
    %cst_28 = arith.constant 0.000000e+00 : f32
    %34 = vector.broadcast %cst_28 : f32 to vector<188x32xf32>
    %35 = arith.maximumf %33, %34 : vector<188x32xf32>
    %c0_29 = arith.constant 0 : index
    %c0_30 = arith.constant 0 : index
    %36 = vector.load %arg11[%c0_29, %c0_30] : memref<188x32xf32, #tpu.memory_space<vmem>>, vector<188x32xf32>
    tpu.vector_store %arg11[%c0_29, %c0_30], %35 {strides = array<i32>} : memref<188x32xf32, #tpu.memory_space<vmem>>, vector<188x32xf32>,
    %cst_31 = arith.constant 0.000000e+00 : f32
    %37 = vector.broadcast %cst_31 : f32 to vector<154x16xf32>
    %c0_32 = arith.constant 0 : index
    %c0_33 = arith.constant 0 : index
    %38 = vector.load %arg11[%c0_32, %c0_33] : memref<188x32xf32, #tpu.memory_space<vmem>>, vector<154x32xf32>
    %c0_34 = arith.constant 0 : index
    %c0_35 = arith.constant 0 : index
    %c0_36 = arith.constant 0 : index
    %39 = vector.load %arg4[%c0_34, %c0_35, %c0_36] : memref<9x32x16xf32, #tpu.memory_space<vmem>>, vector<1x32x16xf32>
    %40 = vector.shape_cast %39 : vector<1x32x16xf32> to vector<32x16xf32>
    %cst_37 = arith.constant dense<0.000000e+00> : vector<154x16xf32>
    %41 = tpu.matmul %38, %40, %cst_37 {dimension_numbers = #tpu.dot_dimension_numbers<[1], [0], [0], [1], [0, 0, 1, 1], [], []>} : vector<154x32xf32>, vector<32x16xf32>, vector<154x16xf32> -> vector<154x16xf32>
    %42 = arith.addf %37, %41 : vector<154x16xf32>
    %c1_38 = arith.constant 1 : index
    %c0_39 = arith.constant 0 : index
    %43 = vector.load %arg11[%c1_38, %c0_39] : memref<188x32xf32, #tpu.memory_space<vmem>>, vector<154x32xf32>
    %c1_40 = arith.constant 1 : index
    %c0_41 = arith.constant 0 : index
    %c0_42 = arith.constant 0 : index
    %44 = vector.load %arg4[%c1_40, %c0_41, %c0_42] : memref<9x32x16xf32, #tpu.memory_space<vmem>>, vector<1x32x16xf32>
    %45 = vector.shape_cast %44 : vector<1x32x16xf32> to vector<32x16xf32>
    %cst_43 = arith.constant dense<0.000000e+00> : vector<154x16xf32>
    %46 = tpu.matmul %43, %45, %cst_43 {dimension_numbers = #tpu.dot_dimension_numbers<[1], [0], [0], [1], [0, 0, 1, 1], [], []>} : vector<154x32xf32>, vector<32x16xf32>, vector<154x16xf32> -> vector<154x16xf32>
    %47 = arith.addf %42, %46 : vector<154x16xf32>
    %c2_44 = arith.constant 2 : index
    %c0_45 = arith.constant 0 : index
    %48 = vector.load %arg11[%c2_44, %c0_45] : memref<188x32xf32, #tpu.memory_space<vmem>>, vector<154x32xf32>
    %c2_46 = arith.constant 2 : index
    %c0_47 = arith.constant 0 : index
    %c0_48 = arith.constant 0 : index
    %49 = vector.load %arg4[%c2_46, %c0_47, %c0_48] : memref<9x32x16xf32, #tpu.memory_space<vmem>>, vector<1x32x16xf32>
    %50 = vector.shape_cast %49 : vector<1x32x16xf32> to vector<32x16xf32>
    %cst_49 = arith.constant dense<0.000000e+00> : vector<154x16xf32>
    %51 = tpu.matmul %48, %50, %cst_49 {dimension_numbers = #tpu.dot_dimension_numbers<[1], [0], [0], [1], [0, 0, 1, 1], [], []>} : vector<154x32xf32>, vector<32x16xf32>, vector<154x16xf32> -> vector<154x16xf32>
    %52 = arith.addf %47, %51 : vector<154x16xf32>
    %c16_50 = arith.constant 16 : index
    %c0_51 = arith.constant 0 : index
    %53 = vector.load %arg11[%c16_50, %c0_51] : memref<188x32xf32, #tpu.memory_space<vmem>>, vector<154x32xf32>
    %c3_52 = arith.constant 3 : index
    %c0_53 = arith.constant 0 : index
    %c0_54 = arith.constant 0 : index
    %54 = vector.load %arg4[%c3_52, %c0_53, %c0_54] : memref<9x32x16xf32, #tpu.memory_space<vmem>>, vector<1x32x16xf32>
    %55 = vector.shape_cast %54 : vector<1x32x16xf32> to vector<32x16xf32>
    %cst_55 = arith.constant dense<0.000000e+00> : vector<154x16xf32>
    %56 = tpu.matmul %53, %55, %cst_55 {dimension_numbers = #tpu.dot_dimension_numbers<[1], [0], [0], [1], [0, 0, 1, 1], [], []>} : vector<154x32xf32>, vector<32x16xf32>, vector<154x16xf32> -> vector<154x16xf32>
    %57 = arith.addf %52, %56 : vector<154x16xf32>
    %c17 = arith.constant 17 : index
    %c0_56 = arith.constant 0 : index
    %58 = vector.load %arg11[%c17, %c0_56] : memref<188x32xf32, #tpu.memory_space<vmem>>, vector<154x32xf32>
    %c4_57 = arith.constant 4 : index
    %c0_58 = arith.constant 0 : index
    %c0_59 = arith.constant 0 : index
    %59 = vector.load %arg4[%c4_57, %c0_58, %c0_59] : memref<9x32x16xf32, #tpu.memory_space<vmem>>, vector<1x32x16xf32>
    %60 = vector.shape_cast %59 : vector<1x32x16xf32> to vector<32x16xf32>
    %cst_60 = arith.constant dense<0.000000e+00> : vector<154x16xf32>
    %61 = tpu.matmul %58, %60, %cst_60 {dimension_numbers = #tpu.dot_dimension_numbers<[1], [0], [0], [1], [0, 0, 1, 1], [], []>} : vector<154x32xf32>, vector<32x16xf32>, vector<154x16xf32> -> vector<154x16xf32>
    %62 = arith.addf %57, %61 : vector<154x16xf32>
    %c18 = arith.constant 18 : index
    %c0_61 = arith.constant 0 : index
    %63 = vector.load %arg11[%c18, %c0_61] : memref<188x32xf32, #tpu.memory_space<vmem>>, vector<154x32xf32>
    %c5 = arith.constant 5 : index
    %c0_62 = arith.constant 0 : index
    %c0_63 = arith.constant 0 : index
    %64 = vector.load %arg4[%c5, %c0_62, %c0_63] : memref<9x32x16xf32, #tpu.memory_space<vmem>>, vector<1x32x16xf32>
    %65 = vector.shape_cast %64 : vector<1x32x16xf32> to vector<32x16xf32>
    %cst_64 = arith.constant dense<0.000000e+00> : vector<154x16xf32>
    %66 = tpu.matmul %63, %65, %cst_64 {dimension_numbers = #tpu.dot_dimension_numbers<[1], [0], [0], [1], [0, 0, 1, 1], [], []>} : vector<154x32xf32>, vector<32x16xf32>, vector<154x16xf32> -> vector<154x16xf32>
    %67 = arith.addf %62, %66 : vector<154x16xf32>
    %c32_65 = arith.constant 32 : index
    %c0_66 = arith.constant 0 : index
    %68 = vector.load %arg11[%c32_65, %c0_66] : memref<188x32xf32, #tpu.memory_space<vmem>>, vector<154x32xf32>
    %c6 = arith.constant 6 : index
    %c0_67 = arith.constant 0 : index
    %c0_68 = arith.constant 0 : index
    %69 = vector.load %arg4[%c6, %c0_67, %c0_68] : memref<9x32x16xf32, #tpu.memory_space<vmem>>, vector<1x32x16xf32>
    %70 = vector.shape_cast %69 : vector<1x32x16xf32> to vector<32x16xf32>
    %cst_69 = arith.constant dense<0.000000e+00> : vector<154x16xf32>
    %71 = tpu.matmul %68, %70, %cst_69 {dimension_numbers = #tpu.dot_dimension_numbers<[1], [0], [0], [1], [0, 0, 1, 1], [], []>} : vector<154x32xf32>, vector<32x16xf32>, vector<154x16xf32> -> vector<154x16xf32>
    %72 = arith.addf %67, %71 : vector<154x16xf32>
    %c33 = arith.constant 33 : index
    %c0_70 = arith.constant 0 : index
    %73 = vector.load %arg11[%c33, %c0_70] : memref<188x32xf32, #tpu.memory_space<vmem>>, vector<154x32xf32>
    %c7 = arith.constant 7 : index
    %c0_71 = arith.constant 0 : index
    %c0_72 = arith.constant 0 : index
    %74 = vector.load %arg4[%c7, %c0_71, %c0_72] : memref<9x32x16xf32, #tpu.memory_space<vmem>>, vector<1x32x16xf32>
    %75 = vector.shape_cast %74 : vector<1x32x16xf32> to vector<32x16xf32>
    %cst_73 = arith.constant dense<0.000000e+00> : vector<154x16xf32>
    %76 = tpu.matmul %73, %75, %cst_73 {dimension_numbers = #tpu.dot_dimension_numbers<[1], [0], [0], [1], [0, 0, 1, 1], [], []>} : vector<154x32xf32>, vector<32x16xf32>, vector<154x16xf32> -> vector<154x16xf32>
    %77 = arith.addf %72, %76 : vector<154x16xf32>
    %c34 = arith.constant 34 : index
    %c0_74 = arith.constant 0 : index
    %78 = vector.load %arg11[%c34, %c0_74] : memref<188x32xf32, #tpu.memory_space<vmem>>, vector<154x32xf32>
    %c8 = arith.constant 8 : index
    %c0_75 = arith.constant 0 : index
    %c0_76 = arith.constant 0 : index
    %79 = vector.load %arg4[%c8, %c0_75, %c0_76] : memref<9x32x16xf32, #tpu.memory_space<vmem>>, vector<1x32x16xf32>
    %80 = vector.shape_cast %79 : vector<1x32x16xf32> to vector<32x16xf32>
    %cst_77 = arith.constant dense<0.000000e+00> : vector<154x16xf32>
    %81 = tpu.matmul %78, %80, %cst_77 {dimension_numbers = #tpu.dot_dimension_numbers<[1], [0], [0], [1], [0, 0, 1, 1], [], []>} : vector<154x32xf32>, vector<32x16xf32>, vector<154x16xf32> -> vector<154x16xf32>
    %82 = arith.addf %77, %81 : vector<154x16xf32>
    %c0_78 = arith.constant 0 : index
    %c0_79 = arith.constant 0 : index
    %83 = vector.load %arg5[%c0_78, %c0_79] : memref<1x16xf32, #tpu.memory_space<vmem>>, vector<1x16xf32>
    %84 = vector.broadcast %83 : vector<1x16xf32> to vector<154x16xf32>
    %85 = arith.addf %82, %84 : vector<154x16xf32>
    %cst_80 = arith.constant 0.000000e+00 : f32
    %86 = vector.broadcast %cst_80 : f32 to vector<154x16xf32>
    %87 = arith.maximumf %85, %86 : vector<154x16xf32>
    %c0_81 = arith.constant 0 : index
    %c0_82 = arith.constant 0 : index
    %88 = vector.load %arg12[%c0_81, %c0_82] : memref<154x16xf32, #tpu.memory_space<vmem>>, vector<154x16xf32>
    tpu.vector_store %arg12[%c0_81, %c0_82], %87 {strides = array<i32>} : memref<154x16xf32, #tpu.memory_space<vmem>>, vector<154x16xf32>,
    %c0_83 = arith.constant 0 : index
    %c0_84 = arith.constant 0 : index
    %89 = vector.load %arg12[%c0_83, %c0_84] : memref<154x16xf32, #tpu.memory_space<vmem>>, vector<137x16xf32>
    %c1_85 = arith.constant 1 : index
    %c0_86 = arith.constant 0 : index
    %90 = vector.load %arg12[%c1_85, %c0_86] : memref<154x16xf32, #tpu.memory_space<vmem>>, vector<137x16xf32>
    %91 = arith.maximumf %89, %90 : vector<137x16xf32>
    %c16_87 = arith.constant 16 : index
    %c0_88 = arith.constant 0 : index
    %92 = vector.load %arg12[%c16_87, %c0_88] : memref<154x16xf32, #tpu.memory_space<vmem>>, vector<137x16xf32>
    %c17_89 = arith.constant 17 : index
    %c0_90 = arith.constant 0 : index
    %93 = vector.load %arg12[%c17_89, %c0_90] : memref<154x16xf32, #tpu.memory_space<vmem>>, vector<137x16xf32>
    %94 = arith.maximumf %92, %93 : vector<137x16xf32>
    %95 = arith.maximumf %91, %94 : vector<137x16xf32>
    %c0_91 = arith.constant 0 : index
    %c0_92 = arith.constant 0 : index
    %96 = vector.load %arg13[%c0_91, %c0_92] : memref<137x16xf32, #tpu.memory_space<vmem>>, vector<137x16xf32>
    tpu.vector_store %arg13[%c0_91, %c0_92], %95 {strides = array<i32>} : memref<137x16xf32, #tpu.memory_space<vmem>>, vector<137x16xf32>,
    %cst_93 = arith.constant 0.000000e+00 : f32
    %97 = vector.broadcast %cst_93 : f32 to vector<1x128xf32>
    %c0_94 = arith.constant 0 : index
    %c0_95 = arith.constant 0 : index
    %98 = vector.load %arg13[%c0_94, %c0_95] : memref<137x16xf32, #tpu.memory_space<vmem>>, vector<1x16xf32>
    %c0_96 = arith.constant 0 : index
    %c0_97 = arith.constant 0 : index
    %c0_98 = arith.constant 0 : index
    %99 = vector.load %arg6[%c0_96, %c0_97, %c0_98] : memref<25x16x128xf32, #tpu.memory_space<vmem>>, vector<1x16x128xf32>
    %100 = vector.shape_cast %99 : vector<1x16x128xf32> to vector<16x128xf32>
    %cst_99 = arith.constant dense<0.000000e+00> : vector<1x128xf32>
    %101 = tpu.matmul %98, %100, %cst_99 {dimension_numbers = #tpu.dot_dimension_numbers<[1], [0], [0], [1], [0, 0, 1, 1], [], []>} : vector<1x16xf32>, vector<16x128xf32>, vector<1x128xf32> -> vector<1x128xf32>
    %102 = arith.addf %97, %101 : vector<1x128xf32>
    %c2_100 = arith.constant 2 : index
    %c0_101 = arith.constant 0 : index
    %103 = vector.load %arg13[%c2_100, %c0_101] : memref<137x16xf32, #tpu.memory_space<vmem>>, vector<1x16xf32>
    %c1_102 = arith.constant 1 : index
    %c0_103 = arith.constant 0 : index
    %c0_104 = arith.constant 0 : index
    %104 = vector.load %arg6[%c1_102, %c0_103, %c0_104] : memref<25x16x128xf32, #tpu.memory_space<vmem>>, vector<1x16x128xf32>
    %105 = vector.shape_cast %104 : vector<1x16x128xf32> to vector<16x128xf32>
    %cst_105 = arith.constant dense<0.000000e+00> : vector<1x128xf32>
    %106 = tpu.matmul %103, %105, %cst_105 {dimension_numbers = #tpu.dot_dimension_numbers<[1], [0], [0], [1], [0, 0, 1, 1], [], []>} : vector<1x16xf32>, vector<16x128xf32>, vector<1x128xf32> -> vector<1x128xf32>
    %107 = arith.addf %102, %106 : vector<1x128xf32>
    %c4_106 = arith.constant 4 : index
    %c0_107 = arith.constant 0 : index
    %108 = vector.load %arg13[%c4_106, %c0_107] : memref<137x16xf32, #tpu.memory_space<vmem>>, vector<1x16xf32>
    %c2_108 = arith.constant 2 : index
    %c0_109 = arith.constant 0 : index
    %c0_110 = arith.constant 0 : index
    %109 = vector.load %arg6[%c2_108, %c0_109, %c0_110] : memref<25x16x128xf32, #tpu.memory_space<vmem>>, vector<1x16x128xf32>
    %110 = vector.shape_cast %109 : vector<1x16x128xf32> to vector<16x128xf32>
    %cst_111 = arith.constant dense<0.000000e+00> : vector<1x128xf32>
    %111 = tpu.matmul %108, %110, %cst_111 {dimension_numbers = #tpu.dot_dimension_numbers<[1], [0], [0], [1], [0, 0, 1, 1], [], []>} : vector<1x16xf32>, vector<16x128xf32>, vector<1x128xf32> -> vector<1x128xf32>
    %112 = arith.addf %107, %111 : vector<1x128xf32>
    %c6_112 = arith.constant 6 : index
    %c0_113 = arith.constant 0 : index
    %113 = vector.load %arg13[%c6_112, %c0_113] : memref<137x16xf32, #tpu.memory_space<vmem>>, vector<1x16xf32>
    %c3_114 = arith.constant 3 : index
    %c0_115 = arith.constant 0 : index
    %c0_116 = arith.constant 0 : index
    %114 = vector.load %arg6[%c3_114, %c0_115, %c0_116] : memref<25x16x128xf32, #tpu.memory_space<vmem>>, vector<1x16x128xf32>
    %115 = vector.shape_cast %114 : vector<1x16x128xf32> to vector<16x128xf32>
    %cst_117 = arith.constant dense<0.000000e+00> : vector<1x128xf32>
    %116 = tpu.matmul %113, %115, %cst_117 {dimension_numbers = #tpu.dot_dimension_numbers<[1], [0], [0], [1], [0, 0, 1, 1], [], []>} : vector<1x16xf32>, vector<16x128xf32>, vector<1x128xf32> -> vector<1x128xf32>
    %117 = arith.addf %112, %116 : vector<1x128xf32>
    %c8_118 = arith.constant 8 : index
    %c0_119 = arith.constant 0 : index
    %118 = vector.load %arg13[%c8_118, %c0_119] : memref<137x16xf32, #tpu.memory_space<vmem>>, vector<1x16xf32>
    %c4_120 = arith.constant 4 : index
    %c0_121 = arith.constant 0 : index
    %c0_122 = arith.constant 0 : index
    %119 = vector.load %arg6[%c4_120, %c0_121, %c0_122] : memref<25x16x128xf32, #tpu.memory_space<vmem>>, vector<1x16x128xf32>
    %120 = vector.shape_cast %119 : vector<1x16x128xf32> to vector<16x128xf32>
    %cst_123 = arith.constant dense<0.000000e+00> : vector<1x128xf32>
    %121 = tpu.matmul %118, %120, %cst_123 {dimension_numbers = #tpu.dot_dimension_numbers<[1], [0], [0], [1], [0, 0, 1, 1], [], []>} : vector<1x16xf32>, vector<16x128xf32>, vector<1x128xf32> -> vector<1x128xf32>
    %122 = arith.addf %117, %121 : vector<1x128xf32>
    %c32_124 = arith.constant 32 : index
    %c0_125 = arith.constant 0 : index
    %123 = vector.load %arg13[%c32_124, %c0_125] : memref<137x16xf32, #tpu.memory_space<vmem>>, vector<1x16xf32>
    %c5_126 = arith.constant 5 : index
    %c0_127 = arith.constant 0 : index
    %c0_128 = arith.constant 0 : index
    %124 = vector.load %arg6[%c5_126, %c0_127, %c0_128] : memref<25x16x128xf32, #tpu.memory_space<vmem>>, vector<1x16x128xf32>
    %125 = vector.shape_cast %124 : vector<1x16x128xf32> to vector<16x128xf32>
    %cst_129 = arith.constant dense<0.000000e+00> : vector<1x128xf32>
    %126 = tpu.matmul %123, %125, %cst_129 {dimension_numbers = #tpu.dot_dimension_numbers<[1], [0], [0], [1], [0, 0, 1, 1], [], []>} : vector<1x16xf32>, vector<16x128xf32>, vector<1x128xf32> -> vector<1x128xf32>
    %127 = arith.addf %122, %126 : vector<1x128xf32>
    %c34_130 = arith.constant 34 : index
    %c0_131 = arith.constant 0 : index
    %128 = vector.load %arg13[%c34_130, %c0_131] : memref<137x16xf32, #tpu.memory_space<vmem>>, vector<1x16xf32>
    %c6_132 = arith.constant 6 : index
    %c0_133 = arith.constant 0 : index
    %c0_134 = arith.constant 0 : index
    %129 = vector.load %arg6[%c6_132, %c0_133, %c0_134] : memref<25x16x128xf32, #tpu.memory_space<vmem>>, vector<1x16x128xf32>
    %130 = vector.shape_cast %129 : vector<1x16x128xf32> to vector<16x128xf32>
    %cst_135 = arith.constant dense<0.000000e+00> : vector<1x128xf32>
    %131 = tpu.matmul %128, %130, %cst_135 {dimension_numbers = #tpu.dot_dimension_numbers<[1], [0], [0], [1], [0, 0, 1, 1], [], []>} : vector<1x16xf32>, vector<16x128xf32>, vector<1x128xf32> -> vector<1x128xf32>
    %132 = arith.addf %127, %131 : vector<1x128xf32>
    %c36 = arith.constant 36 : index
    %c0_136 = arith.constant 0 : index
    %133 = vector.load %arg13[%c36, %c0_136] : memref<137x16xf32, #tpu.memory_space<vmem>>, vector<1x16xf32>
    %c7_137 = arith.constant 7 : index
    %c0_138 = arith.constant 0 : index
    %c0_139 = arith.constant 0 : index
    %134 = vector.load %arg6[%c7_137, %c0_138, %c0_139] : memref<25x16x128xf32, #tpu.memory_space<vmem>>, vector<1x16x128xf32>
    %135 = vector.shape_cast %134 : vector<1x16x128xf32> to vector<16x128xf32>
    %cst_140 = arith.constant dense<0.000000e+00> : vector<1x128xf32>
    %136 = tpu.matmul %133, %135, %cst_140 {dimension_numbers = #tpu.dot_dimension_numbers<[1], [0], [0], [1], [0, 0, 1, 1], [], []>} : vector<1x16xf32>, vector<16x128xf32>, vector<1x128xf32> -> vector<1x128xf32>
    %137 = arith.addf %132, %136 : vector<1x128xf32>
    %c38 = arith.constant 38 : index
    %c0_141 = arith.constant 0 : index
    %138 = vector.load %arg13[%c38, %c0_141] : memref<137x16xf32, #tpu.memory_space<vmem>>, vector<1x16xf32>
    %c8_142 = arith.constant 8 : index
    %c0_143 = arith.constant 0 : index
    %c0_144 = arith.constant 0 : index
    %139 = vector.load %arg6[%c8_142, %c0_143, %c0_144] : memref<25x16x128xf32, #tpu.memory_space<vmem>>, vector<1x16x128xf32>
    %140 = vector.shape_cast %139 : vector<1x16x128xf32> to vector<16x128xf32>
    %cst_145 = arith.constant dense<0.000000e+00> : vector<1x128xf32>
    %141 = tpu.matmul %138, %140, %cst_145 {dimension_numbers = #tpu.dot_dimension_numbers<[1], [0], [0], [1], [0, 0, 1, 1], [], []>} : vector<1x16xf32>, vector<16x128xf32>, vector<1x128xf32> -> vector<1x128xf32>
    %142 = arith.addf %137, %141 : vector<1x128xf32>
    %c40 = arith.constant 40 : index
    %c0_146 = arith.constant 0 : index
    %143 = vector.load %arg13[%c40, %c0_146] : memref<137x16xf32, #tpu.memory_space<vmem>>, vector<1x16xf32>
    %c9 = arith.constant 9 : index
    %c0_147 = arith.constant 0 : index
    %c0_148 = arith.constant 0 : index
    %144 = vector.load %arg6[%c9, %c0_147, %c0_148] : memref<25x16x128xf32, #tpu.memory_space<vmem>>, vector<1x16x128xf32>
    %145 = vector.shape_cast %144 : vector<1x16x128xf32> to vector<16x128xf32>
    %cst_149 = arith.constant dense<0.000000e+00> : vector<1x128xf32>
    %146 = tpu.matmul %143, %145, %cst_149 {dimension_numbers = #tpu.dot_dimension_numbers<[1], [0], [0], [1], [0, 0, 1, 1], [], []>} : vector<1x16xf32>, vector<16x128xf32>, vector<1x128xf32> -> vector<1x128xf32>
    %147 = arith.addf %142, %146 : vector<1x128xf32>
    %c64_150 = arith.constant 64 : index
    %c0_151 = arith.constant 0 : index
    %148 = vector.load %arg13[%c64_150, %c0_151] : memref<137x16xf32, #tpu.memory_space<vmem>>, vector<1x16xf32>
    %c10 = arith.constant 10 : index
    %c0_152 = arith.constant 0 : index
    %c0_153 = arith.constant 0 : index
    %149 = vector.load %arg6[%c10, %c0_152, %c0_153] : memref<25x16x128xf32, #tpu.memory_space<vmem>>, vector<1x16x128xf32>
    %150 = vector.shape_cast %149 : vector<1x16x128xf32> to vector<16x128xf32>
    %cst_154 = arith.constant dense<0.000000e+00> : vector<1x128xf32>
    %151 = tpu.matmul %148, %150, %cst_154 {dimension_numbers = #tpu.dot_dimension_numbers<[1], [0], [0], [1], [0, 0, 1, 1], [], []>} : vector<1x16xf32>, vector<16x128xf32>, vector<1x128xf32> -> vector<1x128xf32>
    %152 = arith.addf %147, %151 : vector<1x128xf32>
    %c66 = arith.constant 66 : index
    %c0_155 = arith.constant 0 : index
    %153 = vector.load %arg13[%c66, %c0_155] : memref<137x16xf32, #tpu.memory_space<vmem>>, vector<1x16xf32>
    %c11 = arith.constant 11 : index
    %c0_156 = arith.constant 0 : index
    %c0_157 = arith.constant 0 : index
    %154 = vector.load %arg6[%c11, %c0_156, %c0_157] : memref<25x16x128xf32, #tpu.memory_space<vmem>>, vector<1x16x128xf32>
    %155 = vector.shape_cast %154 : vector<1x16x128xf32> to vector<16x128xf32>
    %cst_158 = arith.constant dense<0.000000e+00> : vector<1x128xf32>
    %156 = tpu.matmul %153, %155, %cst_158 {dimension_numbers = #tpu.dot_dimension_numbers<[1], [0], [0], [1], [0, 0, 1, 1], [], []>} : vector<1x16xf32>, vector<16x128xf32>, vector<1x128xf32> -> vector<1x128xf32>
    %157 = arith.addf %152, %156 : vector<1x128xf32>
    %c68 = arith.constant 68 : index
    %c0_159 = arith.constant 0 : index
    %158 = vector.load %arg13[%c68, %c0_159] : memref<137x16xf32, #tpu.memory_space<vmem>>, vector<1x16xf32>
    %c12 = arith.constant 12 : index
    %c0_160 = arith.constant 0 : index
    %c0_161 = arith.constant 0 : index
    %159 = vector.load %arg6[%c12, %c0_160, %c0_161] : memref<25x16x128xf32, #tpu.memory_space<vmem>>, vector<1x16x128xf32>
    %160 = vector.shape_cast %159 : vector<1x16x128xf32> to vector<16x128xf32>
    %cst_162 = arith.constant dense<0.000000e+00> : vector<1x128xf32>
    %161 = tpu.matmul %158, %160, %cst_162 {dimension_numbers = #tpu.dot_dimension_numbers<[1], [0], [0], [1], [0, 0, 1, 1], [], []>} : vector<1x16xf32>, vector<16x128xf32>, vector<1x128xf32> -> vector<1x128xf32>
    %162 = arith.addf %157, %161 : vector<1x128xf32>
    %c70 = arith.constant 70 : index
    %c0_163 = arith.constant 0 : index
    %163 = vector.load %arg13[%c70, %c0_163] : memref<137x16xf32, #tpu.memory_space<vmem>>, vector<1x16xf32>
    %c13 = arith.constant 13 : index
    %c0_164 = arith.constant 0 : index
    %c0_165 = arith.constant 0 : index
    %164 = vector.load %arg6[%c13, %c0_164, %c0_165] : memref<25x16x128xf32, #tpu.memory_space<vmem>>, vector<1x16x128xf32>
    %165 = vector.shape_cast %164 : vector<1x16x128xf32> to vector<16x128xf32>
    %cst_166 = arith.constant dense<0.000000e+00> : vector<1x128xf32>
    %166 = tpu.matmul %163, %165, %cst_166 {dimension_numbers = #tpu.dot_dimension_numbers<[1], [0], [0], [1], [0, 0, 1, 1], [], []>} : vector<1x16xf32>, vector<16x128xf32>, vector<1x128xf32> -> vector<1x128xf32>
    %167 = arith.addf %162, %166 : vector<1x128xf32>
    %c72 = arith.constant 72 : index
    %c0_167 = arith.constant 0 : index
    %168 = vector.load %arg13[%c72, %c0_167] : memref<137x16xf32, #tpu.memory_space<vmem>>, vector<1x16xf32>
    %c14 = arith.constant 14 : index
    %c0_168 = arith.constant 0 : index
    %c0_169 = arith.constant 0 : index
    %169 = vector.load %arg6[%c14, %c0_168, %c0_169] : memref<25x16x128xf32, #tpu.memory_space<vmem>>, vector<1x16x128xf32>
    %170 = vector.shape_cast %169 : vector<1x16x128xf32> to vector<16x128xf32>
    %cst_170 = arith.constant dense<0.000000e+00> : vector<1x128xf32>
    %171 = tpu.matmul %168, %170, %cst_170 {dimension_numbers = #tpu.dot_dimension_numbers<[1], [0], [0], [1], [0, 0, 1, 1], [], []>} : vector<1x16xf32>, vector<16x128xf32>, vector<1x128xf32> -> vector<1x128xf32>
    %172 = arith.addf %167, %171 : vector<1x128xf32>
    %c96 = arith.constant 96 : index
    %c0_171 = arith.constant 0 : index
    %173 = vector.load %arg13[%c96, %c0_171] : memref<137x16xf32, #tpu.memory_space<vmem>>, vector<1x16xf32>
    %c15 = arith.constant 15 : index
    %c0_172 = arith.constant 0 : index
    %c0_173 = arith.constant 0 : index
    %174 = vector.load %arg6[%c15, %c0_172, %c0_173] : memref<25x16x128xf32, #tpu.memory_space<vmem>>, vector<1x16x128xf32>
    %175 = vector.shape_cast %174 : vector<1x16x128xf32> to vector<16x128xf32>
    %cst_174 = arith.constant dense<0.000000e+00> : vector<1x128xf32>
    %176 = tpu.matmul %173, %175, %cst_174 {dimension_numbers = #tpu.dot_dimension_numbers<[1], [0], [0], [1], [0, 0, 1, 1], [], []>} : vector<1x16xf32>, vector<16x128xf32>, vector<1x128xf32> -> vector<1x128xf32>
    %177 = arith.addf %172, %176 : vector<1x128xf32>
    %c98 = arith.constant 98 : index
    %c0_175 = arith.constant 0 : index
    %178 = vector.load %arg13[%c98, %c0_175] : memref<137x16xf32, #tpu.memory_space<vmem>>, vector<1x16xf32>
    %c16_176 = arith.constant 16 : index
    %c0_177 = arith.constant 0 : index
    %c0_178 = arith.constant 0 : index
    %179 = vector.load %arg6[%c16_176, %c0_177, %c0_178] : memref<25x16x128xf32, #tpu.memory_space<vmem>>, vector<1x16x128xf32>
    %180 = vector.shape_cast %179 : vector<1x16x128xf32> to vector<16x128xf32>
    %cst_179 = arith.constant dense<0.000000e+00> : vector<1x128xf32>
    %181 = tpu.matmul %178, %180, %cst_179 {dimension_numbers = #tpu.dot_dimension_numbers<[1], [0], [0], [1], [0, 0, 1, 1], [], []>} : vector<1x16xf32>, vector<16x128xf32>, vector<1x128xf32> -> vector<1x128xf32>
    %182 = arith.addf %177, %181 : vector<1x128xf32>
    %c100 = arith.constant 100 : index
    %c0_180 = arith.constant 0 : index
    %183 = vector.load %arg13[%c100, %c0_180] : memref<137x16xf32, #tpu.memory_space<vmem>>, vector<1x16xf32>
    %c17_181 = arith.constant 17 : index
    %c0_182 = arith.constant 0 : index
    %c0_183 = arith.constant 0 : index
    %184 = vector.load %arg6[%c17_181, %c0_182, %c0_183] : memref<25x16x128xf32, #tpu.memory_space<vmem>>, vector<1x16x128xf32>
    %185 = vector.shape_cast %184 : vector<1x16x128xf32> to vector<16x128xf32>
    %cst_184 = arith.constant dense<0.000000e+00> : vector<1x128xf32>
    %186 = tpu.matmul %183, %185, %cst_184 {dimension_numbers = #tpu.dot_dimension_numbers<[1], [0], [0], [1], [0, 0, 1, 1], [], []>} : vector<1x16xf32>, vector<16x128xf32>, vector<1x128xf32> -> vector<1x128xf32>
    %187 = arith.addf %182, %186 : vector<1x128xf32>
    %c102 = arith.constant 102 : index
    %c0_185 = arith.constant 0 : index
    %188 = vector.load %arg13[%c102, %c0_185] : memref<137x16xf32, #tpu.memory_space<vmem>>, vector<1x16xf32>
    %c18_186 = arith.constant 18 : index
    %c0_187 = arith.constant 0 : index
    %c0_188 = arith.constant 0 : index
    %189 = vector.load %arg6[%c18_186, %c0_187, %c0_188] : memref<25x16x128xf32, #tpu.memory_space<vmem>>, vector<1x16x128xf32>
    %190 = vector.shape_cast %189 : vector<1x16x128xf32> to vector<16x128xf32>
    %cst_189 = arith.constant dense<0.000000e+00> : vector<1x128xf32>
    %191 = tpu.matmul %188, %190, %cst_189 {dimension_numbers = #tpu.dot_dimension_numbers<[1], [0], [0], [1], [0, 0, 1, 1], [], []>} : vector<1x16xf32>, vector<16x128xf32>, vector<1x128xf32> -> vector<1x128xf32>
    %192 = arith.addf %187, %191 : vector<1x128xf32>
    %c104 = arith.constant 104 : index
    %c0_190 = arith.constant 0 : index
    %193 = vector.load %arg13[%c104, %c0_190] : memref<137x16xf32, #tpu.memory_space<vmem>>, vector<1x16xf32>
    %c19 = arith.constant 19 : index
    %c0_191 = arith.constant 0 : index
    %c0_192 = arith.constant 0 : index
    %194 = vector.load %arg6[%c19, %c0_191, %c0_192] : memref<25x16x128xf32, #tpu.memory_space<vmem>>, vector<1x16x128xf32>
    %195 = vector.shape_cast %194 : vector<1x16x128xf32> to vector<16x128xf32>
    %cst_193 = arith.constant dense<0.000000e+00> : vector<1x128xf32>
    %196 = tpu.matmul %193, %195, %cst_193 {dimension_numbers = #tpu.dot_dimension_numbers<[1], [0], [0], [1], [0, 0, 1, 1], [], []>} : vector<1x16xf32>, vector<16x128xf32>, vector<1x128xf32> -> vector<1x128xf32>
    %197 = arith.addf %192, %196 : vector<1x128xf32>
    %c128 = arith.constant 128 : index
    %c0_194 = arith.constant 0 : index
    %198 = vector.load %arg13[%c128, %c0_194] : memref<137x16xf32, #tpu.memory_space<vmem>>, vector<1x16xf32>
    %c20 = arith.constant 20 : index
    %c0_195 = arith.constant 0 : index
    %c0_196 = arith.constant 0 : index
    %199 = vector.load %arg6[%c20, %c0_195, %c0_196] : memref<25x16x128xf32, #tpu.memory_space<vmem>>, vector<1x16x128xf32>
    %200 = vector.shape_cast %199 : vector<1x16x128xf32> to vector<16x128xf32>
    %cst_197 = arith.constant dense<0.000000e+00> : vector<1x128xf32>
    %201 = tpu.matmul %198, %200, %cst_197 {dimension_numbers = #tpu.dot_dimension_numbers<[1], [0], [0], [1], [0, 0, 1, 1], [], []>} : vector<1x16xf32>, vector<16x128xf32>, vector<1x128xf32> -> vector<1x128xf32>
    %202 = arith.addf %197, %201 : vector<1x128xf32>
    %c130 = arith.constant 130 : index
    %c0_198 = arith.constant 0 : index
    %203 = vector.load %arg13[%c130, %c0_198] : memref<137x16xf32, #tpu.memory_space<vmem>>, vector<1x16xf32>
    %c21 = arith.constant 21 : index
    %c0_199 = arith.constant 0 : index
    %c0_200 = arith.constant 0 : index
    %204 = vector.load %arg6[%c21, %c0_199, %c0_200] : memref<25x16x128xf32, #tpu.memory_space<vmem>>, vector<1x16x128xf32>
    %205 = vector.shape_cast %204 : vector<1x16x128xf32> to vector<16x128xf32>
    %cst_201 = arith.constant dense<0.000000e+00> : vector<1x128xf32>
    %206 = tpu.matmul %203, %205, %cst_201 {dimension_numbers = #tpu.dot_dimension_numbers<[1], [0], [0], [1], [0, 0, 1, 1], [], []>} : vector<1x16xf32>, vector<16x128xf32>, vector<1x128xf32> -> vector<1x128xf32>
    %207 = arith.addf %202, %206 : vector<1x128xf32>
    %c132 = arith.constant 132 : index
    %c0_202 = arith.constant 0 : index
    %208 = vector.load %arg13[%c132, %c0_202] : memref<137x16xf32, #tpu.memory_space<vmem>>, vector<1x16xf32>
    %c22 = arith.constant 22 : index
    %c0_203 = arith.constant 0 : index
    %c0_204 = arith.constant 0 : index
    %209 = vector.load %arg6[%c22, %c0_203, %c0_204] : memref<25x16x128xf32, #tpu.memory_space<vmem>>, vector<1x16x128xf32>
    %210 = vector.shape_cast %209 : vector<1x16x128xf32> to vector<16x128xf32>
    %cst_205 = arith.constant dense<0.000000e+00> : vector<1x128xf32>
    %211 = tpu.matmul %208, %210, %cst_205 {dimension_numbers = #tpu.dot_dimension_numbers<[1], [0], [0], [1], [0, 0, 1, 1], [], []>} : vector<1x16xf32>, vector<16x128xf32>, vector<1x128xf32> -> vector<1x128xf32>
    %212 = arith.addf %207, %211 : vector<1x128xf32>
    %c134 = arith.constant 134 : index
    %c0_206 = arith.constant 0 : index
    %213 = vector.load %arg13[%c134, %c0_206] : memref<137x16xf32, #tpu.memory_space<vmem>>, vector<1x16xf32>
    %c23 = arith.constant 23 : index
    %c0_207 = arith.constant 0 : index
    %c0_208 = arith.constant 0 : index
    %214 = vector.load %arg6[%c23, %c0_207, %c0_208] : memref<25x16x128xf32, #tpu.memory_space<vmem>>, vector<1x16x128xf32>
    %215 = vector.shape_cast %214 : vector<1x16x128xf32> to vector<16x128xf32>
    %cst_209 = arith.constant dense<0.000000e+00> : vector<1x128xf32>
    %216 = tpu.matmul %213, %215, %cst_209 {dimension_numbers = #tpu.dot_dimension_numbers<[1], [0], [0], [1], [0, 0, 1, 1], [], []>} : vector<1x16xf32>, vector<16x128xf32>, vector<1x128xf32> -> vector<1x128xf32>
    %217 = arith.addf %212, %216 : vector<1x128xf32>
    %c136 = arith.constant 136 : index
    %c0_210 = arith.constant 0 : index
    %218 = vector.load %arg13[%c136, %c0_210] : memref<137x16xf32, #tpu.memory_space<vmem>>, vector<1x16xf32>
    %c24 = arith.constant 24 : index
    %c0_211 = arith.constant 0 : index
    %c0_212 = arith.constant 0 : index
    %219 = vector.load %arg6[%c24, %c0_211, %c0_212] : memref<25x16x128xf32, #tpu.memory_space<vmem>>, vector<1x16x128xf32>
    %220 = vector.shape_cast %219 : vector<1x16x128xf32> to vector<16x128xf32>
    %cst_213 = arith.constant dense<0.000000e+00> : vector<1x128xf32>
    %221 = tpu.matmul %218, %220, %cst_213 {dimension_numbers = #tpu.dot_dimension_numbers<[1], [0], [0], [1], [0, 0, 1, 1], [], []>} : vector<1x16xf32>, vector<16x128xf32>, vector<1x128xf32> -> vector<1x128xf32>
    %222 = arith.addf %217, %221 : vector<1x128xf32>
    %c0_214 = arith.constant 0 : index
    %c0_215 = arith.constant 0 : index
    %223 = vector.load %arg7[%c0_214, %c0_215] : memref<1x128xf32, #tpu.memory_space<vmem>>, vector<1x128xf32>
    %224 = arith.addf %222, %223 : vector<1x128xf32>
    %cst_216 = arith.constant 0.000000e+00 : f32
    %225 = vector.broadcast %cst_216 : f32 to vector<1x128xf32>
    %226 = arith.maximumf %224, %225 : vector<1x128xf32>
    %c0_217 = arith.constant 0 : index
    %c0_218 = arith.constant 0 : index
    %227 = vector.load %arg8[%c0_217, %c0_218] : memref<128x128xf32, #tpu.memory_space<vmem>>, vector<128x128xf32>
    %cst_219 = arith.constant dense<0.000000e+00> : vector<1x128xf32>
    %228 = tpu.matmul %226, %227, %cst_219 {dimension_numbers = #tpu.dot_dimension_numbers<[1], [0], [0], [1], [0, 0, 1, 1], [], []>} : vector<1x128xf32>, vector<128x128xf32>, vector<1x128xf32> -> vector<1x128xf32>
    %c0_220 = arith.constant 0 : index
    %c0_221 = arith.constant 0 : index
    %229 = vector.load %arg9[%c0_220, %c0_221] : memref<1x128xf32, #tpu.memory_space<vmem>>, vector<1x128xf32>
    %230 = arith.addf %228, %229 : vector<1x128xf32>
    %c0_222 = arith.constant 0 : index
    %c0_223 = arith.constant 0 : index
    %c0_224 = arith.constant 0 : index
    %231 = vector.load %arg10[%c0_222, %c0_223, %c0_224] : memref<1x1x128xf32, #tpu.memory_space<vmem>>, vector<1x1x128xf32>
    %232 = vector.shape_cast %231 : vector<1x1x128xf32> to vector<1x128xf32>
    %233 = vector.shape_cast %230 : vector<1x128xf32> to vector<1x1x128xf32>
    tpu.vector_store %arg10[%c0_222, %c0_223, %c0_224], %233 {strides = array<i32>} : memref<1x1x128xf32, #tpu.memory_space<vmem>>, vector<1x1x128xf32>,
    return
  }
  func.func @transform_0(%arg0: i32) -> (i32, i32, i32) {
    %c0_i32 = arith.constant 0 : i32
    %c0_i32_0 = arith.constant 0 : i32
    %c0_i32_1 = arith.constant 0 : i32
    return %arg0, %c0_i32, %c0_i32_0 : i32, i32, i32
  }
  func.func @transform_1(%arg0: i32) -> (i32, i32, i32) {
    %c0_i32 = arith.constant 0 : i32
    %c0_i32_0 = arith.constant 0 : i32
    %c0_i32_1 = arith.constant 0 : i32
    %c0_i32_2 = arith.constant 0 : i32
    return %c0_i32, %c0_i32_0, %c0_i32_1 : i32, i32, i32
  }
  func.func @transform_2(%arg0: i32) -> (i32, i32) {
    %c0_i32 = arith.constant 0 : i32
    %c0_i32_0 = arith.constant 0 : i32
    %c0_i32_1 = arith.constant 0 : i32
    return %c0_i32, %c0_i32_0 : i32, i32
  }
  func.func @transform_3(%arg0: i32) -> (i32, i32, i32) {
    %c0_i32 = arith.constant 0 : i32
    %c0_i32_0 = arith.constant 0 : i32
    %c0_i32_1 = arith.constant 0 : i32
    %c0_i32_2 = arith.constant 0 : i32
    return %c0_i32, %c0_i32_0, %c0_i32_1 : i32, i32, i32
  }
  func.func @transform_4(%arg0: i32) -> (i32, i32) {
    %c0_i32 = arith.constant 0 : i32
    %c0_i32_0 = arith.constant 0 : i32
    %c0_i32_1 = arith.constant 0 : i32
    return %c0_i32, %c0_i32_0 : i32, i32
  }
  func.func @transform_5(%arg0: i32) -> (i32, i32, i32) {
    %c0_i32 = arith.constant 0 : i32
    %c0_i32_0 = arith.constant 0 : i32
    %c0_i32_1 = arith.constant 0 : i32
    %c0_i32_2 = arith.constant 0 : i32
    return %c0_i32, %c0_i32_0, %c0_i32_1 : i32, i32, i32
  }
  func.func @transform_6(%arg0: i32) -> (i32, i32) {
    %c0_i32 = arith.constant 0 : i32
    %c0_i32_0 = arith.constant 0 : i32
    %c0_i32_1 = arith.constant 0 : i32
    return %c0_i32, %c0_i32_0 : i32, i32
  }
  func.func @transform_7(%arg0: i32) -> (i32, i32) {
    %c0_i32 = arith.constant 0 : i32
    %c0_i32_0 = arith.constant 0 : i32
    %c0_i32_1 = arith.constant 0 : i32
    return %c0_i32, %c0_i32_0 : i32, i32
  }
  func.func @transform_8(%arg0: i32) -> (i32, i32) {
    %c0_i32 = arith.constant 0 : i32
    %c0_i32_0 = arith.constant 0 : i32
    %c0_i32_1 = arith.constant 0 : i32
    return %c0_i32, %c0_i32_0 : i32, i32
  }
  func.func @transform_9(%arg0: i32) -> (i32, i32, i32) {
    %c0_i32 = arith.constant 0 : i32
    %c0_i32_0 = arith.constant 0 : i32
    %c0_i32_1 = arith.constant 0 : i32
    return %arg0, %c0_i32, %c0_i32_0 : i32, i32, i32
  }
}

</mosaic_0001>

<llo_original>
// kernel: dql_forward.1
$region0: #{dql_forward.1}
  #allocation0 [shape = 'u32[]', space=smem, size = 0x4, offset = 0x4, fixed_abs, tag = 'smem constant byte address 0x4 - core index']
  #allocation1 [shape = 'u32[72,128]{1,0:T(1,128)}', space=vmem, size = 0x9000, scoped, tag = 'internal scratch']
  #allocation2 [shape = 'f32[188,32]{1,0:T(8,128)}', space=vmem, size = 0x18000, scoped, tag = 'scratch operand']
  #allocation3 [shape = 'f32[154,16]{1,0:T(8,128)}', space=vmem, size = 0x14000, scoped, tag = 'scratch operand']
  #allocation4 [shape = 'f32[137,16]{1,0:T(8,128)}', space=vmem, size = 0x12000, scoped, tag = 'scratch operand']
  %s0 = inlined_call_operand.vmem [shape: f32[2,256,20], index: 0, kind: input, shape index: {}]
  %s1 = inlined_call_operand.vmem [shape: f32[5,20,32], index: 1, kind: input, shape index: {}]
  %s2 = inlined_call_operand.vmem [shape: f32[1,32], index: 2, kind: input, shape index: {}]
  %s3 = inlined_call_operand.vmem [shape: f32[9,32,16], index: 3, kind: input, shape index: {}]
  %s4 = inlined_call_operand.vmem [shape: f32[1,16], index: 4, kind: input, shape index: {}]
  %s5 = inlined_call_operand.vmem [shape: f32[25,16,128], index: 5, kind: input, shape index: {}]
  %s6 = inlined_call_operand.vmem [shape: f32[1,128], index: 6, kind: input, shape index: {}]
  %s7 = inlined_call_operand.vmem [shape: f32[128,128], index: 7, kind: input, shape index: {}]
  %s8 = inlined_call_operand.vmem [shape: f32[1,128], index: 8, kind: input, shape index: {}]
  %s9 = inlined_call_operand.hbm [shape: f32[2,1,128], index: 9, kind: output, shape index: {}]
  %s10 = sld [smem:[#allocation0]]
  $region69: #{dql_forward.1} parent=0
    _
  %s12 = ssub.s32 1, %s10
  %s13 = scalar_select 0, %s12, %s10
  $region1: #{dql_forward.1} parent=0
    #allocation5 [shape = 'u8[1024]{0}', space=vmem, size = 0x400, scoped, tag = 'output window, operand 0']
    #allocation6 [shape = 's32[2]{0}', space=sflag, size = 0x8, scoped, tag = 'scoped memory for dql_forward.1']
    %14 = vsyncpa [#allocation6], 0
    %s15 = scalar_lea.sflag [#allocation6], 1
    %16 = vsyncpa %s15, 0
    loop: start=0, step=1, limit=4
    $region2: #{dql_forward.1} parent=1 // loop_pre_header
      _
    $region3: #{dql_forward.1} parent=1 // loop_header
      %s18 = sphi 0, %s22
      %p19 = scmp.ge.s32.totalorder %s18, 4
      %s28 = sphi 0, %s30
      %s31 = sphi 0, %s28
      %s32 = sphi 0, %s31
      %s48 = sphi 0, %s32
      %s52 = sphi 0, %s52
      %s54 = sphi 0, %s52
      %s55 = sphi 0, %s54
      %s69 = sphi 0, %s55
      %s73 = sphi 0, %s73
      %s75 = sphi 0, %s73
      %s76 = sphi 0, %s75
      %s90 = sphi 0, %s76
      %s94 = sphi 0, %s94
      %s96 = sphi 0, %s94
      %s97 = sphi 0, %s96
      %s111 = sphi 0, %s97
      %s115 = sphi 0, %s115
      %s117 = sphi 0, %s115
      %s118 = sphi 0, %s117
      %s132 = sphi 0, %s118
      %s136 = sphi 0, %s136
      %s138 = sphi 0, %s136
      %s139 = sphi 0, %s138
      %s153 = sphi 0, %s139
      %s157 = sphi 0, %s157
      %s159 = sphi 0, %s157
      %s160 = sphi 0, %s159
      %s174 = sphi 0, %s160
      %s178 = sphi 0, %s178
      %s180 = sphi 0, %s178
      %s181 = sphi 0, %s180
      %s195 = sphi 0, %s181
      %s199 = sphi 0, %s199
      %s201 = sphi 0, %s199
      %s202 = sphi 0, %s201
      %s216 = sphi 0, %s202
      %s222 = sphi 0, %s224
      %s225 = sphi 0, %s222
      %s226 = sphi 0, %s225
      %s242 = sphi 0, %s226
    $region4: #{dql_forward.1} parent=1 // loop_header_branch
      %21 = sbr.rel (%p19) target = $region8
    $region5: #{dql_forward.1} parent=1 // loop_body
      %s23 = ssub.s32 %s18, 1
      %s24 = ssub.s32 %s18, 2
      %s25 = sadd.s32 %s18, 1
      %s26 = ssub.s32 %s18, %s25
      %p27 = scmp.eq.s32.totalorder %s26, 0
      %s29 = sadd.s32 %s28, 1
      %s30 = scalar_select %p27, %s28, %s29
      %p33 = pneg %p27
      %p34 = scmp.eq.s32.totalorder %s18, 1
      %p35 = por %p33, %p34
      %p36 = scmp.ne.s32.totalorder %s28, %s31
      %p37 = scmp.eq.s32.totalorder %s18, 0
      %p38 = por %p36, %p37
      %p39 = scmp.ne.s32.totalorder %s28, %s31
      %p40 = scmp.eq.s32.totalorder %s23, 1
      %p41 = por %p39, %p40
      %p42 = scmp.ne.s32.totalorder %s31, %s32
      %p43 = scmp.eq.s32.totalorder %s23, 0
      %p44 = por %p42, %p43
      %p45 = scmp.ne.s32.totalorder %s31, %s32
      %p46 = scmp.eq.s32.totalorder %s24, 1
      %p47 = por %p45, %p46
      %p49 = scmp.ne.s32.totalorder %s32, %s48
      %p50 = scmp.eq.s32.totalorder %s24, 0
      %p51 = por %p49, %p50
      %s53 = sadd.s32 %s52, 1
      %p56 = scmp.eq.s32.totalorder %s18, 1
      %p57 = scmp.ne.s32.totalorder %s52, %s54
      %p58 = scmp.eq.s32.totalorder %s18, 0
      %p59 = por %p57, %p58
      %p60 = scmp.ne.s32.totalorder %s52, %s54
      %p61 = scmp.eq.s32.totalorder %s23, 1
      %p62 = por %p60, %p61
      %p63 = scmp.ne.s32.totalorder %s54, %s55
      %p64 = scmp.eq.s32.totalorder %s23, 0
      %p65 = por %p63, %p64
      %p66 = scmp.ne.s32.totalorder %s54, %s55
      %p67 = scmp.eq.s32.totalorder %s24, 1
      %p68 = por %p66, %p67
      %p70 = scmp.ne.s32.totalorder %s55, %s69
      %p71 = scmp.eq.s32.totalorder %s24, 0
      %p72 = por %p70, %p71
      %s74 = sadd.s32 %s73, 1
      %p77 = scmp.eq.s32.totalorder %s18, 1
      %p78 = scmp.ne.s32.totalorder %s73, %s75
      %p79 = scmp.eq.s32.totalorder %s18, 0
      %p80 = por %p78, %p79
      %p81 = scmp.ne.s32.totalorder %s73, %s75
      %p82 = scmp.eq.s32.totalorder %s23, 1
      %p83 = por %p81, %p82
      %p84 = scmp.ne.s32.totalorder %s75, %s76
      %p85 = scmp.eq.s32.totalorder %s23, 0
      %p86 = por %p84, %p85
      %p87 = scmp.ne.s32.totalorder %s75, %s76
      %p88 = scmp.eq.s32.totalorder %s24, 1
      %p89 = por %p87, %p88
      %p91 = scmp.ne.s32.totalorder %s76, %s90
      %p92 = scmp.eq.s32.totalorder %s24, 0
      %p93 = por %p91, %p92
      %s95 = sadd.s32 %s94, 1
      %p98 = scmp.eq.s32.totalorder %s18, 1
      %p99 = scmp.ne.s32.totalorder %s94, %s96
      %p100 = scmp.eq.s32.totalorder %s18, 0
      %p101 = por %p99, %p100
      %p102 = scmp.ne.s32.totalorder %s94, %s96
      %p103 = scmp.eq.s32.totalorder %s23, 1
      %p104 = por %p102, %p103
      %p105 = scmp.ne.s32.totalorder %s96, %s97
      %p106 = scmp.eq.s32.totalorder %s23, 0
      %p107 = por %p105, %p106
      %p108 = scmp.ne.s32.totalorder %s96, %s97
      %p109 = scmp.eq.s32.totalorder %s24, 1
      %p110 = por %p108, %p109
      %p112 = scmp.ne.s32.totalorder %s97, %s111
      %p113 = scmp.eq.s32.totalorder %s24, 0
      %p114 = por %p112, %p113
      %s116 = sadd.s32 %s115, 1
      %p119 = scmp.eq.s32.totalorder %s18, 1
      %p120 = scmp.ne.s32.totalorder %s115, %s117
      %p121 = scmp.eq.s32.totalorder %s18, 0
      %p122 = por %p120, %p121
      %p123 = scmp.ne.s32.totalorder %s115, %s117
      %p124 = scmp.eq.s32.totalorder %s23, 1
      %p125 = por %p123, %p124
      %p126 = scmp.ne.s32.totalorder %s117, %s118
      %p127 = scmp.eq.s32.totalorder %s23, 0
      %p128 = por %p126, %p127
      %p129 = scmp.ne.s32.totalorder %s117, %s118
      %p130 = scmp.eq.s32.totalorder %s24, 1
      %p131 = por %p129, %p130
      %p133 = scmp.ne.s32.totalorder %s118, %s132
      %p134 = scmp.eq.s32.totalorder %s24, 0
      %p135 = por %p133, %p134
      %s137 = sadd.s32 %s136, 1
      %p140 = scmp.eq.s32.totalorder %s18, 1
      %p141 = scmp.ne.s32.totalorder %s136, %s138
      %p142 = scmp.eq.s32.totalorder %s18, 0
      %p143 = por %p141, %p142
      %p144 = scmp.ne.s32.totalorder %s136, %s138
      %p145 = scmp.eq.s32.totalorder %s23, 1
      %p146 = por %p144, %p145
      %p147 = scmp.ne.s32.totalorder %s138, %s139
      %p148 = scmp.eq.s32.totalorder %s23, 0
      %p149 = por %p147, %p148
      %p150 = scmp.ne.s32.totalorder %s138, %s139
      %p151 = scmp.eq.s32.totalorder %s24, 1
      %p152 = por %p150, %p151
      %p154 = scmp.ne.s32.totalorder %s139, %s153
      %p155 = scmp.eq.s32.totalorder %s24, 0
      %p156 = por %p154, %p155
      %s158 = sadd.s32 %s157, 1
      %p161 = scmp.eq.s32.totalorder %s18, 1
      %p162 = scmp.ne.s32.totalorder %s157, %s159
      %p163 = scmp.eq.s32.totalorder %s18, 0
      %p164 = por %p162, %p163
      %p165 = scmp.ne.s32.totalorder %s157, %s159
      %p166 = scmp.eq.s32.totalorder %s23, 1
      %p167 = por %p165, %p166
      %p168 = scmp.ne.s32.totalorder %s159, %s160
      %p169 = scmp.eq.s32.totalorder %s23, 0
      %p170 = por %p168, %p169
      %p171 = scmp.ne.s32.totalorder %s159, %s160
      %p172 = scmp.eq.s32.totalorder %s24, 1
      %p173 = por %p171, %p172
      %p175 = scmp.ne.s32.totalorder %s160, %s174
      %p176 = scmp.eq.s32.totalorder %s24, 0
      %p177 = por %p175, %p176
      %s179 = sadd.s32 %s178, 1
      %p182 = scmp.eq.s32.totalorder %s18, 1
      %p183 = scmp.ne.s32.totalorder %s178, %s180
      %p184 = scmp.eq.s32.totalorder %s18, 0
      %p185 = por %p183, %p184
      %p186 = scmp.ne.s32.totalorder %s178, %s180
      %p187 = scmp.eq.s32.totalorder %s23, 1
      %p188 = por %p186, %p187
      %p189 = scmp.ne.s32.totalorder %s180, %s181
      %p190 = scmp.eq.s32.totalorder %s23, 0
      %p191 = por %p189, %p190
      %p192 = scmp.ne.s32.totalorder %s180, %s181
      %p193 = scmp.eq.s32.totalorder %s24, 1
      %p194 = por %p192, %p193
      %p196 = scmp.ne.s32.totalorder %s181, %s195
      %p197 = scmp.eq.s32.totalorder %s24, 0
      %p198 = por %p196, %p197
      %s200 = sadd.s32 %s199, 1
      %p203 = scmp.eq.s32.totalorder %s18, 1
      %p204 = scmp.ne.s32.totalorder %s199, %s201
      %p205 = scmp.eq.s32.totalorder %s18, 0
      %p206 = por %p204, %p205
      %p207 = scmp.ne.s32.totalorder %s199, %s201
      %p208 = scmp.eq.s32.totalorder %s23, 1
      %p209 = por %p207, %p208
      %p210 = scmp.ne.s32.totalorder %s201, %s202
      %p211 = scmp.eq.s32.totalorder %s23, 0
      %p212 = por %p210, %p211
      %p213 = scmp.ne.s32.totalorder %s201, %s202
      %p214 = scmp.eq.s32.totalorder %s24, 1
      %p215 = por %p213, %p214
      %p217 = scmp.ne.s32.totalorder %s202, %s216
      %p218 = scmp.eq.s32.totalorder %s24, 0
      %p219 = por %p217, %p218
      %s220 = ssub.s32 %s18, %s25
      %p221 = scmp.eq.s32.totalorder %s220, 0
      %s223 = sadd.s32 %s222, 1
      %s224 = scalar_select %p221, %s222, %s223
      %p227 = pneg %p221
      %p228 = scmp.eq.s32.totalorder %s18, 1
      %p229 = por %p227, %p228
      %p230 = scmp.ne.s32.totalorder %s222, %s225
      %p231 = scmp.eq.s32.totalorder %s18, 0
      %p232 = por %p230, %p231
      %p233 = scmp.ne.s32.totalorder %s222, %s225
      %p234 = scmp.eq.s32.totalorder %s23, 1
      %p235 = por %p233, %p234
      %p236 = scmp.ne.s32.totalorder %s225, %s226
      %p237 = scmp.eq.s32.totalorder %s23, 0
      %p238 = por %p236, %p237
      %p239 = scmp.ne.s32.totalorder %s225, %s226
      %p240 = scmp.eq.s32.totalorder %s24, 1
      %p241 = por %p239, %p240
      %p243 = scmp.ne.s32.totalorder %s226, %s242
      %p244 = scmp.eq.s32.totalorder %s24, 0
      %p245 = por %p243, %p244
      %p246 = scmp.le.s32.totalorder 1, %s18
      %p247 = scmp.lt.s32.totalorder %s18, 3
      %p248 = pnand %p246, %p247
      %p249 = pneg %p248
      // Predicated region
      $region9: #{dql_forward.1} parent=5 // pred_check
        _
      $region10: #{dql_forward.1} parent=5 // pred_check_branch
        %251 = sbr.rel (%p248) target = $region12
      $region11: #{dql_forward.1} parent=5 // pred_region
        %s252 = ssub.s32 %s18, 1
        // Predicated region
        $region13: #{dql_forward.1} parent=11 // pred_check
          %p253 = pneg %p65
        $region14: #{dql_forward.1} parent=11 // pred_check_branch
          %255 = sbr.rel (%p253) target = $region16
        $region15: #{dql_forward.1} parent=11 // pred_region
          _
        $region16: #{dql_forward.1} parent=11 // pred_fallthru
          _
        // Predicated region
        $region17: #{dql_forward.1} parent=11 // pred_check
          %p256 = pneg %p86
        $region18: #{dql_forward.1} parent=11 // pred_check_branch
          %258 = sbr.rel (%p256) target = $region20
        $region19: #{dql_forward.1} parent=11 // pred_region
          _
        $region20: #{dql_forward.1} parent=11 // pred_fallthru
          _
        // Predicated region
        $region21: #{dql_forward.1} parent=11 // pred_check
          %p259 = pneg %p107
        $region22: #{dql_forward.1} parent=11 // pred_check_branch
          %261 = sbr.rel (%p259) target = $region24
        $region23: #{dql_forward.1} parent=11 // pred_region
          _
        $region24: #{dql_forward.1} parent=11 // pred_fallthru
          _
        // Predicated region
        $region25: #{dql_forward.1} parent=11 // pred_check
          %p262 = pneg %p128
        $region26: #{dql_forward.1} parent=11 // pred_check_branch
          %264 = sbr.rel (%p262) target = $region28
        $region27: #{dql_forward.1} parent=11 // pred_region
          _
        $region28: #{dql_forward.1} parent=11 // pred_fallthru
          _
        // Predicated region
        $region29: #{dql_forward.1} parent=11 // pred_check
          %p265 = pneg %p149
        $region30: #{dql_forward.1} parent=11 // pred_check_branch
          %267 = sbr.rel (%p265) target = $region32
        $region31: #{dql_forward.1} parent=11 // pred_region
          _
        $region32: #{dql_forward.1} parent=11 // pred_fallthru
          _
        // Predicated region
        $region33: #{dql_forward.1} parent=11 // pred_check
          %p268 = pneg %p170
        $region34: #{dql_forward.1} parent=11 // pred_check_branch
          %270 = sbr.rel (%p268) target = $region36
        $region35: #{dql_forward.1} parent=11 // pred_region
          _
        $region36: #{dql_forward.1} parent=11 // pred_fallthru
          _
        // Predicated region
        $region37: #{dql_forward.1} parent=11 // pred_check
          %p271 = pneg %p191
        $region38: #{dql_forward.1} parent=11 // pred_check_branch
          %273 = sbr.rel (%p271) target = $region40
        $region39: #{dql_forward.1} parent=11 // pred_region
          _
        $region40: #{dql_forward.1} parent=11 // pred_fallthru
          _
        // Predicated region
        $region41: #{dql_forward.1} parent=11 // pred_check
          %p274 = pneg %p212
        $region42: #{dql_forward.1} parent=11 // pred_check_branch
          %276 = sbr.rel (%p274) target = $region44
        $region43: #{dql_forward.1} parent=11 // pred_region
          _
        $region44: #{dql_forward.1} parent=11 // pred_fallthru
          _
      $region12: #{dql_forward.1} parent=5 // pred_fallthru
        _
      %p277 = scmp.lt.s32.totalorder %s18, 2
      // Predicated region
      $region45: #{dql_forward.1} parent=5 // pred_check
        %p278 = pneg %p277
      $region46: #{dql_forward.1} parent=5 // pred_check_branch
        %280 = sbr.rel (%p278) target = $region48
      $region47: #{dql_forward.1} parent=5 // pred_region
        // Predicated region
        $region49: #{dql_forward.1} parent=47 // pred_check
          %p281 = pneg %p38
        $region50: #{dql_forward.1} parent=47 // pred_check_branch
          %283 = sbr.rel (%p281) target = $region52
        $region51: #{dql_forward.1} parent=47 // pred_region
          %p284 = scmp.lt.s32.totalorder %s18, 1
          %s285 = scalar_select %p284, %s18, 1
          %s286 = smul.addr %s285, 32
          %s287 = smul.addr %s286, 8
          %s288 = scalar_lea.vmem %s0, %s287
        $region52: #{dql_forward.1} parent=47 // pred_fallthru
          _
      $region48: #{dql_forward.1} parent=5 // pred_fallthru
        _
      %p289 = scmp.le.s32.totalorder 1, %s18
      %p290 = scmp.lt.s32.totalorder %s18, 3
      %p291 = pnand %p289, %p290
      %p292 = pneg %p291
      // Predicated region
      $region53: #{dql_forward.1} parent=5 // pred_check
        _
      $region54: #{dql_forward.1} parent=5 // pred_check_branch
        %294 = sbr.rel (%p291) target = $region56
      $region55: #{dql_forward.1} parent=5 // pred_region
        %s295 = ssub.s32 %s18, 1
        %p296 = scmp.lt.s32.totalorder %s23, 1
        %s297 = scalar_select %p296, %s23, 1
        %s298 = smul.addr %s297, 32
        %s299 = smul.addr %s298, 8
        %s300 = scalar_lea.vmem %s0, %s299
        %p301 = pneg %p44
        %p302 = pneg %p41
        %p303 = pneg %p65
        %p304 = pneg %p62
        %p305 = pneg %p86
        %p306 = pneg %p83
        %p307 = pneg %p107
        %p308 = pneg %p104
        %p309 = pneg %p128
        %p310 = pneg %p125
        %p311 = pneg %p149
        %p312 = pneg %p146
        %p313 = pneg %p170
        %p314 = pneg %p167
        %p315 = pneg %p191
        %p316 = pneg %p188
        %p317 = pneg %p212
        %p318 = pneg %p209
        %p319 = pneg %p238
        %p320 = pneg %p235
        %s321 = sand.u32 %s225, 1
        %s322 = scalar_lea.sflag [#allocation6], %s321
        %s323 = sand.u32 %s225, 1
        %s324 = scalar_lea.vmem [#allocation5], %s323
        %p325 = scmp.lt.s32.totalorder %s23, 1
        %s326 = scalar_select %p325, %s23, 1
        %s327 = smul.addr %s326, 32
        %s328 = smul.addr %s327, 8
        %s329 = scalar_lea.vmem %s0, %s328
        %v330 = vld [vmem:[%s329] sm:$0xff]
        %v331 = vld [vmem:[%s329 + $0x8] sm:$0xff]
        %v332 = vld [vmem:[%s329 + $0x10] sm:$0xff]
        %v333 = vld [vmem:[%s329 + $0x18] sm:$0xff]
        %v334 = vld [vmem:[%s329 + $0x20] sm:$0xff]
        %v335 = vld [vmem:[%s329 + $0x28] sm:$0xff]
        %v336 = vld [vmem:[%s329 + $0x30] sm:$0xff]
        %v337 = vld [vmem:[%s329 + $0x38] sm:$0xff]
        %v338 = vld [vmem:[%s329 + $0x40] sm:$0xff]
        %v339 = vld [vmem:[%s329 + $0x48] sm:$0xff]
        %v340 = vld [vmem:[%s329 + $0x50] sm:$0xff]
        %v341 = vld [vmem:[%s329 + $0x58] sm:$0xff]
        %v342 = vld [vmem:[%s329 + $0x60] sm:$0xff]
        %v343 = vld [vmem:[%s329 + $0x68] sm:$0xff]
        %v344 = vld [vmem:[%s329 + $0x70] sm:$0xff]
        %v345 = vld [vmem:[%s329 + $0x78] sm:$0xff]
        %v346 = vld [vmem:[%s329 + $0x80] sm:$0xff]
        %v347 = vld [vmem:[%s329 + $0x88] sm:$0xff]
        %v348 = vld [vmem:[%s329 + $0x90] sm:$0xff]
        %v349 = vld [vmem:[%s329 + $0x98] sm:$0xff]
        %v350 = vld [vmem:[%s329 + $0xa0] sm:$0xff]
        %v351 = vld [vmem:[%s329 + $0xa8] sm:$0xff]
        %v352 = vld [vmem:[%s329 + $0xb0] sm:$0xff]
        %v353 = vld [vmem:[%s329 + $0xb8] sm:$0xf]
        %v354 = vld [vmem:[%s1] sm:$0xff]
        %v355 = vld [vmem:[%s1 + $0x8] sm:$0xff]
        %v356 = vld [vmem:[%s1 + $0x10] sm:$0xf]
        %v357 = vld [vmem:[%s329 + $0xb8] sm:$0xff]
        %v358 = vld [vmem:[%s329 + $0xc0] sm:$0xff]
        %v359 = vld [vmem:[%s329 + $0xc8] sm:$0xf]
        %s360 = scalar_lea.vmem %s1, 24
        %v361 = vld [vmem:[%s360] sm:$0xff]
        %v362 = vld [vmem:[%s360 + $0x8] sm:$0xff]
        %v363 = vld [vmem:[%s360 + $0x10] sm:$0xf]
        %vm364 = vcmask 162816
        %v366 = vsel %vm364, %v332, 0
        %v369 = vsel %vm364, %v333, 0
        %v372 = vsel %vm364, %v334, 0
        %v375 = vsel %vm364, %v335, 0
        %v378 = vsel %vm364, %v336, 0
        %v381 = vsel %vm364, %v337, 0
        %v384 = vsel %vm364, %v338, 0
        %v387 = vsel %vm364, %v339, 0
        %v390 = vsel %vm364, %v340, 0
        %v393 = vsel %vm364, %v341, 0
        %v396 = vsel %vm364, %v342, 0
        %v399 = vsel %vm364, %v343, 0
        %v402 = vsel %vm364, %v344, 0
        %v405 = vsel %vm364, %v345, 0
        %v408 = vsel %vm364, %v346, 0
        %v411 = vsel %vm364, %v347, 0
        %v414 = vsel %vm364, %v348, 0
        %v417 = vsel %vm364, %v349, 0
        %v420 = vsel %vm364, %v350, 0
        %v423 = vsel %vm364, %v351, 0
        %v426 = vsel %vm364, %v352, 0
        %v429 = vsel %vm364, %v357, 0
        %v432 = vsel %vm364, %v358, 0
        %v435 = vsel %vm364, %v359, 0
        %vm437 = vcmask 1043456
        %v439 = vsel %vm437, %v363, 0
        %441 = vmatpush.msra.mxu0 0.0
        %442 = vmatpush.msra.mxu0 0.0
        %443 = vmatpush.msra.mxu0 0.0
        %444 = vmatpush.msra.mxu0 0.0
        %445 = vmatpush.msra.mxu0 0.0
        %446 = vmatpush.msra.mxu0 0.0
        %447 = vmatpush.msra.mxu0 0.0
        %448 = vmatpush.msra.mxu0 0.0
        %449 = vmatpush.msra.mxu0 0.0
        %450 = vmatpush.msra.mxu0 0.0
        %451 = vmatpush.msra.mxu0 0.0
        %452 = vmatpush.msra.mxu0 0.0
        %453 = vmatpush.msra.mxu0 0.0
        %454 = vmatpush.msra.mxu0 %v439
        %455 = vmatpush.msra.mxu0 %v362
        %456 = vmatpush.msra.mxu0 %v361
        %457 = vmatmul.f32.gmra.mxu0 %v366
        %v458 = vpop.f32.mrf.mxu0
        %v459 = vadd.f32 0.0, %v458
        %460 = vmatmul.f32.gmra.mxu0 %v369
        %v461 = vpop.f32.mrf.mxu0
        %v462 = vadd.f32 0.0, %v461
        %463 = vmatmul.f32.gmra.mxu0 %v372
        %v464 = vpop.f32.mrf.mxu0
        %v465 = vadd.f32 0.0, %v464
        %466 = vmatmul.f32.gmra.mxu0 %v375
        %v467 = vpop.f32.mrf.mxu0
        %v468 = vadd.f32 0.0, %v467
        %469 = vmatmul.f32.gmra.mxu0 %v378
        %v470 = vpop.f32.mrf.mxu0
        %v471 = vadd.f32 0.0, %v470
        %472 = vmatmul.f32.gmra.mxu0 %v381
        %v473 = vpop.f32.mrf.mxu0
        %v474 = vadd.f32 0.0, %v473
        %475 = vmatmul.f32.gmra.mxu0 %v384
        %v476 = vpop.f32.mrf.mxu0
        %v477 = vadd.f32 0.0, %v476
        %478 = vmatmul.f32.gmra.mxu0 %v387
        %v479 = vpop.f32.mrf.mxu0
        %v480 = vadd.f32 0.0, %v479
        %481 = vmatmul.f32.gmra.mxu0 %v390
        %v482 = vpop.f32.mrf.mxu0
        %v483 = vadd.f32 0.0, %v482
        %484 = vmatmul.f32.gmra.mxu0 %v393
        %v485 = vpop.f32.mrf.mxu0
        %v486 = vadd.f32 0.0, %v485
        %487 = vmatmul.f32.gmra.mxu0 %v396
        %v488 = vpop.f32.mrf.mxu0
        %v489 = vadd.f32 0.0, %v488
        %490 = vmatmul.f32.gmra.mxu0 %v399
        %v491 = vpop.f32.mrf.mxu0
        %v492 = vadd.f32 0.0, %v491
        %493 = vmatmul.f32.gmra.mxu0 %v402
        %v494 = vpop.f32.mrf.mxu0
        %v495 = vadd.f32 0.0, %v494
        %496 = vmatmul.f32.gmra.mxu0 %v405
        %v497 = vpop.f32.mrf.mxu0
        %v498 = vadd.f32 0.0, %v497
        %499 = vmatmul.f32.gmra.mxu0 %v408
        %v500 = vpop.f32.mrf.mxu0
        %v501 = vadd.f32 0.0, %v500
        %502 = vmatmul.f32.gmra.mxu0 %v411
        %v503 = vpop.f32.mrf.mxu0
        %v504 = vadd.f32 0.0, %v503
        %505 = vmatmul.f32.gmra.mxu0 %v414
        %v506 = vpop.f32.mrf.mxu0
        %v507 = vadd.f32 0.0, %v506
        %508 = vmatmul.f32.gmra.mxu0 %v417
        %v509 = vpop.f32.mrf.mxu0
        %v510 = vadd.f32 0.0, %v509
        %511 = vmatmul.f32.gmra.mxu0 %v420
        %v512 = vpop.f32.mrf.mxu0
        %v513 = vadd.f32 0.0, %v512
        %514 = vmatmul.f32.gmra.mxu0 %v423
        %v515 = vpop.f32.mrf.mxu0
        %v516 = vadd.f32 0.0, %v515
        %517 = vmatmul.f32.gmra.mxu0 %v426
        %v518 = vpop.f32.mrf.mxu0
        %v519 = vadd.f32 0.0, %v518
        %520 = vmatmul.f32.gmra.mxu0 %v429
        %v521 = vpop.f32.mrf.mxu0
        %v522 = vadd.f32 0.0, %v521
        %523 = vmatmul.f32.gmra.mxu0 %v432
        %v524 = vpop.f32.mrf.mxu0
        %v525 = vadd.f32 0.0, %v524
        %526 = vmatmul.f32.gmra.mxu0 %v435
        %v527 = vpop.f32.mrf.mxu0
        %v528 = vadd.f32 0.0, %v527
        %529 = vdwg.mxu0
        %v531 = vsel %vm364, %v330, 0
        %v534 = vsel %vm364, %v331, 0
        %v537 = vsel %vm364, %v353, 0
        %v540 = vsel %vm437, %v356, 0
        %542 = vmatpush.msra.mxu0 0.0
        %543 = vmatpush.msra.mxu0 0.0
        %544 = vmatpush.msra.mxu0 0.0
        %545 = vmatpush.msra.mxu0 0.0
        %546 = vmatpush.msra.mxu0 0.0
        %547 = vmatpush.msra.mxu0 0.0
        %548 = vmatpush.msra.mxu0 0.0
        %549 = vmatpush.msra.mxu0 0.0
        %550 = vmatpush.msra.mxu0 0.0
        %551 = vmatpush.msra.mxu0 0.0
        %552 = vmatpush.msra.mxu0 0.0
        %553 = vmatpush.msra.mxu0 0.0
        %554 = vmatpush.msra.mxu0 0.0
        %555 = vmatpush.msra.mxu0 %v540
        %556 = vmatpush.msra.mxu0 %v355
        %557 = vmatpush.msra.mxu0 %v354
        %558 = vmatmul.f32.gmra.mxu0 %v531
        %v559 = vpop.f32.mrf.mxu0
        %v560 = vadd.f32 %v459, %v559
        %561 = vmatmul.f32.gmra.mxu0 %v534
        %v562 = vpop.f32.mrf.mxu0
        %v563 = vadd.f32 %v462, %v562
        %564 = vmatmul.f32.gmra.mxu0 %v366
        %v565 = vpop.f32.mrf.mxu0
        %v566 = vadd.f32 %v465, %v565
        %567 = vmatmul.f32.gmra.mxu0 %v369
        %v568 = vpop.f32.mrf.mxu0
        %v569 = vadd.f32 %v468, %v568
        %570 = vmatmul.f32.gmra.mxu0 %v372
        %v571 = vpop.f32.mrf.mxu0
        %v572 = vadd.f32 %v471, %v571
        %573 = vmatmul.f32.gmra.mxu0 %v375
        %v574 = vpop.f32.mrf.mxu0
        %v575 = vadd.f32 %v474, %v574
        %576 = vmatmul.f32.gmra.mxu0 %v378
        %v577 = vpop.f32.mrf.mxu0
        %v578 = vadd.f32 %v477, %v577
        %579 = vmatmul.f32.gmra.mxu0 %v381
        %v580 = vpop.f32.mrf.mxu0
        %v581 = vadd.f32 %v480, %v580
        %582 = vmatmul.f32.gmra.mxu0 %v384
        %v583 = vpop.f32.mrf.mxu0
        %v584 = vadd.f32 %v483, %v583
        %585 = vmatmul.f32.gmra.mxu0 %v387
        %v586 = vpop.f32.mrf.mxu0
        %v587 = vadd.f32 %v486, %v586
        %588 = vmatmul.f32.gmra.mxu0 %v390
        %v589 = vpop.f32.mrf.mxu0
        %v590 = vadd.f32 %v489, %v589
        %591 = vmatmul.f32.gmra.mxu0 %v393
        %v592 = vpop.f32.mrf.mxu0
        %v593 = vadd.f32 %v492, %v592
        %594 = vmatmul.f32.gmra.mxu0 %v396
        %v595 = vpop.f32.mrf.mxu0
        %v596 = vadd.f32 %v495, %v595
        %597 = vmatmul.f32.gmra.mxu0 %v399
        %v598 = vpop.f32.mrf.mxu0
        %v599 = vadd.f32 %v498, %v598
        %600 = vmatmul.f32.gmra.mxu0 %v402
        %v601 = vpop.f32.mrf.mxu0
        %v602 = vadd.f32 %v501, %v601
        %603 = vmatmul.f32.gmra.mxu0 %v405
        %v604 = vpop.f32.mrf.mxu0
        %v605 = vadd.f32 %v504, %v604
        %606 = vmatmul.f32.gmra.mxu0 %v408
        %v607 = vpop.f32.mrf.mxu0
        %v608 = vadd.f32 %v507, %v607
        %609 = vmatmul.f32.gmra.mxu0 %v411
        %v610 = vpop.f32.mrf.mxu0
        %v611 = vadd.f32 %v510, %v610
        %612 = vmatmul.f32.gmra.mxu0 %v414
        %v613 = vpop.f32.mrf.mxu0
        %v614 = vadd.f32 %v513, %v613
        %615 = vmatmul.f32.gmra.mxu0 %v417
        %v616 = vpop.f32.mrf.mxu0
        %v617 = vadd.f32 %v516, %v616
        %618 = vmatmul.f32.gmra.mxu0 %v420
        %v619 = vpop.f32.mrf.mxu0
        %v620 = vadd.f32 %v519, %v619
        %621 = vmatmul.f32.gmra.mxu0 %v423
        %v622 = vpop.f32.mrf.mxu0
        %v623 = vadd.f32 %v522, %v622
        %624 = vmatmul.f32.gmra.mxu0 %v426
        %v625 = vpop.f32.mrf.mxu0
        %v626 = vadd.f32 %v525, %v625
        %627 = vmatmul.f32.gmra.mxu0 %v537
        %v628 = vpop.f32.mrf.mxu0
        %v629 = vadd.f32 %v528, %v628
        %630 = vdwg.mxu0
        %v631 = vld [vmem:[%s329 + $0x20] sm:$0xff]
        %v632 = vld [vmem:[%s329 + $0x28] sm:$0xff]
        %v633 = vld [vmem:[%s329 + $0x30] sm:$0xff]
        %v634 = vld [vmem:[%s329 + $0x38] sm:$0xff]
        %v635 = vld [vmem:[%s329 + $0x40] sm:$0xff]
        %v636 = vld [vmem:[%s329 + $0x48] sm:$0xff]
        %v637 = vld [vmem:[%s329 + $0x50] sm:$0xff]
        %v638 = vld [vmem:[%s329 + $0x58] sm:$0xff]
        %v639 = vld [vmem:[%s329 + $0x60] sm:$0xff]
        %v640 = vld [vmem:[%s329 + $0x68] sm:$0xff]
        %v641 = vld [vmem:[%s329 + $0x70] sm:$0xff]
        %v642 = vld [vmem:[%s329 + $0x78] sm:$0xff]
        %v643 = vld [vmem:[%s329 + $0x80] sm:$0xff]
        %v644 = vld [vmem:[%s329 + $0x88] sm:$0xff]
        %v645 = vld [vmem:[%s329 + $0x90] sm:$0xff]
        %v646 = vld [vmem:[%s329 + $0x98] sm:$0xff]
        %v647 = vld [vmem:[%s329 + $0xa0] sm:$0xff]
        %v648 = vld [vmem:[%s329 + $0xa8] sm:$0xff]
        %v649 = vld [vmem:[%s329 + $0xb0] sm:$0xff]
        %v650 = vld [vmem:[%s329 + $0xb8] sm:$0xff]
        %v651 = vld [vmem:[%s329 + $0xc0] sm:$0xff]
        %v652 = vld [vmem:[%s329 + $0xc8] sm:$0xff]
        %v653 = vld [vmem:[%s329 + $0xd0] sm:$0xff]
        %v654 = vld [vmem:[%s329 + $0xd8] sm:$0xf]
        %s655 = scalar_lea.vmem %s1, 48
        %v656 = vld [vmem:[%s655] sm:$0xff]
        %v657 = vld [vmem:[%s655 + $0x8] sm:$0xff]
        %v658 = vld [vmem:[%s655 + $0x10] sm:$0xf]
        %v660 = vsel %vm364, %v631, 0
        %v663 = vsel %vm364, %v632, 0
        %v666 = vsel %vm364, %v633, 0
        %v669 = vsel %vm364, %v634, 0
        %v672 = vsel %vm364, %v635, 0
        %v675 = vsel %vm364, %v636, 0
        %v678 = vsel %vm364, %v637, 0
        %v681 = vsel %vm364, %v638, 0
        %v684 = vsel %vm364, %v639, 0
        %v687 = vsel %vm364, %v640, 0
        %v690 = vsel %vm364, %v641, 0
        %v693 = vsel %vm364, %v642, 0
        %v696 = vsel %vm364, %v643, 0
        %v699 = vsel %vm364, %v644, 0
        %v702 = vsel %vm364, %v645, 0
        %v705 = vsel %vm364, %v646, 0
        %v708 = vsel %vm364, %v647, 0
        %v711 = vsel %vm364, %v648, 0
        %v714 = vsel %vm364, %v649, 0
        %v717 = vsel %vm364, %v650, 0
        %v720 = vsel %vm364, %v651, 0
        %v723 = vsel %vm364, %v652, 0
        %v726 = vsel %vm364, %v653, 0
        %v729 = vsel %vm364, %v654, 0
        %v732 = vsel %vm437, %v658, 0
        %734 = vmatpush.msra.mxu0 0.0
        %735 = vmatpush.msra.mxu0 0.0
        %736 = vmatpush.msra.mxu0 0.0
        %737 = vmatpush.msra.mxu0 0.0
        %738 = vmatpush.msra.mxu0 0.0
        %739 = vmatpush.msra.mxu0 0.0
        %740 = vmatpush.msra.mxu0 0.0
        %741 = vmatpush.msra.mxu0 0.0
        %742 = vmatpush.msra.mxu0 0.0
        %743 = vmatpush.msra.mxu0 0.0
        %744 = vmatpush.msra.mxu0 0.0
        %745 = vmatpush.msra.mxu0 0.0
        %746 = vmatpush.msra.mxu0 0.0
        %747 = vmatpush.msra.mxu0 %v732
        %748 = vmatpush.msra.mxu0 %v657
        %749 = vmatpush.msra.mxu0 %v656
        %750 = vmatmul.f32.gmra.mxu0 %v660
        %v751 = vpop.f32.mrf.mxu0
        %v752 = vadd.f32 0.0, %v751
        %753 = vmatmul.f32.gmra.mxu0 %v663
        %v754 = vpop.f32.mrf.mxu0
        %v755 = vadd.f32 0.0, %v754
        %756 = vmatmul.f32.gmra.mxu0 %v666
        %v757 = vpop.f32.mrf.mxu0
        %v758 = vadd.f32 0.0, %v757
        %759 = vmatmul.f32.gmra.mxu0 %v669
        %v760 = vpop.f32.mrf.mxu0
        %v761 = vadd.f32 0.0, %v760
        %762 = vmatmul.f32.gmra.mxu0 %v672
        %v763 = vpop.f32.mrf.mxu0
        %v764 = vadd.f32 0.0, %v763
        %765 = vmatmul.f32.gmra.mxu0 %v675
        %v766 = vpop.f32.mrf.mxu0
        %v767 = vadd.f32 0.0, %v766
        %768 = vmatmul.f32.gmra.mxu0 %v678
        %v769 = vpop.f32.mrf.mxu0
        %v770 = vadd.f32 0.0, %v769
        %771 = vmatmul.f32.gmra.mxu0 %v681
        %v772 = vpop.f32.mrf.mxu0
        %v773 = vadd.f32 0.0, %v772
        %774 = vmatmul.f32.gmra.mxu0 %v684
        %v775 = vpop.f32.mrf.mxu0
        %v776 = vadd.f32 0.0, %v775
        %777 = vmatmul.f32.gmra.mxu0 %v687
        %v778 = vpop.f32.mrf.mxu0
        %v779 = vadd.f32 0.0, %v778
        %780 = vmatmul.f32.gmra.mxu0 %v690
        %v781 = vpop.f32.mrf.mxu0
        %v782 = vadd.f32 0.0, %v781
        %783 = vmatmul.f32.gmra.mxu0 %v693
        %v784 = vpop.f32.mrf.mxu0
        %v785 = vadd.f32 0.0, %v784
        %786 = vmatmul.f32.gmra.mxu0 %v696
        %v787 = vpop.f32.mrf.mxu0
        %v788 = vadd.f32 0.0, %v787
        %789 = vmatmul.f32.gmra.mxu0 %v699
        %v790 = vpop.f32.mrf.mxu0
        %v791 = vadd.f32 0.0, %v790
        %792 = vmatmul.f32.gmra.mxu0 %v702
        %v793 = vpop.f32.mrf.mxu0
        %v794 = vadd.f32 0.0, %v793
        %795 = vmatmul.f32.gmra.mxu0 %v705
        %v796 = vpop.f32.mrf.mxu0
        %v797 = vadd.f32 0.0, %v796
        %798 = vmatmul.f32.gmra.mxu0 %v708
        %v799 = vpop.f32.mrf.mxu0
        %v800 = vadd.f32 0.0, %v799
        %801 = vmatmul.f32.gmra.mxu0 %v711
        %v802 = vpop.f32.mrf.mxu0
        %v803 = vadd.f32 0.0, %v802
        %804 = vmatmul.f32.gmra.mxu0 %v714
        %v805 = vpop.f32.mrf.mxu0
        %v806 = vadd.f32 0.0, %v805
        %807 = vmatmul.f32.gmra.mxu0 %v717
        %v808 = vpop.f32.mrf.mxu0
        %v809 = vadd.f32 0.0, %v808
        %810 = vmatmul.f32.gmra.mxu0 %v720
        %v811 = vpop.f32.mrf.mxu0
        %v812 = vadd.f32 0.0, %v811
        %813 = vmatmul.f32.gmra.mxu0 %v723
        %v814 = vpop.f32.mrf.mxu0
        %v815 = vadd.f32 0.0, %v814
        %816 = vmatmul.f32.gmra.mxu0 %v726
        %v817 = vpop.f32.mrf.mxu0
        %v818 = vadd.f32 0.0, %v817
        %819 = vmatmul.f32.gmra.mxu0 %v729
        %v820 = vpop.f32.mrf.mxu0
        %v821 = vadd.f32 0.0, %v820
        %822 = vdwg.mxu0
        %v823 = vadd.f32 %v560, %v752
        %v824 = vadd.f32 %v563, %v755
        %v825 = vadd.f32 %v566, %v758
        %v826 = vadd.f32 %v569, %v761
        %v827 = vadd.f32 %v572, %v764
        %v828 = vadd.f32 %v575, %v767
        %v829 = vadd.f32 %v578, %v770
        %v830 = vadd.f32 %v581, %v773
        %v831 = vadd.f32 %v584, %v776
        %v832 = vadd.f32 %v587, %v779
        %v833 = vadd.f32 %v590, %v782
        %v834 = vadd.f32 %v593, %v785
        %v835 = vadd.f32 %v596, %v788
        %v836 = vadd.f32 %v599, %v791
        %v837 = vadd.f32 %v602, %v794
        %v838 = vadd.f32 %v605, %v797
        %v839 = vadd.f32 %v608, %v800
        %v840 = vadd.f32 %v611, %v803
        %v841 = vadd.f32 %v614, %v806
        %v842 = vadd.f32 %v617, %v809
        %v843 = vadd.f32 %v620, %v812
        %v844 = vadd.f32 %v623, %v815
        %v845 = vadd.f32 %v626, %v818
        %v846 = vadd.f32 %v629, %v821
        %v847 = vld [vmem:[%s329 + $0x30] sm:$0xff]
        %v848 = vld [vmem:[%s329 + $0x38] sm:$0xff]
        %v849 = vld [vmem:[%s329 + $0x40] sm:$0xff]
        %v850 = vld [vmem:[%s329 + $0x48] sm:$0xff]
        %v851 = vld [vmem:[%s329 + $0x50] sm:$0xff]
        %v852 = vld [vmem:[%s329 + $0x58] sm:$0xff]
        %v853 = vld [vmem:[%s329 + $0x60] sm:$0xff]
        %v854 = vld [vmem:[%s329 + $0x68] sm:$0xff]
        %v855 = vld [vmem:[%s329 + $0x70] sm:$0xff]
        %v856 = vld [vmem:[%s329 + $0x78] sm:$0xff]
        %v857 = vld [vmem:[%s329 + $0x80] sm:$0xff]
        %v858 = vld [vmem:[%s329 + $0x88] sm:$0xff]
        %v859 = vld [vmem:[%s329 + $0x90] sm:$0xff]
        %v860 = vld [vmem:[%s329 + $0x98] sm:$0xff]
        %v861 = vld [vmem:[%s329 + $0xa0] sm:$0xff]
        %v862 = vld [vmem:[%s329 + $0xa8] sm:$0xff]
        %v863 = vld [vmem:[%s329 + $0xb0] sm:$0xff]
        %v864 = vld [vmem:[%s329 + $0xb8] sm:$0xff]
        %v865 = vld [vmem:[%s329 + $0xc0] sm:$0xff]
        %v866 = vld [vmem:[%s329 + $0xc8] sm:$0xff]
        %v867 = vld [vmem:[%s329 + $0xd0] sm:$0xff]
        %v868 = vld [vmem:[%s329 + $0xd8] sm:$0xff]
        %v869 = vld [vmem:[%s329 + $0xe0] sm:$0xff]
        %v870 = vld [vmem:[%s329 + $0xe8] sm:$0xf]
        %s871 = scalar_lea.vmem %s1, 72
        %v872 = vld [vmem:[%s871] sm:$0xff]
        %v873 = vld [vmem:[%s871 + $0x8] sm:$0xff]
        %v874 = vld [vmem:[%s871 + $0x10] sm:$0xf]
        %v876 = vsel %vm364, %v847, 0
        %v879 = vsel %vm364, %v848, 0
        %v882 = vsel %vm364, %v849, 0
        %v885 = vsel %vm364, %v850, 0
        %v888 = vsel %vm364, %v851, 0
        %v891 = vsel %vm364, %v852, 0
        %v894 = vsel %vm364, %v853, 0
        %v897 = vsel %vm364, %v854, 0
        %v900 = vsel %vm364, %v855, 0
        %v903 = vsel %vm364, %v856, 0
        %v906 = vsel %vm364, %v857, 0
        %v909 = vsel %vm364, %v858, 0
        %v912 = vsel %vm364, %v859, 0
        %v915 = vsel %vm364, %v860, 0
        %v918 = vsel %vm364, %v861, 0
        %v921 = vsel %vm364, %v862, 0
        %v924 = vsel %vm364, %v863, 0
        %v927 = vsel %vm364, %v864, 0
        %v930 = vsel %vm364, %v865, 0
        %v933 = vsel %vm364, %v866, 0
        %v936 = vsel %vm364, %v867, 0
        %v939 = vsel %vm364, %v868, 0
        %v942 = vsel %vm364, %v869, 0
        %v945 = vsel %vm364, %v870, 0
        %v948 = vsel %vm437, %v874, 0
        %950 = vmatpush.msra.mxu0 0.0
        %951 = vmatpush.msra.mxu0 0.0
        %952 = vmatpush.msra.mxu0 0.0
        %953 = vmatpush.msra.mxu0 0.0
        %954 = vmatpush.msra.mxu0 0.0
        %955 = vmatpush.msra.mxu0 0.0
        %956 = vmatpush.msra.mxu0 0.0
        %957 = vmatpush.msra.mxu0 0.0
        %958 = vmatpush.msra.mxu0 0.0
        %959 = vmatpush.msra.mxu0 0.0
        %960 = vmatpush.msra.mxu0 0.0
        %961 = vmatpush.msra.mxu0 0.0
        %962 = vmatpush.msra.mxu0 0.0
        %963 = vmatpush.msra.mxu0 %v948
        %964 = vmatpush.msra.mxu0 %v873
        %965 = vmatpush.msra.mxu0 %v872
        %966 = vmatmul.f32.gmra.mxu0 %v876
        %v967 = vpop.f32.mrf.mxu0
        %v968 = vadd.f32 0.0, %v967
        %969 = vmatmul.f32.gmra.mxu0 %v879
        %v970 = vpop.f32.mrf.mxu0
        %v971 = vadd.f32 0.0, %v970
        %972 = vmatmul.f32.gmra.mxu0 %v882
        %v973 = vpop.f32.mrf.mxu0
        %v974 = vadd.f32 0.0, %v973
        %975 = vmatmul.f32.gmra.mxu0 %v885
        %v976 = vpop.f32.mrf.mxu0
        %v977 = vadd.f32 0.0, %v976
        %978 = vmatmul.f32.gmra.mxu0 %v888
        %v979 = vpop.f32.mrf.mxu0
        %v980 = vadd.f32 0.0, %v979
        %981 = vmatmul.f32.gmra.mxu0 %v891
        %v982 = vpop.f32.mrf.mxu0
        %v983 = vadd.f32 0.0, %v982
        %984 = vmatmul.f32.gmra.mxu0 %v894
        %v985 = vpop.f32.mrf.mxu0
        %v986 = vadd.f32 0.0, %v985
        %987 = vmatmul.f32.gmra.mxu0 %v897
        %v988 = vpop.f32.mrf.mxu0
        %v989 = vadd.f32 0.0, %v988
        %990 = vmatmul.f32.gmra.mxu0 %v900
        %v991 = vpop.f32.mrf.mxu0
        %v992 = vadd.f32 0.0, %v991
        %993 = vmatmul.f32.gmra.mxu0 %v903
        %v994 = vpop.f32.mrf.mxu0
        %v995 = vadd.f32 0.0, %v994
        %996 = vmatmul.f32.gmra.mxu0 %v906
        %v997 = vpop.f32.mrf.mxu0
        %v998 = vadd.f32 0.0, %v997
        %999 = vmatmul.f32.gmra.mxu0 %v909
        %v1000 = vpop.f32.mrf.mxu0
        %v1001 = vadd.f32 0.0, %v1000
        %1002 = vmatmul.f32.gmra.mxu0 %v912
        %v1003 = vpop.f32.mrf.mxu0
        %v1004 = vadd.f32 0.0, %v1003
        %1005 = vmatmul.f32.gmra.mxu0 %v915
        %v1006 = vpop.f32.mrf.mxu0
        %v1007 = vadd.f32 0.0, %v1006
        %1008 = vmatmul.f32.gmra.mxu0 %v918
        %v1009 = vpop.f32.mrf.mxu0
        %v1010 = vadd.f32 0.0, %v1009
        %1011 = vmatmul.f32.gmra.mxu0 %v921
        %v1012 = vpop.f32.mrf.mxu0
        %v1013 = vadd.f32 0.0, %v1012
        %1014 = vmatmul.f32.gmra.mxu0 %v924
        %v1015 = vpop.f32.mrf.mxu0
        %v1016 = vadd.f32 0.0, %v1015
        %1017 = vmatmul.f32.gmra.mxu0 %v927
        %v1018 = vpop.f32.mrf.mxu0
        %v1019 = vadd.f32 0.0, %v1018
        %1020 = vmatmul.f32.gmra.mxu0 %v930
        %v1021 = vpop.f32.mrf.mxu0
        %v1022 = vadd.f32 0.0, %v1021
        %1023 = vmatmul.f32.gmra.mxu0 %v933
        %v1024 = vpop.f32.mrf.mxu0
        %v1025 = vadd.f32 0.0, %v1024
        %1026 = vmatmul.f32.gmra.mxu0 %v936
        %v1027 = vpop.f32.mrf.mxu0
        %v1028 = vadd.f32 0.0, %v1027
        %1029 = vmatmul.f32.gmra.mxu0 %v939
        %v1030 = vpop.f32.mrf.mxu0
        %v1031 = vadd.f32 0.0, %v1030
        %1032 = vmatmul.f32.gmra.mxu0 %v942
        %v1033 = vpop.f32.mrf.mxu0
        %v1034 = vadd.f32 0.0, %v1033
        %1035 = vmatmul.f32.gmra.mxu0 %v945
        %v1036 = vpop.f32.mrf.mxu0
        %v1037 = vadd.f32 0.0, %v1036
        %1038 = vdwg.mxu0
        %v1039 = vadd.f32 %v823, %v968
        %v1040 = vadd.f32 %v824, %v971
        %v1041 = vadd.f32 %v825, %v974
        %v1042 = vadd.f32 %v826, %v977
        %v1043 = vadd.f32 %v827, %v980
        %v1044 = vadd.f32 %v828, %v983
        %v1045 = vadd.f32 %v829, %v986
        %v1046 = vadd.f32 %v830, %v989
        %v1047 = vadd.f32 %v831, %v992
        %v1048 = vadd.f32 %v832, %v995
        %v1049 = vadd.f32 %v833, %v998
        %v1050 = vadd.f32 %v834, %v1001
        %v1051 = vadd.f32 %v835, %v1004
        %v1052 = vadd.f32 %v836, %v1007
        %v1053 = vadd.f32 %v837, %v1010
        %v1054 = vadd.f32 %v838, %v1013
        %v1055 = vadd.f32 %v839, %v1016
        %v1056 = vadd.f32 %v840, %v1019
        %v1057 = vadd.f32 %v841, %v1022
        %v1058 = vadd.f32 %v842, %v1025
        %v1059 = vadd.f32 %v843, %v1028
        %v1060 = vadd.f32 %v844, %v1031
        %v1061 = vadd.f32 %v845, %v1034
        %v1062 = vadd.f32 %v846, %v1037
        %v1063 = vld [vmem:[%s329 + $0x40] sm:$0xff]
        %v1064 = vld [vmem:[%s329 + $0x48] sm:$0xff]
        %v1065 = vld [vmem:[%s329 + $0x50] sm:$0xff]
        %v1066 = vld [vmem:[%s329 + $0x58] sm:$0xff]
        %v1067 = vld [vmem:[%s329 + $0x60] sm:$0xff]
        %v1068 = vld [vmem:[%s329 + $0x68] sm:$0xff]
        %v1069 = vld [vmem:[%s329 + $0x70] sm:$0xff]
        %v1070 = vld [vmem:[%s329 + $0x78] sm:$0xff]
        %v1071 = vld [vmem:[%s329 + $0x80] sm:$0xff]
        %v1072 = vld [vmem:[%s329 + $0x88] sm:$0xff]
        %v1073 = vld [vmem:[%s329 + $0x90] sm:$0xff]
        %v1074 = vld [vmem:[%s329 + $0x98] sm:$0xff]
        %v1075 = vld [vmem:[%s329 + $0xa0] sm:$0xff]
        %v1076 = vld [vmem:[%s329 + $0xa8] sm:$0xff]
        %v1077 = vld [vmem:[%s329 + $0xb0] sm:$0xff]
        %v1078 = vld [vmem:[%s329 + $0xb8] sm:$0xff]
        %v1079 = vld [vmem:[%s329 + $0xc0] sm:$0xff]
        %v1080 = vld [vmem:[%s329 + $0xc8] sm:$0xff]
        %v1081 = vld [vmem:[%s329 + $0xd0] sm:$0xff]
        %v1082 = vld [vmem:[%s329 + $0xd8] sm:$0xff]
        %v1083 = vld [vmem:[%s329 + $0xe0] sm:$0xff]
        %v1084 = vld [vmem:[%s329 + $0xe8] sm:$0xff]
        %v1085 = vld [vmem:[%s329 + $0xf0] sm:$0xff]
        %v1086 = vld [vmem:[%s329 + $0xf8] sm:$0xf]
        %s1087 = scalar_lea.vmem %s1, 96
        %v1088 = vld [vmem:[%s1087] sm:$0xff]
        %v1089 = vld [vmem:[%s1087 + $0x8] sm:$0xff]
        %v1090 = vld [vmem:[%s1087 + $0x10] sm:$0xf]
        %v1092 = vsel %vm364, %v1063, 0
        %v1095 = vsel %vm364, %v1064, 0
        %v1098 = vsel %vm364, %v1065, 0
        %v1101 = vsel %vm364, %v1066, 0
        %v1104 = vsel %vm364, %v1067, 0
        %v1107 = vsel %vm364, %v1068, 0
        %v1110 = vsel %vm364, %v1069, 0
        %v1113 = vsel %vm364, %v1070, 0
        %v1116 = vsel %vm364, %v1071, 0
        %v1119 = vsel %vm364, %v1072, 0
        %v1122 = vsel %vm364, %v1073, 0
        %v1125 = vsel %vm364, %v1074, 0
        %v1128 = vsel %vm364, %v1075, 0
        %v1131 = vsel %vm364, %v1076, 0
        %v1134 = vsel %vm364, %v1077, 0
        %v1137 = vsel %vm364, %v1078, 0
        %v1140 = vsel %vm364, %v1079, 0
        %v1143 = vsel %vm364, %v1080, 0
        %v1146 = vsel %vm364, %v1081, 0
        %v1149 = vsel %vm364, %v1082, 0
        %v1152 = vsel %vm364, %v1083, 0
        %v1155 = vsel %vm364, %v1084, 0
        %v1158 = vsel %vm364, %v1085, 0
        %v1161 = vsel %vm364, %v1086, 0
        %v1164 = vsel %vm437, %v1090, 0
        %1166 = vmatpush.msra.mxu0 0.0
        %1167 = vmatpush.msra.mxu0 0.0
        %1168 = vmatpush.msra.mxu0 0.0
        %1169 = vmatpush.msra.mxu0 0.0
        %1170 = vmatpush.msra.mxu0 0.0
        %1171 = vmatpush.msra.mxu0 0.0
        %1172 = vmatpush.msra.mxu0 0.0
        %1173 = vmatpush.msra.mxu0 0.0
        %1174 = vmatpush.msra.mxu0 0.0
        %1175 = vmatpush.msra.mxu0 0.0
        %1176 = vmatpush.msra.mxu0 0.0
        %1177 = vmatpush.msra.mxu0 0.0
        %1178 = vmatpush.msra.mxu0 0.0
        %1179 = vmatpush.msra.mxu0 %v1164
        %1180 = vmatpush.msra.mxu0 %v1089
        %1181 = vmatpush.msra.mxu0 %v1088
        %1182 = vmatmul.f32.gmra.mxu0 %v1092
        %v1183 = vpop.f32.mrf.mxu0
        %v1184 = vadd.f32 0.0, %v1183
        %1185 = vmatmul.f32.gmra.mxu0 %v1095
        %v1186 = vpop.f32.mrf.mxu0
        %v1187 = vadd.f32 0.0, %v1186
        %1188 = vmatmul.f32.gmra.mxu0 %v1098
        %v1189 = vpop.f32.mrf.mxu0
        %v1190 = vadd.f32 0.0, %v1189
        %1191 = vmatmul.f32.gmra.mxu0 %v1101
        %v1192 = vpop.f32.mrf.mxu0
        %v1193 = vadd.f32 0.0, %v1192
        %1194 = vmatmul.f32.gmra.mxu0 %v1104
        %v1195 = vpop.f32.mrf.mxu0
        %v1196 = vadd.f32 0.0, %v1195
        %1197 = vmatmul.f32.gmra.mxu0 %v1107
        %v1198 = vpop.f32.mrf.mxu0
        %v1199 = vadd.f32 0.0, %v1198
        %1200 = vmatmul.f32.gmra.mxu0 %v1110
        %v1201 = vpop.f32.mrf.mxu0
        %v1202 = vadd.f32 0.0, %v1201
        %1203 = vmatmul.f32.gmra.mxu0 %v1113
        %v1204 = vpop.f32.mrf.mxu0
        %v1205 = vadd.f32 0.0, %v1204
        %1206 = vmatmul.f32.gmra.mxu0 %v1116
        %v1207 = vpop.f32.mrf.mxu0
        %v1208 = vadd.f32 0.0, %v1207
        %1209 = vmatmul.f32.gmra.mxu0 %v1119
        %v1210 = vpop.f32.mrf.mxu0
        %v1211 = vadd.f32 0.0, %v1210
        %1212 = vmatmul.f32.gmra.mxu0 %v1122
        %v1213 = vpop.f32.mrf.mxu0
        %v1214 = vadd.f32 0.0, %v1213
        %1215 = vmatmul.f32.gmra.mxu0 %v1125
        %v1216 = vpop.f32.mrf.mxu0
        %v1217 = vadd.f32 0.0, %v1216
        %1218 = vmatmul.f32.gmra.mxu0 %v1128
        %v1219 = vpop.f32.mrf.mxu0
        %v1220 = vadd.f32 0.0, %v1219
        %1221 = vmatmul.f32.gmra.mxu0 %v1131
        %v1222 = vpop.f32.mrf.mxu0
        %v1223 = vadd.f32 0.0, %v1222
        %1224 = vmatmul.f32.gmra.mxu0 %v1134
        %v1225 = vpop.f32.mrf.mxu0
        %v1226 = vadd.f32 0.0, %v1225
        %1227 = vmatmul.f32.gmra.mxu0 %v1137
        %v1228 = vpop.f32.mrf.mxu0
        %v1229 = vadd.f32 0.0, %v1228
        %1230 = vmatmul.f32.gmra.mxu0 %v1140
        %v1231 = vpop.f32.mrf.mxu0
        %v1232 = vadd.f32 0.0, %v1231
        %1233 = vmatmul.f32.gmra.mxu0 %v1143
        %v1234 = vpop.f32.mrf.mxu0
        %v1235 = vadd.f32 0.0, %v1234
        %1236 = vmatmul.f32.gmra.mxu0 %v1146
        %v1237 = vpop.f32.mrf.mxu0
        %v1238 = vadd.f32 0.0, %v1237
        %1239 = vmatmul.f32.gmra.mxu0 %v1149
        %v1240 = vpop.f32.mrf.mxu0
        %v1241 = vadd.f32 0.0, %v1240
        %1242 = vmatmul.f32.gmra.mxu0 %v1152
        %v1243 = vpop.f32.mrf.mxu0
        %v1244 = vadd.f32 0.0, %v1243
        %1245 = vmatmul.f32.gmra.mxu0 %v1155
        %v1246 = vpop.f32.mrf.mxu0
        %v1247 = vadd.f32 0.0, %v1246
        %1248 = vmatmul.f32.gmra.mxu0 %v1158
        %v1249 = vpop.f32.mrf.mxu0
        %v1250 = vadd.f32 0.0, %v1249
        %1251 = vmatmul.f32.gmra.mxu0 %v1161
        %v1252 = vpop.f32.mrf.mxu0
        %v1253 = vadd.f32 0.0, %v1252
        %1254 = vdwg.mxu0
        %v1255 = vadd.f32 %v1039, %v1184
        %v1256 = vadd.f32 %v1040, %v1187
        %v1257 = vadd.f32 %v1041, %v1190
        %v1258 = vadd.f32 %v1042, %v1193
        %v1259 = vadd.f32 %v1043, %v1196
        %v1260 = vadd.f32 %v1044, %v1199
        %v1261 = vadd.f32 %v1045, %v1202
        %v1262 = vadd.f32 %v1046, %v1205
        %v1263 = vadd.f32 %v1047, %v1208
        %v1264 = vadd.f32 %v1048, %v1211
        %v1265 = vadd.f32 %v1049, %v1214
        %v1266 = vadd.f32 %v1050, %v1217
        %v1267 = vadd.f32 %v1051, %v1220
        %v1268 = vadd.f32 %v1052, %v1223
        %v1269 = vadd.f32 %v1053, %v1226
        %v1270 = vadd.f32 %v1054, %v1229
        %v1271 = vadd.f32 %v1055, %v1232
        %v1272 = vadd.f32 %v1056, %v1235
        %v1273 = vadd.f32 %v1057, %v1238
        %v1274 = vadd.f32 %v1058, %v1241
        %v1275 = vadd.f32 %v1059, %v1244
        %v1276 = vadd.f32 %v1060, %v1247
        %v1277 = vadd.f32 %v1061, %v1250
        %v1278 = vadd.f32 %v1062, %v1253
        %v1279 = vld [vmem:[%s2] sm:$0x1]
        %v1281 = vperm.slane %v1279, 0
        %v1283 = vadd.f32 %v1255, %v1281
        %v1284 = vadd.f32 %v1256, %v1281
        %v1285 = vadd.f32 %v1257, %v1281
        %v1286 = vadd.f32 %v1258, %v1281
        %v1287 = vadd.f32 %v1259, %v1281
        %v1288 = vadd.f32 %v1260, %v1281
        %v1289 = vadd.f32 %v1261, %v1281
        %v1290 = vadd.f32 %v1262, %v1281
        %v1291 = vadd.f32 %v1263, %v1281
        %v1292 = vadd.f32 %v1264, %v1281
        %v1293 = vadd.f32 %v1265, %v1281
        %v1294 = vadd.f32 %v1266, %v1281
        %v1295 = vadd.f32 %v1267, %v1281
        %v1296 = vadd.f32 %v1268, %v1281
        %v1297 = vadd.f32 %v1269, %v1281
        %v1298 = vadd.f32 %v1270, %v1281
        %v1299 = vadd.f32 %v1271, %v1281
        %v1300 = vadd.f32 %v1272, %v1281
        %v1301 = vadd.f32 %v1273, %v1281
        %v1302 = vadd.f32 %v1274, %v1281
        %v1303 = vadd.f32 %v1275, %v1281
        %v1304 = vadd.f32 %v1276, %v1281
        %v1305 = vadd.f32 %v1277, %v1281
        %v1306 = vadd.f32 %v1278, %v1281
        %v1307 = vmax.f32 %v1283, 0.0
        %v1308 = vmax.f32 %v1284, 0.0
        %v1309 = vmax.f32 %v1285, 0.0
        %v1310 = vmax.f32 %v1286, 0.0
        %v1311 = vmax.f32 %v1287, 0.0
        %v1312 = vmax.f32 %v1288, 0.0
        %v1313 = vmax.f32 %v1289, 0.0
        %v1314 = vmax.f32 %v1290, 0.0
        %v1315 = vmax.f32 %v1291, 0.0
        %v1316 = vmax.f32 %v1292, 0.0
        %v1317 = vmax.f32 %v1293, 0.0
        %v1318 = vmax.f32 %v1294, 0.0
        %v1319 = vmax.f32 %v1295, 0.0
        %v1320 = vmax.f32 %v1296, 0.0
        %v1321 = vmax.f32 %v1297, 0.0
        %v1322 = vmax.f32 %v1298, 0.0
        %v1323 = vmax.f32 %v1299, 0.0
        %v1324 = vmax.f32 %v1300, 0.0
        %v1325 = vmax.f32 %v1301, 0.0
        %v1326 = vmax.f32 %v1302, 0.0
        %v1327 = vmax.f32 %v1303, 0.0
        %v1328 = vmax.f32 %v1304, 0.0
        %v1329 = vmax.f32 %v1305, 0.0
        %v1330 = vmax.f32 %v1306, 0.0
        %vm1331 = vcmask 261120
        %1332 = vst.msk [vmem:[#allocation2] sm:$0xff] %vm1331, %v1307
        %1333 = vst.msk [vmem:[#allocation2 + $0x8] sm:$0xff] %vm1331, %v1308
        %1334 = vst.msk [vmem:[#allocation2 + $0x10] sm:$0xff] %vm1331, %v1309
        %1335 = vst.msk [vmem:[#allocation2 + $0x18] sm:$0xff] %vm1331, %v1310
        %1336 = vst.msk [vmem:[#allocation2 + $0x20] sm:$0xff] %vm1331, %v1311
        %1337 = vst.msk [vmem:[#allocation2 + $0x28] sm:$0xff] %vm1331, %v1312
        %1338 = vst.msk [vmem:[#allocation2 + $0x30] sm:$0xff] %vm1331, %v1313
        %1339 = vst.msk [vmem:[#allocation2 + $0x38] sm:$0xff] %vm1331, %v1314
        %1340 = vst.msk [vmem:[#allocation2 + $0x40] sm:$0xff] %vm1331, %v1315
        %1341 = vst.msk [vmem:[#allocation2 + $0x48] sm:$0xff] %vm1331, %v1316
        %1342 = vst.msk [vmem:[#allocation2 + $0x50] sm:$0xff] %vm1331, %v1317
        %1343 = vst.msk [vmem:[#allocation2 + $0x58] sm:$0xff] %vm1331, %v1318
        %1344 = vst.msk [vmem:[#allocation2 + $0x60] sm:$0xff] %vm1331, %v1319
        %1345 = vst.msk [vmem:[#allocation2 + $0x68] sm:$0xff] %vm1331, %v1320
        %1346 = vst.msk [vmem:[#allocation2 + $0x70] sm:$0xff] %vm1331, %v1321
        %1347 = vst.msk [vmem:[#allocation2 + $0x78] sm:$0xff] %vm1331, %v1322
        %1348 = vst.msk [vmem:[#allocation2 + $0x80] sm:$0xff] %vm1331, %v1323
        %1349 = vst.msk [vmem:[#allocation2 + $0x88] sm:$0xff] %vm1331, %v1324
        %1350 = vst.msk [vmem:[#allocation2 + $0x90] sm:$0xff] %vm1331, %v1325
        %1351 = vst.msk [vmem:[#allocation2 + $0x98] sm:$0xff] %vm1331, %v1326
        %1352 = vst.msk [vmem:[#allocation2 + $0xa0] sm:$0xff] %vm1331, %v1327
        %1353 = vst.msk [vmem:[#allocation2 + $0xa8] sm:$0xff] %vm1331, %v1328
        %1354 = vst.msk [vmem:[#allocation2 + $0xb0] sm:$0xff] %vm1331, %v1329
        %vm1355 = vcmask 257024
        %1356 = vst.msk [vmem:[#allocation2 + $0xb8] sm:$0xf] %vm1355, %v1330
        %v1357 = vld [vmem:[#allocation2] sm:$0xff]
        %v1358 = vld [vmem:[#allocation2 + $0x8] sm:$0xff]
        %v1359 = vld [vmem:[#allocation2 + $0x10] sm:$0xff]
        %v1360 = vld [vmem:[#allocation2 + $0x18] sm:$0xff]
        %v1361 = vld [vmem:[#allocation2 + $0x20] sm:$0xff]
        %v1362 = vld [vmem:[#allocation2 + $0x28] sm:$0xff]
        %v1363 = vld [vmem:[#allocation2 + $0x30] sm:$0xff]
        %v1364 = vld [vmem:[#allocation2 + $0x38] sm:$0xff]
        %v1365 = vld [vmem:[#allocation2 + $0x40] sm:$0xff]
        %v1366 = vld [vmem:[#allocation2 + $0x48] sm:$0xff]
        %v1367 = vld [vmem:[#allocation2 + $0x50] sm:$0xff]
        %v1368 = vld [vmem:[#allocation2 + $0x58] sm:$0xff]
        %v1369 = vld [vmem:[#allocation2 + $0x60] sm:$0xff]
        %v1370 = vld [vmem:[#allocation2 + $0x68] sm:$0xff]
        %v1371 = vld [vmem:[#allocation2 + $0x70] sm:$0xff]
        %v1372 = vld [vmem:[#allocation2 + $0x78] sm:$0xff]
        %v1373 = vld [vmem:[#allocation2 + $0x80] sm:$0xff]
        %v1374 = vld [vmem:[#allocation2 + $0x88] sm:$0xff]
        %v1375 = vld [vmem:[#allocation2 + $0x90] sm:$0xff]
        %v1376 = vld [vmem:[#allocation2 + $0x98] sm:$0x3]
        %v1377 = vld [vmem:[%s3] sm:$0xff]
        %v1378 = vld [vmem:[%s3 + $0x8] sm:$0xff]
        %v1379 = vld [vmem:[%s3 + $0x10] sm:$0xff]
        %v1380 = vld [vmem:[%s3 + $0x18] sm:$0xff]
        %v1381 = vld [vmem:[#allocation2 + $0x1] sm:$0xff]
        %v1382 = vld [vmem:[#allocation2 + $0x9] sm:$0xff]
        %v1383 = vld [vmem:[#allocation2 + $0x11] sm:$0xff]
        %v1384 = vld [vmem:[#allocation2 + $0x19] sm:$0xff]
        %v1385 = vld [vmem:[#allocation2 + $0x21] sm:$0xff]
        %v1386 = vld [vmem:[#allocation2 + $0x29] sm:$0xff]
        %v1387 = vld [vmem:[#allocation2 + $0x31] sm:$0xff]
        %v1388 = vld [vmem:[#allocation2 + $0x39] sm:$0xff]
        %v1389 = vld [vmem:[#allocation2 + $0x41] sm:$0xff]
        %v1390 = vld [vmem:[#allocation2 + $0x49] sm:$0xff]
        %v1391 = vld [vmem:[#allocation2 + $0x51] sm:$0xff]
        %v1392 = vld [vmem:[#allocation2 + $0x59] sm:$0xff]
        %v1393 = vld [vmem:[#allocation2 + $0x61] sm:$0xff]
        %v1394 = vld [vmem:[#allocation2 + $0x69] sm:$0xff]
        %v1395 = vld [vmem:[#allocation2 + $0x71] sm:$0xff]
        %v1396 = vld [vmem:[#allocation2 + $0x79] sm:$0xff]
        %v1397 = vld [vmem:[#allocation2 + $0x81] sm:$0xff]
        %v1398 = vld [vmem:[#allocation2 + $0x89] sm:$0xff]
        %v1399 = vld [vmem:[#allocation2 + $0x91] sm:$0xff]
        %v1400 = vld [vmem:[#allocation2 + $0x99] sm:$0x3]
        %s1401 = scalar_lea.vmem %s3, 32
        %v1402 = vld [vmem:[%s1401] sm:$0xff]
        %v1403 = vld [vmem:[%s1401 + $0x8] sm:$0xff]
        %v1404 = vld [vmem:[%s1401 + $0x10] sm:$0xff]
        %v1405 = vld [vmem:[%s1401 + $0x18] sm:$0xff]
        %v1407 = vsel %vm1331, %v1381, 0
        %v1410 = vsel %vm1331, %v1382, 0
        %v1413 = vsel %vm1331, %v1383, 0
        %v1416 = vsel %vm1331, %v1384, 0
        %v1419 = vsel %vm1331, %v1385, 0
        %v1422 = vsel %vm1331, %v1386, 0
        %v1425 = vsel %vm1331, %v1387, 0
        %v1428 = vsel %vm1331, %v1388, 0
        %v1431 = vsel %vm1331, %v1389, 0
        %v1434 = vsel %vm1331, %v1390, 0
        %v1437 = vsel %vm1331, %v1391, 0
        %v1440 = vsel %vm1331, %v1392, 0
        %v1443 = vsel %vm1331, %v1393, 0
        %v1446 = vsel %vm1331, %v1394, 0
        %v1449 = vsel %vm1331, %v1395, 0
        %v1452 = vsel %vm1331, %v1396, 0
        %v1455 = vsel %vm1331, %v1397, 0
        %v1458 = vsel %vm1331, %v1398, 0
        %v1461 = vsel %vm1331, %v1399, 0
        %v1464 = vsel %vm1331, %v1400, 0
        %1466 = vmatpush.msra.mxu0 0.0
        %1467 = vmatpush.msra.mxu0 0.0
        %1468 = vmatpush.msra.mxu0 0.0
        %1469 = vmatpush.msra.mxu0 0.0
        %1470 = vmatpush.msra.mxu0 0.0
        %1471 = vmatpush.msra.mxu0 0.0
        %1472 = vmatpush.msra.mxu0 0.0
        %1473 = vmatpush.msra.mxu0 0.0
        %1474 = vmatpush.msra.mxu0 0.0
        %1475 = vmatpush.msra.mxu0 0.0
        %1476 = vmatpush.msra.mxu0 0.0
        %1477 = vmatpush.msra.mxu0 0.0
        %1478 = vmatpush.msra.mxu0 %v1405
        %1479 = vmatpush.msra.mxu0 %v1404
        %1480 = vmatpush.msra.mxu0 %v1403
        %1481 = vmatpush.msra.mxu0 %v1402
        %1482 = vmatmul.f32.gmra.mxu0 %v1407
        %v1483 = vpop.f32.mrf.mxu0
        %v1484 = vadd.f32 0.0, %v1483
        %1485 = vmatmul.f32.gmra.mxu0 %v1410
        %v1486 = vpop.f32.mrf.mxu0
        %v1487 = vadd.f32 0.0, %v1486
        %1488 = vmatmul.f32.gmra.mxu0 %v1413
        %v1489 = vpop.f32.mrf.mxu0
        %v1490 = vadd.f32 0.0, %v1489
        %1491 = vmatmul.f32.gmra.mxu0 %v1416
        %v1492 = vpop.f32.mrf.mxu0
        %v1493 = vadd.f32 0.0, %v1492
        %1494 = vmatmul.f32.gmra.mxu0 %v1419
        %v1495 = vpop.f32.mrf.mxu0
        %v1496 = vadd.f32 0.0, %v1495
        %1497 = vmatmul.f32.gmra.mxu0 %v1422
        %v1498 = vpop.f32.mrf.mxu0
        %v1499 = vadd.f32 0.0, %v1498
        %1500 = vmatmul.f32.gmra.mxu0 %v1425
        %v1501 = vpop.f32.mrf.mxu0
        %v1502 = vadd.f32 0.0, %v1501
        %1503 = vmatmul.f32.gmra.mxu0 %v1428
        %v1504 = vpop.f32.mrf.mxu0
        %v1505 = vadd.f32 0.0, %v1504
        %1506 = vmatmul.f32.gmra.mxu0 %v1431
        %v1507 = vpop.f32.mrf.mxu0
        %v1508 = vadd.f32 0.0, %v1507
        %1509 = vmatmul.f32.gmra.mxu0 %v1434
        %v1510 = vpop.f32.mrf.mxu0
        %v1511 = vadd.f32 0.0, %v1510
        %1512 = vmatmul.f32.gmra.mxu0 %v1437
        %v1513 = vpop.f32.mrf.mxu0
        %v1514 = vadd.f32 0.0, %v1513
        %1515 = vmatmul.f32.gmra.mxu0 %v1440
        %v1516 = vpop.f32.mrf.mxu0
        %v1517 = vadd.f32 0.0, %v1516
        %1518 = vmatmul.f32.gmra.mxu0 %v1443
        %v1519 = vpop.f32.mrf.mxu0
        %v1520 = vadd.f32 0.0, %v1519
        %1521 = vmatmul.f32.gmra.mxu0 %v1446
        %v1522 = vpop.f32.mrf.mxu0
        %v1523 = vadd.f32 0.0, %v1522
        %1524 = vmatmul.f32.gmra.mxu0 %v1449
        %v1525 = vpop.f32.mrf.mxu0
        %v1526 = vadd.f32 0.0, %v1525
        %1527 = vmatmul.f32.gmra.mxu0 %v1452
        %v1528 = vpop.f32.mrf.mxu0
        %v1529 = vadd.f32 0.0, %v1528
        %1530 = vmatmul.f32.gmra.mxu0 %v1455
        %v1531 = vpop.f32.mrf.mxu0
        %v1532 = vadd.f32 0.0, %v1531
        %1533 = vmatmul.f32.gmra.mxu0 %v1458
        %v1534 = vpop.f32.mrf.mxu0
        %v1535 = vadd.f32 0.0, %v1534
        %1536 = vmatmul.f32.gmra.mxu0 %v1461
        %v1537 = vpop.f32.mrf.mxu0
        %v1538 = vadd.f32 0.0, %v1537
        %1539 = vmatmul.f32.gmra.mxu0 %v1464
        %v1540 = vpop.f32.mrf.mxu0
        %v1541 = vadd.f32 0.0, %v1540
        %1542 = vdwg.mxu0
        %v1544 = vsel %vm1331, %v1357, 0
        %v1547 = vsel %vm1331, %v1358, 0
        %v1550 = vsel %vm1331, %v1359, 0
        %v1553 = vsel %vm1331, %v1360, 0
        %v1556 = vsel %vm1331, %v1361, 0
        %v1559 = vsel %vm1331, %v1362, 0
        %v1562 = vsel %vm1331, %v1363, 0
        %v1565 = vsel %vm1331, %v1364, 0
        %v1568 = vsel %vm1331, %v1365, 0
        %v1571 = vsel %vm1331, %v1366, 0
        %v1574 = vsel %vm1331, %v1367, 0
        %v1577 = vsel %vm1331, %v1368, 0
        %v1580 = vsel %vm1331, %v1369, 0
        %v1583 = vsel %vm1331, %v1370, 0
        %v1586 = vsel %vm1331, %v1371, 0
        %v1589 = vsel %vm1331, %v1372, 0
        %v1592 = vsel %vm1331, %v1373, 0
        %v1595 = vsel %vm1331, %v1374, 0
        %v1598 = vsel %vm1331, %v1375, 0
        %v1601 = vsel %vm1331, %v1376, 0
        %1603 = vmatpush.msra.mxu0 0.0
        %1604 = vmatpush.msra.mxu0 0.0
        %1605 = vmatpush.msra.mxu0 0.0
        %1606 = vmatpush.msra.mxu0 0.0
        %1607 = vmatpush.msra.mxu0 0.0
        %1608 = vmatpush.msra.mxu0 0.0
        %1609 = vmatpush.msra.mxu0 0.0
        %1610 = vmatpush.msra.mxu0 0.0
        %1611 = vmatpush.msra.mxu0 0.0
        %1612 = vmatpush.msra.mxu0 0.0
        %1613 = vmatpush.msra.mxu0 0.0
        %1614 = vmatpush.msra.mxu0 0.0
        %1615 = vmatpush.msra.mxu0 %v1380
        %1616 = vmatpush.msra.mxu0 %v1379
        %1617 = vmatpush.msra.mxu0 %v1378
        %1618 = vmatpush.msra.mxu0 %v1377
        %1619 = vmatmul.f32.gmra.mxu0 %v1544
        %v1620 = vpop.f32.mrf.mxu0
        %v1621 = vadd.f32 %v1484, %v1620
        %1622 = vmatmul.f32.gmra.mxu0 %v1547
        %v1623 = vpop.f32.mrf.mxu0
        %v1624 = vadd.f32 %v1487, %v1623
        %1625 = vmatmul.f32.gmra.mxu0 %v1550
        %v1626 = vpop.f32.mrf.mxu0
        %v1627 = vadd.f32 %v1490, %v1626
        %1628 = vmatmul.f32.gmra.mxu0 %v1553
        %v1629 = vpop.f32.mrf.mxu0
        %v1630 = vadd.f32 %v1493, %v1629
        %1631 = vmatmul.f32.gmra.mxu0 %v1556
        %v1632 = vpop.f32.mrf.mxu0
        %v1633 = vadd.f32 %v1496, %v1632
        %1634 = vmatmul.f32.gmra.mxu0 %v1559
        %v1635 = vpop.f32.mrf.mxu0
        %v1636 = vadd.f32 %v1499, %v1635
        %1637 = vmatmul.f32.gmra.mxu0 %v1562
        %v1638 = vpop.f32.mrf.mxu0
        %v1639 = vadd.f32 %v1502, %v1638
        %1640 = vmatmul.f32.gmra.mxu0 %v1565
        %v1641 = vpop.f32.mrf.mxu0
        %v1642 = vadd.f32 %v1505, %v1641
        %1643 = vmatmul.f32.gmra.mxu0 %v1568
        %v1644 = vpop.f32.mrf.mxu0
        %v1645 = vadd.f32 %v1508, %v1644
        %1646 = vmatmul.f32.gmra.mxu0 %v1571
        %v1647 = vpop.f32.mrf.mxu0
        %v1648 = vadd.f32 %v1511, %v1647
        %1649 = vmatmul.f32.gmra.mxu0 %v1574
        %v1650 = vpop.f32.mrf.mxu0
        %v1651 = vadd.f32 %v1514, %v1650
        %1652 = vmatmul.f32.gmra.mxu0 %v1577
        %v1653 = vpop.f32.mrf.mxu0
        %v1654 = vadd.f32 %v1517, %v1653
        %1655 = vmatmul.f32.gmra.mxu0 %v1580
        %v1656 = vpop.f32.mrf.mxu0
        %v1657 = vadd.f32 %v1520, %v1656
        %1658 = vmatmul.f32.gmra.mxu0 %v1583
        %v1659 = vpop.f32.mrf.mxu0
        %v1660 = vadd.f32 %v1523, %v1659
        %1661 = vmatmul.f32.gmra.mxu0 %v1586
        %v1662 = vpop.f32.mrf.mxu0
        %v1663 = vadd.f32 %v1526, %v1662
        %1664 = vmatmul.f32.gmra.mxu0 %v1589
        %v1665 = vpop.f32.mrf.mxu0
        %v1666 = vadd.f32 %v1529, %v1665
        %1667 = vmatmul.f32.gmra.mxu0 %v1592
        %v1668 = vpop.f32.mrf.mxu0
        %v1669 = vadd.f32 %v1532, %v1668
        %1670 = vmatmul.f32.gmra.mxu0 %v1595
        %v1671 = vpop.f32.mrf.mxu0
        %v1672 = vadd.f32 %v1535, %v1671
        %1673 = vmatmul.f32.gmra.mxu0 %v1598
        %v1674 = vpop.f32.mrf.mxu0
        %v1675 = vadd.f32 %v1538, %v1674
        %1676 = vmatmul.f32.gmra.mxu0 %v1601
        %v1677 = vpop.f32.mrf.mxu0
        %v1678 = vadd.f32 %v1541, %v1677
        %1679 = vdwg.mxu0
        %v1680 = vld [vmem:[#allocation2 + $0x2] sm:$0xff]
        %v1681 = vld [vmem:[#allocation2 + $0xa] sm:$0xff]
        %v1682 = vld [vmem:[#allocation2 + $0x12] sm:$0xff]
        %v1683 = vld [vmem:[#allocation2 + $0x1a] sm:$0xff]
        %v1684 = vld [vmem:[#allocation2 + $0x22] sm:$0xff]
        %v1685 = vld [vmem:[#allocation2 + $0x2a] sm:$0xff]
        %v1686 = vld [vmem:[#allocation2 + $0x32] sm:$0xff]
        %v1687 = vld [vmem:[#allocation2 + $0x3a] sm:$0xff]
        %v1688 = vld [vmem:[#allocation2 + $0x42] sm:$0xff]
        %v1689 = vld [vmem:[#allocation2 + $0x4a] sm:$0xff]
        %v1690 = vld [vmem:[#allocation2 + $0x52] sm:$0xff]
        %v1691 = vld [vmem:[#allocation2 + $0x5a] sm:$0xff]
        %v1692 = vld [vmem:[#allocation2 + $0x62] sm:$0xff]
        %v1693 = vld [vmem:[#allocation2 + $0x6a] sm:$0xff]
        %v1694 = vld [vmem:[#allocation2 + $0x72] sm:$0xff]
        %v1695 = vld [vmem:[#allocation2 + $0x7a] sm:$0xff]
        %v1696 = vld [vmem:[#allocation2 + $0x82] sm:$0xff]
        %v1697 = vld [vmem:[#allocation2 + $0x8a] sm:$0xff]
        %v1698 = vld [vmem:[#allocation2 + $0x92] sm:$0xff]
        %v1699 = vld [vmem:[#allocation2 + $0x9a] sm:$0x3]
        %s1700 = scalar_lea.vmem %s3, 64
        %v1701 = vld [vmem:[%s1700] sm:$0xff]
        %v1702 = vld [vmem:[%s1700 + $0x8] sm:$0xff]
        %v1703 = vld [vmem:[%s1700 + $0x10] sm:$0xff]
        %v1704 = vld [vmem:[%s1700 + $0x18] sm:$0xff]
        %v1706 = vsel %vm1331, %v1680, 0
        %v1709 = vsel %vm1331, %v1681, 0
        %v1712 = vsel %vm1331, %v1682, 0
        %v1715 = vsel %vm1331, %v1683, 0
        %v1718 = vsel %vm1331, %v1684, 0
        %v1721 = vsel %vm1331, %v1685, 0
        %v1724 = vsel %vm1331, %v1686, 0
        %v1727 = vsel %vm1331, %v1687, 0
        %v1730 = vsel %vm1331, %v1688, 0
        %v1733 = vsel %vm1331, %v1689, 0
        %v1736 = vsel %vm1331, %v1690, 0
        %v1739 = vsel %vm1331, %v1691, 0
        %v1742 = vsel %vm1331, %v1692, 0
        %v1745 = vsel %vm1331, %v1693, 0
        %v1748 = vsel %vm1331, %v1694, 0
        %v1751 = vsel %vm1331, %v1695, 0
        %v1754 = vsel %vm1331, %v1696, 0
        %v1757 = vsel %vm1331, %v1697, 0
        %v1760 = vsel %vm1331, %v1698, 0
        %v1763 = vsel %vm1331, %v1699, 0
        %1765 = vmatpush.msra.mxu0 0.0
        %1766 = vmatpush.msra.mxu0 0.0
        %1767 = vmatpush.msra.mxu0 0.0
        %1768 = vmatpush.msra.mxu0 0.0
        %1769 = vmatpush.msra.mxu0 0.0
        %1770 = vmatpush.msra.mxu0 0.0
        %1771 = vmatpush.msra.mxu0 0.0
        %1772 = vmatpush.msra.mxu0 0.0
        %1773 = vmatpush.msra.mxu0 0.0
        %1774 = vmatpush.msra.mxu0 0.0
        %1775 = vmatpush.msra.mxu0 0.0
        %1776 = vmatpush.msra.mxu0 0.0
        %1777 = vmatpush.msra.mxu0 %v1704
        %1778 = vmatpush.msra.mxu0 %v1703
        %1779 = vmatpush.msra.mxu0 %v1702
        %1780 = vmatpush.msra.mxu0 %v1701
        %1781 = vmatmul.f32.gmra.mxu0 %v1706
        %v1782 = vpop.f32.mrf.mxu0
        %v1783 = vadd.f32 0.0, %v1782
        %1784 = vmatmul.f32.gmra.mxu0 %v1709
        %v1785 = vpop.f32.mrf.mxu0
        %v1786 = vadd.f32 0.0, %v1785
        %1787 = vmatmul.f32.gmra.mxu0 %v1712
        %v1788 = vpop.f32.mrf.mxu0
        %v1789 = vadd.f32 0.0, %v1788
        %1790 = vmatmul.f32.gmra.mxu0 %v1715
        %v1791 = vpop.f32.mrf.mxu0
        %v1792 = vadd.f32 0.0, %v1791
        %1793 = vmatmul.f32.gmra.mxu0 %v1718
        %v1794 = vpop.f32.mrf.mxu0
        %v1795 = vadd.f32 0.0, %v1794
        %1796 = vmatmul.f32.gmra.mxu0 %v1721
        %v1797 = vpop.f32.mrf.mxu0
        %v1798 = vadd.f32 0.0, %v1797
        %1799 = vmatmul.f32.gmra.mxu0 %v1724
        %v1800 = vpop.f32.mrf.mxu0
        %v1801 = vadd.f32 0.0, %v1800
        %1802 = vmatmul.f32.gmra.mxu0 %v1727
        %v1803 = vpop.f32.mrf.mxu0
        %v1804 = vadd.f32 0.0, %v1803
        %1805 = vmatmul.f32.gmra.mxu0 %v1730
        %v1806 = vpop.f32.mrf.mxu0
        %v1807 = vadd.f32 0.0, %v1806
        %1808 = vmatmul.f32.gmra.mxu0 %v1733
        %v1809 = vpop.f32.mrf.mxu0
        %v1810 = vadd.f32 0.0, %v1809
        %1811 = vmatmul.f32.gmra.mxu0 %v1736
        %v1812 = vpop.f32.mrf.mxu0
        %v1813 = vadd.f32 0.0, %v1812
        %1814 = vmatmul.f32.gmra.mxu0 %v1739
        %v1815 = vpop.f32.mrf.mxu0
        %v1816 = vadd.f32 0.0, %v1815
        %1817 = vmatmul.f32.gmra.mxu0 %v1742
        %v1818 = vpop.f32.mrf.mxu0
        %v1819 = vadd.f32 0.0, %v1818
        %1820 = vmatmul.f32.gmra.mxu0 %v1745
        %v1821 = vpop.f32.mrf.mxu0
        %v1822 = vadd.f32 0.0, %v1821
        %1823 = vmatmul.f32.gmra.mxu0 %v1748
        %v1824 = vpop.f32.mrf.mxu0
        %v1825 = vadd.f32 0.0, %v1824
        %1826 = vmatmul.f32.gmra.mxu0 %v1751
        %v1827 = vpop.f32.mrf.mxu0
        %v1828 = vadd.f32 0.0, %v1827
        %1829 = vmatmul.f32.gmra.mxu0 %v1754
        %v1830 = vpop.f32.mrf.mxu0
        %v1831 = vadd.f32 0.0, %v1830
        %1832 = vmatmul.f32.gmra.mxu0 %v1757
        %v1833 = vpop.f32.mrf.mxu0
        %v1834 = vadd.f32 0.0, %v1833
        %1835 = vmatmul.f32.gmra.mxu0 %v1760
        %v1836 = vpop.f32.mrf.mxu0
        %v1837 = vadd.f32 0.0, %v1836
        %1838 = vmatmul.f32.gmra.mxu0 %v1763
        %v1839 = vpop.f32.mrf.mxu0
        %v1840 = vadd.f32 0.0, %v1839
        %1841 = vdwg.mxu0
        %v1842 = vadd.f32 %v1621, %v1783
        %v1843 = vadd.f32 %v1624, %v1786
        %v1844 = vadd.f32 %v1627, %v1789
        %v1845 = vadd.f32 %v1630, %v1792
        %v1846 = vadd.f32 %v1633, %v1795
        %v1847 = vadd.f32 %v1636, %v1798
        %v1848 = vadd.f32 %v1639, %v1801
        %v1849 = vadd.f32 %v1642, %v1804
        %v1850 = vadd.f32 %v1645, %v1807
        %v1851 = vadd.f32 %v1648, %v1810
        %v1852 = vadd.f32 %v1651, %v1813
        %v1853 = vadd.f32 %v1654, %v1816
        %v1854 = vadd.f32 %v1657, %v1819
        %v1855 = vadd.f32 %v1660, %v1822
        %v1856 = vadd.f32 %v1663, %v1825
        %v1857 = vadd.f32 %v1666, %v1828
        %v1858 = vadd.f32 %v1669, %v1831
        %v1859 = vadd.f32 %v1672, %v1834
        %v1860 = vadd.f32 %v1675, %v1837
        %v1861 = vadd.f32 %v1678, %v1840
        %v1862 = vld [vmem:[#allocation2 + $0x10] sm:$0xff]
        %v1863 = vld [vmem:[#allocation2 + $0x18] sm:$0xff]
        %v1864 = vld [vmem:[#allocation2 + $0x20] sm:$0xff]
        %v1865 = vld [vmem:[#allocation2 + $0x28] sm:$0xff]
        %v1866 = vld [vmem:[#allocation2 + $0x30] sm:$0xff]
        %v1867 = vld [vmem:[#allocation2 + $0x38] sm:$0xff]
        %v1868 = vld [vmem:[#allocation2 + $0x40] sm:$0xff]
        %v1869 = vld [vmem:[#allocation2 + $0x48] sm:$0xff]
        %v1870 = vld [vmem:[#allocation2 + $0x50] sm:$0xff]
        %v1871 = vld [vmem:[#allocation2 + $0x58] sm:$0xff]
        %v1872 = vld [vmem:[#allocation2 + $0x60] sm:$0xff]
        %v1873 = vld [vmem:[#allocation2 + $0x68] sm:$0xff]
        %v1874 = vld [vmem:[#allocation2 + $0x70] sm:$0xff]
        %v1875 = vld [vmem:[#allocation2 + $0x78] sm:$0xff]
        %v1876 = vld [vmem:[#allocation2 + $0x80] sm:$0xff]
        %v1877 = vld [vmem:[#allocation2 + $0x88] sm:$0xff]
        %v1878 = vld [vmem:[#allocation2 + $0x90] sm:$0xff]
        %v1879 = vld [vmem:[#allocation2 + $0x98] sm:$0xff]
        %v1880 = vld [vmem:[#allocation2 + $0xa0] sm:$0xff]
        %v1881 = vld [vmem:[#allocation2 + $0xa8] sm:$0x3]
        %s1882 = scalar_lea.vmem %s3, 96
        %v1883 = vld [vmem:[%s1882] sm:$0xff]
        %v1884 = vld [vmem:[%s1882 + $0x8] sm:$0xff]
        %v1885 = vld [vmem:[%s1882 + $0x10] sm:$0xff]
        %v1886 = vld [vmem:[%s1882 + $0x18] sm:$0xff]
        %v1888 = vsel %vm1331, %v1862, 0
        %v1891 = vsel %vm1331, %v1863, 0
        %v1894 = vsel %vm1331, %v1864, 0
        %v1897 = vsel %vm1331, %v1865, 0
        %v1900 = vsel %vm1331, %v1866, 0
        %v1903 = vsel %vm1331, %v1867, 0
        %v1906 = vsel %vm1331, %v1868, 0
        %v1909 = vsel %vm1331, %v1869, 0
        %v1912 = vsel %vm1331, %v1870, 0
        %v1915 = vsel %vm1331, %v1871, 0
        %v1918 = vsel %vm1331, %v1872, 0
        %v1921 = vsel %vm1331, %v1873, 0
        %v1924 = vsel %vm1331, %v1874, 0
        %v1927 = vsel %vm1331, %v1875, 0
        %v1930 = vsel %vm1331, %v1876, 0
        %v1933 = vsel %vm1331, %v1877, 0
        %v1936 = vsel %vm1331, %v1878, 0
        %v1939 = vsel %vm1331, %v1879, 0
        %v1942 = vsel %vm1331, %v1880, 0
        %v1945 = vsel %vm1331, %v1881, 0
        %1947 = vmatpush.msra.mxu0 0.0
        %1948 = vmatpush.msra.mxu0 0.0
        %1949 = vmatpush.msra.mxu0 0.0
        %1950 = vmatpush.msra.mxu0 0.0
        %1951 = vmatpush.msra.mxu0 0.0
        %1952 = vmatpush.msra.mxu0 0.0
        %1953 = vmatpush.msra.mxu0 0.0
        %1954 = vmatpush.msra.mxu0 0.0
        %1955 = vmatpush.msra.mxu0 0.0
        %1956 = vmatpush.msra.mxu0 0.0
        %1957 = vmatpush.msra.mxu0 0.0
        %1958 = vmatpush.msra.mxu0 0.0
        %1959 = vmatpush.msra.mxu0 %v1886
        %1960 = vmatpush.msra.mxu0 %v1885
        %1961 = vmatpush.msra.mxu0 %v1884
        %1962 = vmatpush.msra.mxu0 %v1883
        %1963 = vmatmul.f32.gmra.mxu0 %v1888
        %v1964 = vpop.f32.mrf.mxu0
        %v1965 = vadd.f32 0.0, %v1964
        %1966 = vmatmul.f32.gmra.mxu0 %v1891
        %v1967 = vpop.f32.mrf.mxu0
        %v1968 = vadd.f32 0.0, %v1967
        %1969 = vmatmul.f32.gmra.mxu0 %v1894
        %v1970 = vpop.f32.mrf.mxu0
        %v1971 = vadd.f32 0.0, %v1970
        %1972 = vmatmul.f32.gmra.mxu0 %v1897
        %v1973 = vpop.f32.mrf.mxu0
        %v1974 = vadd.f32 0.0, %v1973
        %1975 = vmatmul.f32.gmra.mxu0 %v1900
        %v1976 = vpop.f32.mrf.mxu0
        %v1977 = vadd.f32 0.0, %v1976
        %1978 = vmatmul.f32.gmra.mxu0 %v1903
        %v1979 = vpop.f32.mrf.mxu0
        %v1980 = vadd.f32 0.0, %v1979
        %1981 = vmatmul.f32.gmra.mxu0 %v1906
        %v1982 = vpop.f32.mrf.mxu0
        %v1983 = vadd.f32 0.0, %v1982
        %1984 = vmatmul.f32.gmra.mxu0 %v1909
        %v1985 = vpop.f32.mrf.mxu0
        %v1986 = vadd.f32 0.0, %v1985
        %1987 = vmatmul.f32.gmra.mxu0 %v1912
        %v1988 = vpop.f32.mrf.mxu0
        %v1989 = vadd.f32 0.0, %v1988
        %1990 = vmatmul.f32.gmra.mxu0 %v1915
        %v1991 = vpop.f32.mrf.mxu0
        %v1992 = vadd.f32 0.0, %v1991
        %1993 = vmatmul.f32.gmra.mxu0 %v1918
        %v1994 = vpop.f32.mrf.mxu0
        %v1995 = vadd.f32 0.0, %v1994
        %1996 = vmatmul.f32.gmra.mxu0 %v1921
        %v1997 = vpop.f32.mrf.mxu0
        %v1998 = vadd.f32 0.0, %v1997
        %1999 = vmatmul.f32.gmra.mxu0 %v1924
        %v2000 = vpop.f32.mrf.mxu0
        %v2001 = vadd.f32 0.0, %v2000
        %2002 = vmatmul.f32.gmra.mxu0 %v1927
        %v2003 = vpop.f32.mrf.mxu0
        %v2004 = vadd.f32 0.0, %v2003
        %2005 = vmatmul.f32.gmra.mxu0 %v1930
        %v2006 = vpop.f32.mrf.mxu0
        %v2007 = vadd.f32 0.0, %v2006
        %2008 = vmatmul.f32.gmra.mxu0 %v1933
        %v2009 = vpop.f32.mrf.mxu0
        %v2010 = vadd.f32 0.0, %v2009
        %2011 = vmatmul.f32.gmra.mxu0 %v1936
        %v2012 = vpop.f32.mrf.mxu0
        %v2013 = vadd.f32 0.0, %v2012
        %2014 = vmatmul.f32.gmra.mxu0 %v1939
        %v2015 = vpop.f32.mrf.mxu0
        %v2016 = vadd.f32 0.0, %v2015
        %2017 = vmatmul.f32.gmra.mxu0 %v1942
        %v2018 = vpop.f32.mrf.mxu0
        %v2019 = vadd.f32 0.0, %v2018
        %2020 = vmatmul.f32.gmra.mxu0 %v1945
        %v2021 = vpop.f32.mrf.mxu0
        %v2022 = vadd.f32 0.0, %v2021
        %2023 = vdwg.mxu0
        %v2024 = vadd.f32 %v1842, %v1965
        %v2025 = vadd.f32 %v1843, %v1968
        %v2026 = vadd.f32 %v1844, %v1971
        %v2027 = vadd.f32 %v1845, %v1974
        %v2028 = vadd.f32 %v1846, %v1977
        %v2029 = vadd.f32 %v1847, %v1980
        %v2030 = vadd.f32 %v1848, %v1983
        %v2031 = vadd.f32 %v1849, %v1986
        %v2032 = vadd.f32 %v1850, %v1989
        %v2033 = vadd.f32 %v1851, %v1992
        %v2034 = vadd.f32 %v1852, %v1995
        %v2035 = vadd.f32 %v1853, %v1998
        %v2036 = vadd.f32 %v1854, %v2001
        %v2037 = vadd.f32 %v1855, %v2004
        %v2038 = vadd.f32 %v1856, %v2007
        %v2039 = vadd.f32 %v1857, %v2010
        %v2040 = vadd.f32 %v1858, %v2013
        %v2041 = vadd.f32 %v1859, %v2016
        %v2042 = vadd.f32 %v1860, %v2019
        %v2043 = vadd.f32 %v1861, %v2022
        %v2044 = vld [vmem:[#allocation2 + $0x11] sm:$0xff]
        %v2045 = vld [vmem:[#allocation2 + $0x19] sm:$0xff]
        %v2046 = vld [vmem:[#allocation2 + $0x21] sm:$0xff]
        %v2047 = vld [vmem:[#allocation2 + $0x29] sm:$0xff]
        %v2048 = vld [vmem:[#allocation2 + $0x31] sm:$0xff]
        %v2049 = vld [vmem:[#allocation2 + $0x39] sm:$0xff]
        %v2050 = vld [vmem:[#allocation2 + $0x41] sm:$0xff]
        %v2051 = vld [vmem:[#allocation2 + $0x49] sm:$0xff]
        %v2052 = vld [vmem:[#allocation2 + $0x51] sm:$0xff]
        %v2053 = vld [vmem:[#allocation2 + $0x59] sm:$0xff]
        %v2054 = vld [vmem:[#allocation2 + $0x61] sm:$0xff]
        %v2055 = vld [vmem:[#allocation2 + $0x69] sm:$0xff]
        %v2056 = vld [vmem:[#allocation2 + $0x71] sm:$0xff]
        %v2057 = vld [vmem:[#allocation2 + $0x79] sm:$0xff]
        %v2058 = vld [vmem:[#allocation2 + $0x81] sm:$0xff]
        %v2059 = vld [vmem:[#allocation2 + $0x89] sm:$0xff]
        %v2060 = vld [vmem:[#allocation2 + $0x91] sm:$0xff]
        %v2061 = vld [vmem:[#allocation2 + $0x99] sm:$0xff]
        %v2062 = vld [vmem:[#allocation2 + $0xa1] sm:$0xff]
        %v2063 = vld [vmem:[#allocation2 + $0xa9] sm:$0x3]
        %s2064 = scalar_lea.vmem %s3, 128
        %v2065 = vld [vmem:[%s2064] sm:$0xff]
        %v2066 = vld [vmem:[%s2064 + $0x8] sm:$0xff]
        %v2067 = vld [vmem:[%s2064 + $0x10] sm:$0xff]
        %v2068 = vld [vmem:[%s2064 + $0x18] sm:$0xff]
        %v2070 = vsel %vm1331, %v2044, 0
        %v2073 = vsel %vm1331, %v2045, 0
        %v2076 = vsel %vm1331, %v2046, 0
        %v2079 = vsel %vm1331, %v2047, 0
        %v2082 = vsel %vm1331, %v2048, 0
        %v2085 = vsel %vm1331, %v2049, 0
        %v2088 = vsel %vm1331, %v2050, 0
        %v2091 = vsel %vm1331, %v2051, 0
        %v2094 = vsel %vm1331, %v2052, 0
        %v2097 = vsel %vm1331, %v2053, 0
        %v2100 = vsel %vm1331, %v2054, 0
        %v2103 = vsel %vm1331, %v2055, 0
        %v2106 = vsel %vm1331, %v2056, 0
        %v2109 = vsel %vm1331, %v2057, 0
        %v2112 = vsel %vm1331, %v2058, 0
        %v2115 = vsel %vm1331, %v2059, 0
        %v2118 = vsel %vm1331, %v2060, 0
        %v2121 = vsel %vm1331, %v2061, 0
        %v2124 = vsel %vm1331, %v2062, 0
        %v2127 = vsel %vm1331, %v2063, 0
        %2129 = vmatpush.msra.mxu0 0.0
        %2130 = vmatpush.msra.mxu0 0.0
        %2131 = vmatpush.msra.mxu0 0.0
        %2132 = vmatpush.msra.mxu0 0.0
        %2133 = vmatpush.msra.mxu0 0.0
        %2134 = vmatpush.msra.mxu0 0.0
        %2135 = vmatpush.msra.mxu0 0.0
        %2136 = vmatpush.msra.mxu0 0.0
        %2137 = vmatpush.msra.mxu0 0.0
        %2138 = vmatpush.msra.mxu0 0.0
        %2139 = vmatpush.msra.mxu0 0.0
        %2140 = vmatpush.msra.mxu0 0.0
        %2141 = vmatpush.msra.mxu0 %v2068
        %2142 = vmatpush.msra.mxu0 %v2067
        %2143 = vmatpush.msra.mxu0 %v2066
        %2144 = vmatpush.msra.mxu0 %v2065
        %2145 = vmatmul.f32.gmra.mxu0 %v2070
        %v2146 = vpop.f32.mrf.mxu0
        %v2147 = vadd.f32 0.0, %v2146
        %2148 = vmatmul.f32.gmra.mxu0 %v2073
        %v2149 = vpop.f32.mrf.mxu0
        %v2150 = vadd.f32 0.0, %v2149
        %2151 = vmatmul.f32.gmra.mxu0 %v2076
        %v2152 = vpop.f32.mrf.mxu0
        %v2153 = vadd.f32 0.0, %v2152
        %2154 = vmatmul.f32.gmra.mxu0 %v2079
        %v2155 = vpop.f32.mrf.mxu0
        %v2156 = vadd.f32 0.0, %v2155
        %2157 = vmatmul.f32.gmra.mxu0 %v2082
        %v2158 = vpop.f32.mrf.mxu0
        %v2159 = vadd.f32 0.0, %v2158
        %2160 = vmatmul.f32.gmra.mxu0 %v2085
        %v2161 = vpop.f32.mrf.mxu0
        %v2162 = vadd.f32 0.0, %v2161
        %2163 = vmatmul.f32.gmra.mxu0 %v2088
        %v2164 = vpop.f32.mrf.mxu0
        %v2165 = vadd.f32 0.0, %v2164
        %2166 = vmatmul.f32.gmra.mxu0 %v2091
        %v2167 = vpop.f32.mrf.mxu0
        %v2168 = vadd.f32 0.0, %v2167
        %2169 = vmatmul.f32.gmra.mxu0 %v2094
        %v2170 = vpop.f32.mrf.mxu0
        %v2171 = vadd.f32 0.0, %v2170
        %2172 = vmatmul.f32.gmra.mxu0 %v2097
        %v2173 = vpop.f32.mrf.mxu0
        %v2174 = vadd.f32 0.0, %v2173
        %2175 = vmatmul.f32.gmra.mxu0 %v2100
        %v2176 = vpop.f32.mrf.mxu0
        %v2177 = vadd.f32 0.0, %v2176
        %2178 = vmatmul.f32.gmra.mxu0 %v2103
        %v2179 = vpop.f32.mrf.mxu0
        %v2180 = vadd.f32 0.0, %v2179
        %2181 = vmatmul.f32.gmra.mxu0 %v2106
        %v2182 = vpop.f32.mrf.mxu0
        %v2183 = vadd.f32 0.0, %v2182
        %2184 = vmatmul.f32.gmra.mxu0 %v2109
        %v2185 = vpop.f32.mrf.mxu0
        %v2186 = vadd.f32 0.0, %v2185
        %2187 = vmatmul.f32.gmra.mxu0 %v2112
        %v2188 = vpop.f32.mrf.mxu0
        %v2189 = vadd.f32 0.0, %v2188
        %2190 = vmatmul.f32.gmra.mxu0 %v2115
        %v2191 = vpop.f32.mrf.mxu0
        %v2192 = vadd.f32 0.0, %v2191
        %2193 = vmatmul.f32.gmra.mxu0 %v2118
        %v2194 = vpop.f32.mrf.mxu0
        %v2195 = vadd.f32 0.0, %v2194
        %2196 = vmatmul.f32.gmra.mxu0 %v2121
        %v2197 = vpop.f32.mrf.mxu0
        %v2198 = vadd.f32 0.0, %v2197
        %2199 = vmatmul.f32.gmra.mxu0 %v2124
        %v2200 = vpop.f32.mrf.mxu0
        %v2201 = vadd.f32 0.0, %v2200
        %2202 = vmatmul.f32.gmra.mxu0 %v2127
        %v2203 = vpop.f32.mrf.mxu0
        %v2204 = vadd.f32 0.0, %v2203
        %2205 = vdwg.mxu0
        %v2206 = vadd.f32 %v2024, %v2147
        %v2207 = vadd.f32 %v2025, %v2150
        %v2208 = vadd.f32 %v2026, %v2153
        %v2209 = vadd.f32 %v2027, %v2156
        %v2210 = vadd.f32 %v2028, %v2159
        %v2211 = vadd.f32 %v2029, %v2162
        %v2212 = vadd.f32 %v2030, %v2165
        %v2213 = vadd.f32 %v2031, %v2168
        %v2214 = vadd.f32 %v2032, %v2171
        %v2215 = vadd.f32 %v2033, %v2174
        %v2216 = vadd.f32 %v2034, %v2177
        %v2217 = vadd.f32 %v2035, %v2180
        %v2218 = vadd.f32 %v2036, %v2183
        %v2219 = vadd.f32 %v2037, %v2186
        %v2220 = vadd.f32 %v2038, %v2189
        %v2221 = vadd.f32 %v2039, %v2192
        %v2222 = vadd.f32 %v2040, %v2195
        %v2223 = vadd.f32 %v2041, %v2198
        %v2224 = vadd.f32 %v2042, %v2201
        %v2225 = vadd.f32 %v2043, %v2204
        %v2226 = vld [vmem:[#allocation2 + $0x12] sm:$0xff]
        %v2227 = vld [vmem:[#allocation2 + $0x1a] sm:$0xff]
        %v2228 = vld [vmem:[#allocation2 + $0x22] sm:$0xff]
        %v2229 = vld [vmem:[#allocation2 + $0x2a] sm:$0xff]
        %v2230 = vld [vmem:[#allocation2 + $0x32] sm:$0xff]
        %v2231 = vld [vmem:[#allocation2 + $0x3a] sm:$0xff]
        %v2232 = vld [vmem:[#allocation2 + $0x42] sm:$0xff]
        %v2233 = vld [vmem:[#allocation2 + $0x4a] sm:$0xff]
        %v2234 = vld [vmem:[#allocation2 + $0x52] sm:$0xff]
        %v2235 = vld [vmem:[#allocation2 + $0x5a] sm:$0xff]
        %v2236 = vld [vmem:[#allocation2 + $0x62] sm:$0xff]
        %v2237 = vld [vmem:[#allocation2 + $0x6a] sm:$0xff]
        %v2238 = vld [vmem:[#allocation2 + $0x72] sm:$0xff]
        %v2239 = vld [vmem:[#allocation2 + $0x7a] sm:$0xff]
        %v2240 = vld [vmem:[#allocation2 + $0x82] sm:$0xff]
        %v2241 = vld [vmem:[#allocation2 + $0x8a] sm:$0xff]
        %v2242 = vld [vmem:[#allocation2 + $0x92] sm:$0xff]
        %v2243 = vld [vmem:[#allocation2 + $0x9a] sm:$0xff]
        %v2244 = vld [vmem:[#allocation2 + $0xa2] sm:$0xff]
        %v2245 = vld [vmem:[#allocation2 + $0xaa] sm:$0x3]
        %s2246 = scalar_lea.vmem %s3, 160
        %v2247 = vld [vmem:[%s2246] sm:$0xff]
        %v2248 = vld [vmem:[%s2246 + $0x8] sm:$0xff]
        %v2249 = vld [vmem:[%s2246 + $0x10] sm:$0xff]
        %v2250 = vld [vmem:[%s2246 + $0x18] sm:$0xff]
        %v2252 = vsel %vm1331, %v2226, 0
        %v2255 = vsel %vm1331, %v2227, 0
        %v2258 = vsel %vm1331, %v2228, 0
        %v2261 = vsel %vm1331, %v2229, 0
        %v2264 = vsel %vm1331, %v2230, 0
        %v2267 = vsel %vm1331, %v2231, 0
        %v2270 = vsel %vm1331, %v2232, 0
        %v2273 = vsel %vm1331, %v2233, 0
        %v2276 = vsel %vm1331, %v2234, 0
        %v2279 = vsel %vm1331, %v2235, 0
        %v2282 = vsel %vm1331, %v2236, 0
        %v2285 = vsel %vm1331, %v2237, 0
        %v2288 = vsel %vm1331, %v2238, 0
        %v2291 = vsel %vm1331, %v2239, 0
        %v2294 = vsel %vm1331, %v2240, 0
        %v2297 = vsel %vm1331, %v2241, 0
        %v2300 = vsel %vm1331, %v2242, 0
        %v2303 = vsel %vm1331, %v2243, 0
        %v2306 = vsel %vm1331, %v2244, 0
        %v2309 = vsel %vm1331, %v2245, 0
        %2311 = vmatpush.msra.mxu0 0.0
        %2312 = vmatpush.msra.mxu0 0.0
        %2313 = vmatpush.msra.mxu0 0.0
        %2314 = vmatpush.msra.mxu0 0.0
        %2315 = vmatpush.msra.mxu0 0.0
        %2316 = vmatpush.msra.mxu0 0.0
        %2317 = vmatpush.msra.mxu0 0.0
        %2318 = vmatpush.msra.mxu0 0.0
        %2319 = vmatpush.msra.mxu0 0.0
        %2320 = vmatpush.msra.mxu0 0.0
        %2321 = vmatpush.msra.mxu0 0.0
        %2322 = vmatpush.msra.mxu0 0.0
        %2323 = vmatpush.msra.mxu0 %v2250
        %2324 = vmatpush.msra.mxu0 %v2249
        %2325 = vmatpush.msra.mxu0 %v2248
        %2326 = vmatpush.msra.mxu0 %v2247
        %2327 = vmatmul.f32.gmra.mxu0 %v2252
        %v2328 = vpop.f32.mrf.mxu0
        %v2329 = vadd.f32 0.0, %v2328
        %2330 = vmatmul.f32.gmra.mxu0 %v2255
        %v2331 = vpop.f32.mrf.mxu0
        %v2332 = vadd.f32 0.0, %v2331
        %2333 = vmatmul.f32.gmra.mxu0 %v2258
        %v2334 = vpop.f32.mrf.mxu0
        %v2335 = vadd.f32 0.0, %v2334
        %2336 = vmatmul.f32.gmra.mxu0 %v2261
        %v2337 = vpop.f32.mrf.mxu0
        %v2338 = vadd.f32 0.0, %v2337
        %2339 = vmatmul.f32.gmra.mxu0 %v2264
        %v2340 = vpop.f32.mrf.mxu0
        %v2341 = vadd.f32 0.0, %v2340
        %2342 = vmatmul.f32.gmra.mxu0 %v2267
        %v2343 = vpop.f32.mrf.mxu0
        %v2344 = vadd.f32 0.0, %v2343
        %2345 = vmatmul.f32.gmra.mxu0 %v2270
        %v2346 = vpop.f32.mrf.mxu0
        %v2347 = vadd.f32 0.0, %v2346
        %2348 = vmatmul.f32.gmra.mxu0 %v2273
        %v2349 = vpop.f32.mrf.mxu0
        %v2350 = vadd.f32 0.0, %v2349
        %2351 = vmatmul.f32.gmra.mxu0 %v2276
        %v2352 = vpop.f32.mrf.mxu0
        %v2353 = vadd.f32 0.0, %v2352
        %2354 = vmatmul.f32.gmra.mxu0 %v2279
        %v2355 = vpop.f32.mrf.mxu0
        %v2356 = vadd.f32 0.0, %v2355
        %2357 = vmatmul.f32.gmra.mxu0 %v2282
        %v2358 = vpop.f32.mrf.mxu0
        %v2359 = vadd.f32 0.0, %v2358
        %2360 = vmatmul.f32.gmra.mxu0 %v2285
        %v2361 = vpop.f32.mrf.mxu0
        %v2362 = vadd.f32 0.0, %v2361
        %2363 = vmatmul.f32.gmra.mxu0 %v2288
        %v2364 = vpop.f32.mrf.mxu0
        %v2365 = vadd.f32 0.0, %v2364
        %2366 = vmatmul.f32.gmra.mxu0 %v2291
        %v2367 = vpop.f32.mrf.mxu0
        %v2368 = vadd.f32 0.0, %v2367
        %2369 = vmatmul.f32.gmra.mxu0 %v2294
        %v2370 = vpop.f32.mrf.mxu0
        %v2371 = vadd.f32 0.0, %v2370
        %2372 = vmatmul.f32.gmra.mxu0 %v2297
        %v2373 = vpop.f32.mrf.mxu0
        %v2374 = vadd.f32 0.0, %v2373
        %2375 = vmatmul.f32.gmra.mxu0 %v2300
        %v2376 = vpop.f32.mrf.mxu0
        %v2377 = vadd.f32 0.0, %v2376
        %2378 = vmatmul.f32.gmra.mxu0 %v2303
        %v2379 = vpop.f32.mrf.mxu0
        %v2380 = vadd.f32 0.0, %v2379
        %2381 = vmatmul.f32.gmra.mxu0 %v2306
        %v2382 = vpop.f32.mrf.mxu0
        %v2383 = vadd.f32 0.0, %v2382
        %2384 = vmatmul.f32.gmra.mxu0 %v2309
        %v2385 = vpop.f32.mrf.mxu0
        %v2386 = vadd.f32 0.0, %v2385
        %2387 = vdwg.mxu0
        %v2388 = vadd.f32 %v2206, %v2329
        %v2389 = vadd.f32 %v2207, %v2332
        %v2390 = vadd.f32 %v2208, %v2335
        %v2391 = vadd.f32 %v2209, %v2338
        %v2392 = vadd.f32 %v2210, %v2341
        %v2393 = vadd.f32 %v2211, %v2344
        %v2394 = vadd.f32 %v2212, %v2347
        %v2395 = vadd.f32 %v2213, %v2350
        %v2396 = vadd.f32 %v2214, %v2353
        %v2397 = vadd.f32 %v2215, %v2356
        %v2398 = vadd.f32 %v2216, %v2359
        %v2399 = vadd.f32 %v2217, %v2362
        %v2400 = vadd.f32 %v2218, %v2365
        %v2401 = vadd.f32 %v2219, %v2368
        %v2402 = vadd.f32 %v2220, %v2371
        %v2403 = vadd.f32 %v2221, %v2374
        %v2404 = vadd.f32 %v2222, %v2377
        %v2405 = vadd.f32 %v2223, %v2380
        %v2406 = vadd.f32 %v2224, %v2383
        %v2407 = vadd.f32 %v2225, %v2386
        %v2408 = vld [vmem:[#allocation2 + $0x20] sm:$0xff]
        %v2409 = vld [vmem:[#allocation2 + $0x28] sm:$0xff]
        %v2410 = vld [vmem:[#allocation2 + $0x30] sm:$0xff]
        %v2411 = vld [vmem:[#allocation2 + $0x38] sm:$0xff]
        %v2412 = vld [vmem:[#allocation2 + $0x40] sm:$0xff]
        %v2413 = vld [vmem:[#allocation2 + $0x48] sm:$0xff]
        %v2414 = vld [vmem:[#allocation2 + $0x50] sm:$0xff]
        %v2415 = vld [vmem:[#allocation2 + $0x58] sm:$0xff]
        %v2416 = vld [vmem:[#allocation2 + $0x60] sm:$0xff]
        %v2417 = vld [vmem:[#allocation2 + $0x68] sm:$0xff]
        %v2418 = vld [vmem:[#allocation2 + $0x70] sm:$0xff]
        %v2419 = vld [vmem:[#allocation2 + $0x78] sm:$0xff]
        %v2420 = vld [vmem:[#allocation2 + $0x80] sm:$0xff]
        %v2421 = vld [vmem:[#allocation2 + $0x88] sm:$0xff]
        %v2422 = vld [vmem:[#allocation2 + $0x90] sm:$0xff]
        %v2423 = vld [vmem:[#allocation2 + $0x98] sm:$0xff]
        %v2424 = vld [vmem:[#allocation2 + $0xa0] sm:$0xff]
        %v2425 = vld [vmem:[#allocation2 + $0xa8] sm:$0xff]
        %v2426 = vld [vmem:[#allocation2 + $0xb0] sm:$0xff]
        %v2427 = vld [vmem:[#allocation2 + $0xb8] sm:$0x3]
        %s2428 = scalar_lea.vmem %s3, 192
        %v2429 = vld [vmem:[%s2428] sm:$0xff]
        %v2430 = vld [vmem:[%s2428 + $0x8] sm:$0xff]
        %v2431 = vld [vmem:[%s2428 + $0x10] sm:$0xff]
        %v2432 = vld [vmem:[%s2428 + $0x18] sm:$0xff]
        %v2434 = vsel %vm1331, %v2408, 0
        %v2437 = vsel %vm1331, %v2409, 0
        %v2440 = vsel %vm1331, %v2410, 0
        %v2443 = vsel %vm1331, %v2411, 0
        %v2446 = vsel %vm1331, %v2412, 0
        %v2449 = vsel %vm1331, %v2413, 0
        %v2452 = vsel %vm1331, %v2414, 0
        %v2455 = vsel %vm1331, %v2415, 0
        %v2458 = vsel %vm1331, %v2416, 0
        %v2461 = vsel %vm1331, %v2417, 0
        %v2464 = vsel %vm1331, %v2418, 0
        %v2467 = vsel %vm1331, %v2419, 0
        %v2470 = vsel %vm1331, %v2420, 0
        %v2473 = vsel %vm1331, %v2421, 0
        %v2476 = vsel %vm1331, %v2422, 0
        %v2479 = vsel %vm1331, %v2423, 0
        %v2482 = vsel %vm1331, %v2424, 0
        %v2485 = vsel %vm1331, %v2425, 0
        %v2488 = vsel %vm1331, %v2426, 0
        %v2491 = vsel %vm1331, %v2427, 0
        %2493 = vmatpush.msra.mxu0 0.0
        %2494 = vmatpush.msra.mxu0 0.0
        %2495 = vmatpush.msra.mxu0 0.0
        %2496 = vmatpush.msra.mxu0 0.0
        %2497 = vmatpush.msra.mxu0 0.0
        %2498 = vmatpush.msra.mxu0 0.0
        %2499 = vmatpush.msra.mxu0 0.0
        %2500 = vmatpush.msra.mxu0 0.0
        %2501 = vmatpush.msra.mxu0 0.0
        %2502 = vmatpush.msra.mxu0 0.0
        %2503 = vmatpush.msra.mxu0 0.0
        %2504 = vmatpush.msra.mxu0 0.0
        %2505 = vmatpush.msra.mxu0 %v2432
        %2506 = vmatpush.msra.mxu0 %v2431
        %2507 = vmatpush.msra.mxu0 %v2430
        %2508 = vmatpush.msra.mxu0 %v2429
        %2509 = vmatmul.f32.gmra.mxu0 %v2434
        %v2510 = vpop.f32.mrf.mxu0
        %v2511 = vadd.f32 0.0, %v2510
        %2512 = vmatmul.f32.gmra.mxu0 %v2437
        %v2513 = vpop.f32.mrf.mxu0
        %v2514 = vadd.f32 0.0, %v2513
        %2515 = vmatmul.f32.gmra.mxu0 %v2440
        %v2516 = vpop.f32.mrf.mxu0
        %v2517 = vadd.f32 0.0, %v2516
        %2518 = vmatmul.f32.gmra.mxu0 %v2443
        %v2519 = vpop.f32.mrf.mxu0
        %v2520 = vadd.f32 0.0, %v2519
        %2521 = vmatmul.f32.gmra.mxu0 %v2446
        %v2522 = vpop.f32.mrf.mxu0
        %v2523 = vadd.f32 0.0, %v2522
        %2524 = vmatmul.f32.gmra.mxu0 %v2449
        %v2525 = vpop.f32.mrf.mxu0
        %v2526 = vadd.f32 0.0, %v2525
        %2527 = vmatmul.f32.gmra.mxu0 %v2452
        %v2528 = vpop.f32.mrf.mxu0
        %v2529 = vadd.f32 0.0, %v2528
        %2530 = vmatmul.f32.gmra.mxu0 %v2455
        %v2531 = vpop.f32.mrf.mxu0
        %v2532 = vadd.f32 0.0, %v2531
        %2533 = vmatmul.f32.gmra.mxu0 %v2458
        %v2534 = vpop.f32.mrf.mxu0
        %v2535 = vadd.f32 0.0, %v2534
        %2536 = vmatmul.f32.gmra.mxu0 %v2461
        %v2537 = vpop.f32.mrf.mxu0
        %v2538 = vadd.f32 0.0, %v2537
        %2539 = vmatmul.f32.gmra.mxu0 %v2464
        %v2540 = vpop.f32.mrf.mxu0
        %v2541 = vadd.f32 0.0, %v2540
        %2542 = vmatmul.f32.gmra.mxu0 %v2467
        %v2543 = vpop.f32.mrf.mxu0
        %v2544 = vadd.f32 0.0, %v2543
        %2545 = vmatmul.f32.gmra.mxu0 %v2470
        %v2546 = vpop.f32.mrf.mxu0
        %v2547 = vadd.f32 0.0, %v2546
        %2548 = vmatmul.f32.gmra.mxu0 %v2473
        %v2549 = vpop.f32.mrf.mxu0
        %v2550 = vadd.f32 0.0, %v2549
        %2551 = vmatmul.f32.gmra.mxu0 %v2476
        %v2552 = vpop.f32.mrf.mxu0
        %v2553 = vadd.f32 0.0, %v2552
        %2554 = vmatmul.f32.gmra.mxu0 %v2479
        %v2555 = vpop.f32.mrf.mxu0
        %v2556 = vadd.f32 0.0, %v2555
        %2557 = vmatmul.f32.gmra.mxu0 %v2482
        %v2558 = vpop.f32.mrf.mxu0
        %v2559 = vadd.f32 0.0, %v2558
        %2560 = vmatmul.f32.gmra.mxu0 %v2485
        %v2561 = vpop.f32.mrf.mxu0
        %v2562 = vadd.f32 0.0, %v2561
        %2563 = vmatmul.f32.gmra.mxu0 %v2488
        %v2564 = vpop.f32.mrf.mxu0
        %v2565 = vadd.f32 0.0, %v2564
        %2566 = vmatmul.f32.gmra.mxu0 %v2491
        %v2567 = vpop.f32.mrf.mxu0
        %v2568 = vadd.f32 0.0, %v2567
        %2569 = vdwg.mxu0
        %v2570 = vadd.f32 %v2388, %v2511
        %v2571 = vadd.f32 %v2389, %v2514
        %v2572 = vadd.f32 %v2390, %v2517
        %v2573 = vadd.f32 %v2391, %v2520
        %v2574 = vadd.f32 %v2392, %v2523
        %v2575 = vadd.f32 %v2393, %v2526
        %v2576 = vadd.f32 %v2394, %v2529
        %v2577 = vadd.f32 %v2395, %v2532
        %v2578 = vadd.f32 %v2396, %v2535
        %v2579 = vadd.f32 %v2397, %v2538
        %v2580 = vadd.f32 %v2398, %v2541
        %v2581 = vadd.f32 %v2399, %v2544
        %v2582 = vadd.f32 %v2400, %v2547
        %v2583 = vadd.f32 %v2401, %v2550
        %v2584 = vadd.f32 %v2402, %v2553
        %v2585 = vadd.f32 %v2403, %v2556
        %v2586 = vadd.f32 %v2404, %v2559
        %v2587 = vadd.f32 %v2405, %v2562
        %v2588 = vadd.f32 %v2406, %v2565
        %v2589 = vadd.f32 %v2407, %v2568
        %v2590 = vld [vmem:[#allocation2 + $0x21] sm:$0xff]
        %v2591 = vld [vmem:[#allocation2 + $0x29] sm:$0xff]
        %v2592 = vld [vmem:[#allocation2 + $0x31] sm:$0xff]
        %v2593 = vld [vmem:[#allocation2 + $0x39] sm:$0xff]
        %v2594 = vld [vmem:[#allocation2 + $0x41] sm:$0xff]
        %v2595 = vld [vmem:[#allocation2 + $0x49] sm:$0xff]
        %v2596 = vld [vmem:[#allocation2 + $0x51] sm:$0xff]
        %v2597 = vld [vmem:[#allocation2 + $0x59] sm:$0xff]
        %v2598 = vld [vmem:[#allocation2 + $0x61] sm:$0xff]
        %v2599 = vld [vmem:[#allocation2 + $0x69] sm:$0xff]
        %v2600 = vld [vmem:[#allocation2 + $0x71] sm:$0xff]
        %v2601 = vld [vmem:[#allocation2 + $0x79] sm:$0xff]
        %v2602 = vld [vmem:[#allocation2 + $0x81] sm:$0xff]
        %v2603 = vld [vmem:[#allocation2 + $0x89] sm:$0xff]
        %v2604 = vld [vmem:[#allocation2 + $0x91] sm:$0xff]
        %v2605 = vld [vmem:[#allocation2 + $0x99] sm:$0xff]
        %v2606 = vld [vmem:[#allocation2 + $0xa1] sm:$0xff]
        %v2607 = vld [vmem:[#allocation2 + $0xa9] sm:$0xff]
        %v2608 = vld [vmem:[#allocation2 + $0xb1] sm:$0xff]
        %v2609 = vld [vmem:[#allocation2 + $0xb9] sm:$0x3]
        %s2610 = scalar_lea.vmem %s3, 224
        %v2611 = vld [vmem:[%s2610] sm:$0xff]
        %v2612 = vld [vmem:[%s2610 + $0x8] sm:$0xff]
        %v2613 = vld [vmem:[%s2610 + $0x10] sm:$0xff]
        %v2614 = vld [vmem:[%s2610 + $0x18] sm:$0xff]
        %v2616 = vsel %vm1331, %v2590, 0
        %v2619 = vsel %vm1331, %v2591, 0
        %v2622 = vsel %vm1331, %v2592, 0
        %v2625 = vsel %vm1331, %v2593, 0
        %v2628 = vsel %vm1331, %v2594, 0
        %v2631 = vsel %vm1331, %v2595, 0
        %v2634 = vsel %vm1331, %v2596, 0
        %v2637 = vsel %vm1331, %v2597, 0
        %v2640 = vsel %vm1331, %v2598, 0
        %v2643 = vsel %vm1331, %v2599, 0
        %v2646 = vsel %vm1331, %v2600, 0
        %v2649 = vsel %vm1331, %v2601, 0
        %v2652 = vsel %vm1331, %v2602, 0
        %v2655 = vsel %vm1331, %v2603, 0
        %v2658 = vsel %vm1331, %v2604, 0
        %v2661 = vsel %vm1331, %v2605, 0
        %v2664 = vsel %vm1331, %v2606, 0
        %v2667 = vsel %vm1331, %v2607, 0
        %v2670 = vsel %vm1331, %v2608, 0
        %v2673 = vsel %vm1331, %v2609, 0
        %2675 = vmatpush.msra.mxu0 0.0
        %2676 = vmatpush.msra.mxu0 0.0
        %2677 = vmatpush.msra.mxu0 0.0
        %2678 = vmatpush.msra.mxu0 0.0
        %2679 = vmatpush.msra.mxu0 0.0
        %2680 = vmatpush.msra.mxu0 0.0
        %2681 = vmatpush.msra.mxu0 0.0
        %2682 = vmatpush.msra.mxu0 0.0
        %2683 = vmatpush.msra.mxu0 0.0
        %2684 = vmatpush.msra.mxu0 0.0
        %2685 = vmatpush.msra.mxu0 0.0
        %2686 = vmatpush.msra.mxu0 0.0
        %2687 = vmatpush.msra.mxu0 %v2614
        %2688 = vmatpush.msra.mxu0 %v2613
        %2689 = vmatpush.msra.mxu0 %v2612
        %2690 = vmatpush.msra.mxu0 %v2611
        %2691 = vmatmul.f32.gmra.mxu0 %v2616
        %v2692 = vpop.f32.mrf.mxu0
        %v2693 = vadd.f32 0.0, %v2692
        %2694 = vmatmul.f32.gmra.mxu0 %v2619
        %v2695 = vpop.f32.mrf.mxu0
        %v2696 = vadd.f32 0.0, %v2695
        %2697 = vmatmul.f32.gmra.mxu0 %v2622
        %v2698 = vpop.f32.mrf.mxu0
        %v2699 = vadd.f32 0.0, %v2698
        %2700 = vmatmul.f32.gmra.mxu0 %v2625
        %v2701 = vpop.f32.mrf.mxu0
        %v2702 = vadd.f32 0.0, %v2701
        %2703 = vmatmul.f32.gmra.mxu0 %v2628
        %v2704 = vpop.f32.mrf.mxu0
        %v2705 = vadd.f32 0.0, %v2704
        %2706 = vmatmul.f32.gmra.mxu0 %v2631
        %v2707 = vpop.f32.mrf.mxu0
        %v2708 = vadd.f32 0.0, %v2707
        %2709 = vmatmul.f32.gmra.mxu0 %v2634
        %v2710 = vpop.f32.mrf.mxu0
        %v2711 = vadd.f32 0.0, %v2710
        %2712 = vmatmul.f32.gmra.mxu0 %v2637
        %v2713 = vpop.f32.mrf.mxu0
        %v2714 = vadd.f32 0.0, %v2713
        %2715 = vmatmul.f32.gmra.mxu0 %v2640
        %v2716 = vpop.f32.mrf.mxu0
        %v2717 = vadd.f32 0.0, %v2716
        %2718 = vmatmul.f32.gmra.mxu0 %v2643
        %v2719 = vpop.f32.mrf.mxu0
        %v2720 = vadd.f32 0.0, %v2719
        %2721 = vmatmul.f32.gmra.mxu0 %v2646
        %v2722 = vpop.f32.mrf.mxu0
        %v2723 = vadd.f32 0.0, %v2722
        %2724 = vmatmul.f32.gmra.mxu0 %v2649
        %v2725 = vpop.f32.mrf.mxu0
        %v2726 = vadd.f32 0.0, %v2725
        %2727 = vmatmul.f32.gmra.mxu0 %v2652
        %v2728 = vpop.f32.mrf.mxu0
        %v2729 = vadd.f32 0.0, %v2728
        %2730 = vmatmul.f32.gmra.mxu0 %v2655
        %v2731 = vpop.f32.mrf.mxu0
        %v2732 = vadd.f32 0.0, %v2731
        %2733 = vmatmul.f32.gmra.mxu0 %v2658
        %v2734 = vpop.f32.mrf.mxu0
        %v2735 = vadd.f32 0.0, %v2734
        %2736 = vmatmul.f32.gmra.mxu0 %v2661
        %v2737 = vpop.f32.mrf.mxu0
        %v2738 = vadd.f32 0.0, %v2737
        %2739 = vmatmul.f32.gmra.mxu0 %v2664
        %v2740 = vpop.f32.mrf.mxu0
        %v2741 = vadd.f32 0.0, %v2740
        %2742 = vmatmul.f32.gmra.mxu0 %v2667
        %v2743 = vpop.f32.mrf.mxu0
        %v2744 = vadd.f32 0.0, %v2743
        %2745 = vmatmul.f32.gmra.mxu0 %v2670
        %v2746 = vpop.f32.mrf.mxu0
        %v2747 = vadd.f32 0.0, %v2746
        %2748 = vmatmul.f32.gmra.mxu0 %v2673
        %v2749 = vpop.f32.mrf.mxu0
        %v2750 = vadd.f32 0.0, %v2749
        %2751 = vdwg.mxu0
        %v2752 = vadd.f32 %v2570, %v2693
        %v2753 = vadd.f32 %v2571, %v2696
        %v2754 = vadd.f32 %v2572, %v2699
        %v2755 = vadd.f32 %v2573, %v2702
        %v2756 = vadd.f32 %v2574, %v2705
        %v2757 = vadd.f32 %v2575, %v2708
        %v2758 = vadd.f32 %v2576, %v2711
        %v2759 = vadd.f32 %v2577, %v2714
        %v2760 = vadd.f32 %v2578, %v2717
        %v2761 = vadd.f32 %v2579, %v2720
        %v2762 = vadd.f32 %v2580, %v2723
        %v2763 = vadd.f32 %v2581, %v2726
        %v2764 = vadd.f32 %v2582, %v2729
        %v2765 = vadd.f32 %v2583, %v2732
        %v2766 = vadd.f32 %v2584, %v2735
        %v2767 = vadd.f32 %v2585, %v2738
        %v2768 = vadd.f32 %v2586, %v2741
        %v2769 = vadd.f32 %v2587, %v2744
        %v2770 = vadd.f32 %v2588, %v2747
        %v2771 = vadd.f32 %v2589, %v2750
        %v2772 = vld [vmem:[#allocation2 + $0x22] sm:$0xff]
        %v2773 = vld [vmem:[#allocation2 + $0x2a] sm:$0xff]
        %v2774 = vld [vmem:[#allocation2 + $0x32] sm:$0xff]
        %v2775 = vld [vmem:[#allocation2 + $0x3a] sm:$0xff]
        %v2776 = vld [vmem:[#allocation2 + $0x42] sm:$0xff]
        %v2777 = vld [vmem:[#allocation2 + $0x4a] sm:$0xff]
        %v2778 = vld [vmem:[#allocation2 + $0x52] sm:$0xff]
        %v2779 = vld [vmem:[#allocation2 + $0x5a] sm:$0xff]
        %v2780 = vld [vmem:[#allocation2 + $0x62] sm:$0xff]
        %v2781 = vld [vmem:[#allocation2 + $0x6a] sm:$0xff]
        %v2782 = vld [vmem:[#allocation2 + $0x72] sm:$0xff]
        %v2783 = vld [vmem:[#allocation2 + $0x7a] sm:$0xff]
        %v2784 = vld [vmem:[#allocation2 + $0x82] sm:$0xff]
        %v2785 = vld [vmem:[#allocation2 + $0x8a] sm:$0xff]
        %v2786 = vld [vmem:[#allocation2 + $0x92] sm:$0xff]
        %v2787 = vld [vmem:[#allocation2 + $0x9a] sm:$0xff]
        %v2788 = vld [vmem:[#allocation2 + $0xa2] sm:$0xff]
        %v2789 = vld [vmem:[#allocation2 + $0xaa] sm:$0xff]
        %v2790 = vld [vmem:[#allocation2 + $0xb2] sm:$0xff]
        %v2791 = vld [vmem:[#allocation2 + $0xba] sm:$0x3]
        %s2792 = scalar_lea.vmem %s3, 256
        %v2793 = vld [vmem:[%s2792] sm:$0xff]
        %v2794 = vld [vmem:[%s2792 + $0x8] sm:$0xff]
        %v2795 = vld [vmem:[%s2792 + $0x10] sm:$0xff]
        %v2796 = vld [vmem:[%s2792 + $0x18] sm:$0xff]
        %v2798 = vsel %vm1331, %v2772, 0
        %v2801 = vsel %vm1331, %v2773, 0
        %v2804 = vsel %vm1331, %v2774, 0
        %v2807 = vsel %vm1331, %v2775, 0
        %v2810 = vsel %vm1331, %v2776, 0
        %v2813 = vsel %vm1331, %v2777, 0
        %v2816 = vsel %vm1331, %v2778, 0
        %v2819 = vsel %vm1331, %v2779, 0
        %v2822 = vsel %vm1331, %v2780, 0
        %v2825 = vsel %vm1331, %v2781, 0
        %v2828 = vsel %vm1331, %v2782, 0
        %v2831 = vsel %vm1331, %v2783, 0
        %v2834 = vsel %vm1331, %v2784, 0
        %v2837 = vsel %vm1331, %v2785, 0
        %v2840 = vsel %vm1331, %v2786, 0
        %v2843 = vsel %vm1331, %v2787, 0
        %v2846 = vsel %vm1331, %v2788, 0
        %v2849 = vsel %vm1331, %v2789, 0
        %v2852 = vsel %vm1331, %v2790, 0
        %v2855 = vsel %vm1331, %v2791, 0
        %2857 = vmatpush.msra.mxu0 0.0
        %2858 = vmatpush.msra.mxu0 0.0
        %2859 = vmatpush.msra.mxu0 0.0
        %2860 = vmatpush.msra.mxu0 0.0
        %2861 = vmatpush.msra.mxu0 0.0
        %2862 = vmatpush.msra.mxu0 0.0
        %2863 = vmatpush.msra.mxu0 0.0
        %2864 = vmatpush.msra.mxu0 0.0
        %2865 = vmatpush.msra.mxu0 0.0
        %2866 = vmatpush.msra.mxu0 0.0
        %2867 = vmatpush.msra.mxu0 0.0
        %2868 = vmatpush.msra.mxu0 0.0
        %2869 = vmatpush.msra.mxu0 %v2796
        %2870 = vmatpush.msra.mxu0 %v2795
        %2871 = vmatpush.msra.mxu0 %v2794
        %2872 = vmatpush.msra.mxu0 %v2793
        %2873 = vmatmul.f32.gmra.mxu0 %v2798
        %v2874 = vpop.f32.mrf.mxu0
        %v2875 = vadd.f32 0.0, %v2874
        %2876 = vmatmul.f32.gmra.mxu0 %v2801
        %v2877 = vpop.f32.mrf.mxu0
        %v2878 = vadd.f32 0.0, %v2877
        %2879 = vmatmul.f32.gmra.mxu0 %v2804
        %v2880 = vpop.f32.mrf.mxu0
        %v2881 = vadd.f32 0.0, %v2880
        %2882 = vmatmul.f32.gmra.mxu0 %v2807
        %v2883 = vpop.f32.mrf.mxu0
        %v2884 = vadd.f32 0.0, %v2883
        %2885 = vmatmul.f32.gmra.mxu0 %v2810
        %v2886 = vpop.f32.mrf.mxu0
        %v2887 = vadd.f32 0.0, %v2886
        %2888 = vmatmul.f32.gmra.mxu0 %v2813
        %v2889 = vpop.f32.mrf.mxu0
        %v2890 = vadd.f32 0.0, %v2889
        %2891 = vmatmul.f32.gmra.mxu0 %v2816
        %v2892 = vpop.f32.mrf.mxu0
        %v2893 = vadd.f32 0.0, %v2892
        %2894 = vmatmul.f32.gmra.mxu0 %v2819
        %v2895 = vpop.f32.mrf.mxu0
        %v2896 = vadd.f32 0.0, %v2895
        %2897 = vmatmul.f32.gmra.mxu0 %v2822
        %v2898 = vpop.f32.mrf.mxu0
        %v2899 = vadd.f32 0.0, %v2898
        %2900 = vmatmul.f32.gmra.mxu0 %v2825
        %v2901 = vpop.f32.mrf.mxu0
        %v2902 = vadd.f32 0.0, %v2901
        %2903 = vmatmul.f32.gmra.mxu0 %v2828
        %v2904 = vpop.f32.mrf.mxu0
        %v2905 = vadd.f32 0.0, %v2904
        %2906 = vmatmul.f32.gmra.mxu0 %v2831
        %v2907 = vpop.f32.mrf.mxu0
        %v2908 = vadd.f32 0.0, %v2907
        %2909 = vmatmul.f32.gmra.mxu0 %v2834
        %v2910 = vpop.f32.mrf.mxu0
        %v2911 = vadd.f32 0.0, %v2910
        %2912 = vmatmul.f32.gmra.mxu0 %v2837
        %v2913 = vpop.f32.mrf.mxu0
        %v2914 = vadd.f32 0.0, %v2913
        %2915 = vmatmul.f32.gmra.mxu0 %v2840
        %v2916 = vpop.f32.mrf.mxu0
        %v2917 = vadd.f32 0.0, %v2916
        %2918 = vmatmul.f32.gmra.mxu0 %v2843
        %v2919 = vpop.f32.mrf.mxu0
        %v2920 = vadd.f32 0.0, %v2919
        %2921 = vmatmul.f32.gmra.mxu0 %v2846
        %v2922 = vpop.f32.mrf.mxu0
        %v2923 = vadd.f32 0.0, %v2922
        %2924 = vmatmul.f32.gmra.mxu0 %v2849
        %v2925 = vpop.f32.mrf.mxu0
        %v2926 = vadd.f32 0.0, %v2925
        %2927 = vmatmul.f32.gmra.mxu0 %v2852
        %v2928 = vpop.f32.mrf.mxu0
        %v2929 = vadd.f32 0.0, %v2928
        %2930 = vmatmul.f32.gmra.mxu0 %v2855
        %v2931 = vpop.f32.mrf.mxu0
        %v2932 = vadd.f32 0.0, %v2931
        %2933 = vdwg.mxu0
        %v2934 = vadd.f32 %v2752, %v2875
        %v2935 = vadd.f32 %v2753, %v2878
        %v2936 = vadd.f32 %v2754, %v2881
        %v2937 = vadd.f32 %v2755, %v2884
        %v2938 = vadd.f32 %v2756, %v2887
        %v2939 = vadd.f32 %v2757, %v2890
        %v2940 = vadd.f32 %v2758, %v2893
        %v2941 = vadd.f32 %v2759, %v2896
        %v2942 = vadd.f32 %v2760, %v2899
        %v2943 = vadd.f32 %v2761, %v2902
        %v2944 = vadd.f32 %v2762, %v2905
        %v2945 = vadd.f32 %v2763, %v2908
        %v2946 = vadd.f32 %v2764, %v2911
        %v2947 = vadd.f32 %v2765, %v2914
        %v2948 = vadd.f32 %v2766, %v2917
        %v2949 = vadd.f32 %v2767, %v2920
        %v2950 = vadd.f32 %v2768, %v2923
        %v2951 = vadd.f32 %v2769, %v2926
        %v2952 = vadd.f32 %v2770, %v2929
        %v2953 = vadd.f32 %v2771, %v2932
        %v2954 = vld [vmem:[%s4] sm:$0x1]
        %v2956 = vperm.slane %v2954, 0
        %v2958 = vadd.f32 %v2934, %v2956
        %v2959 = vadd.f32 %v2935, %v2956
        %v2960 = vadd.f32 %v2936, %v2956
        %v2961 = vadd.f32 %v2937, %v2956
        %v2962 = vadd.f32 %v2938, %v2956
        %v2963 = vadd.f32 %v2939, %v2956
        %v2964 = vadd.f32 %v2940, %v2956
        %v2965 = vadd.f32 %v2941, %v2956
        %v2966 = vadd.f32 %v2942, %v2956
        %v2967 = vadd.f32 %v2943, %v2956
        %v2968 = vadd.f32 %v2944, %v2956
        %v2969 = vadd.f32 %v2945, %v2956
        %v2970 = vadd.f32 %v2946, %v2956
        %v2971 = vadd.f32 %v2947, %v2956
        %v2972 = vadd.f32 %v2948, %v2956
        %v2973 = vadd.f32 %v2949, %v2956
        %v2974 = vadd.f32 %v2950, %v2956
        %v2975 = vadd.f32 %v2951, %v2956
        %v2976 = vadd.f32 %v2952, %v2956
        %v2977 = vadd.f32 %v2953, %v2956
        %v2978 = vmax.f32 %v2958, 0.0
        %v2979 = vmax.f32 %v2959, 0.0
        %v2980 = vmax.f32 %v2960, 0.0
        %v2981 = vmax.f32 %v2961, 0.0
        %v2982 = vmax.f32 %v2962, 0.0
        %v2983 = vmax.f32 %v2963, 0.0
        %v2984 = vmax.f32 %v2964, 0.0
        %v2985 = vmax.f32 %v2965, 0.0
        %v2986 = vmax.f32 %v2966, 0.0
        %v2987 = vmax.f32 %v2967, 0.0
        %v2988 = vmax.f32 %v2968, 0.0
        %v2989 = vmax.f32 %v2969, 0.0
        %v2990 = vmax.f32 %v2970, 0.0
        %v2991 = vmax.f32 %v2971, 0.0
        %v2992 = vmax.f32 %v2972, 0.0
        %v2993 = vmax.f32 %v2973, 0.0
        %v2994 = vmax.f32 %v2974, 0.0
        %v2995 = vmax.f32 %v2975, 0.0
        %v2996 = vmax.f32 %v2976, 0.0
        %v2997 = vmax.f32 %v2977, 0.0
        %vm2998 = vcmask 130048
        %2999 = vst.msk [vmem:[#allocation3] sm:$0xff] %vm2998, %v2978
        %3000 = vst.msk [vmem:[#allocation3 + $0x8] sm:$0xff] %vm2998, %v2979
        %3001 = vst.msk [vmem:[#allocation3 + $0x10] sm:$0xff] %vm2998, %v2980
        %3002 = vst.msk [vmem:[#allocation3 + $0x18] sm:$0xff] %vm2998, %v2981
        %3003 = vst.msk [vmem:[#allocation3 + $0x20] sm:$0xff] %vm2998, %v2982
        %3004 = vst.msk [vmem:[#allocation3 + $0x28] sm:$0xff] %vm2998, %v2983
        %3005 = vst.msk [vmem:[#allocation3 + $0x30] sm:$0xff] %vm2998, %v2984
        %3006 = vst.msk [vmem:[#allocation3 + $0x38] sm:$0xff] %vm2998, %v2985
        %3007 = vst.msk [vmem:[#allocation3 + $0x40] sm:$0xff] %vm2998, %v2986
        %3008 = vst.msk [vmem:[#allocation3 + $0x48] sm:$0xff] %vm2998, %v2987
        %3009 = vst.msk [vmem:[#allocation3 + $0x50] sm:$0xff] %vm2998, %v2988
        %3010 = vst.msk [vmem:[#allocation3 + $0x58] sm:$0xff] %vm2998, %v2989
        %3011 = vst.msk [vmem:[#allocation3 + $0x60] sm:$0xff] %vm2998, %v2990
        %3012 = vst.msk [vmem:[#allocation3 + $0x68] sm:$0xff] %vm2998, %v2991
        %3013 = vst.msk [vmem:[#allocation3 + $0x70] sm:$0xff] %vm2998, %v2992
        %3014 = vst.msk [vmem:[#allocation3 + $0x78] sm:$0xff] %vm2998, %v2993
        %3015 = vst.msk [vmem:[#allocation3 + $0x80] sm:$0xff] %vm2998, %v2994
        %3016 = vst.msk [vmem:[#allocation3 + $0x88] sm:$0xff] %vm2998, %v2995
        %3017 = vst.msk [vmem:[#allocation3 + $0x90] sm:$0xff] %vm2998, %v2996
        %vm3018 = vcmask 123904
        %3019 = vst.msk [vmem:[#allocation3 + $0x98] sm:$0x3] %vm3018, %v2997
        %v3020 = vld [vmem:[#allocation3] sm:$0xff]
        %v3021 = vld [vmem:[#allocation3 + $0x8] sm:$0xff]
        %v3022 = vld [vmem:[#allocation3 + $0x10] sm:$0xff]
        %v3023 = vld [vmem:[#allocation3 + $0x18] sm:$0xff]
        %v3024 = vld [vmem:[#allocation3 + $0x20] sm:$0xff]
        %v3025 = vld [vmem:[#allocation3 + $0x28] sm:$0xff]
        %v3026 = vld [vmem:[#allocation3 + $0x30] sm:$0xff]
        %v3027 = vld [vmem:[#allocation3 + $0x38] sm:$0xff]
        %v3028 = vld [vmem:[#allocation3 + $0x40] sm:$0xff]
        %v3029 = vld [vmem:[#allocation3 + $0x48] sm:$0xff]
        %v3030 = vld [vmem:[#allocation3 + $0x50] sm:$0xff]
        %v3031 = vld [vmem:[#allocation3 + $0x58] sm:$0xff]
        %v3032 = vld [vmem:[#allocation3 + $0x60] sm:$0xff]
        %v3033 = vld [vmem:[#allocation3 + $0x68] sm:$0xff]
        %v3034 = vld [vmem:[#allocation3 + $0x70] sm:$0xff]
        %v3035 = vld [vmem:[#allocation3 + $0x78] sm:$0xff]
        %v3036 = vld [vmem:[#allocation3 + $0x80] sm:$0xff]
        %v3037 = vld [vmem:[#allocation3 + $0x88] sm:$0x1]
        %v3038 = vld [vmem:[#allocation3 + $0x1] sm:$0xff]
        %v3039 = vld [vmem:[#allocation3 + $0x9] sm:$0xff]
        %v3040 = vld [vmem:[#allocation3 + $0x11] sm:$0xff]
        %v3041 = vld [vmem:[#allocation3 + $0x19] sm:$0xff]
        %v3042 = vld [vmem:[#allocation3 + $0x21] sm:$0xff]
        %v3043 = vld [vmem:[#allocation3 + $0x29] sm:$0xff]
        %v3044 = vld [vmem:[#allocation3 + $0x31] sm:$0xff]
        %v3045 = vld [vmem:[#allocation3 + $0x39] sm:$0xff]
        %v3046 = vld [vmem:[#allocation3 + $0x41] sm:$0xff]
        %v3047 = vld [vmem:[#allocation3 + $0x49] sm:$0xff]
        %v3048 = vld [vmem:[#allocation3 + $0x51] sm:$0xff]
        %v3049 = vld [vmem:[#allocation3 + $0x59] sm:$0xff]
        %v3050 = vld [vmem:[#allocation3 + $0x61] sm:$0xff]
        %v3051 = vld [vmem:[#allocation3 + $0x69] sm:$0xff]
        %v3052 = vld [vmem:[#allocation3 + $0x71] sm:$0xff]
        %v3053 = vld [vmem:[#allocation3 + $0x79] sm:$0xff]
        %v3054 = vld [vmem:[#allocation3 + $0x81] sm:$0xff]
        %v3055 = vld [vmem:[#allocation3 + $0x89] sm:$0x1]
        %v3056 = vmax.f32 %v3020, %v3038
        %v3057 = vmax.f32 %v3021, %v3039
        %v3058 = vmax.f32 %v3022, %v3040
        %v3059 = vmax.f32 %v3023, %v3041
        %v3060 = vmax.f32 %v3024, %v3042
        %v3061 = vmax.f32 %v3025, %v3043
        %v3062 = vmax.f32 %v3026, %v3044
        %v3063 = vmax.f32 %v3027, %v3045
        %v3064 = vmax.f32 %v3028, %v3046
        %v3065 = vmax.f32 %v3029, %v3047
        %v3066 = vmax.f32 %v3030, %v3048
        %v3067 = vmax.f32 %v3031, %v3049
        %v3068 = vmax.f32 %v3032, %v3050
        %v3069 = vmax.f32 %v3033, %v3051
        %v3070 = vmax.f32 %v3034, %v3052
        %v3071 = vmax.f32 %v3035, %v3053
        %v3072 = vmax.f32 %v3036, %v3054
        %v3073 = vmax.f32 %v3037, %v3055
        %v3074 = vld [vmem:[#allocation3 + $0x88] sm:$0xff]
        %v3075 = vld [vmem:[#allocation3 + $0x90] sm:$0xff]
        %v3076 = vld [vmem:[#allocation3 + $0x98] sm:$0x1]
        %v3077 = vld [vmem:[#allocation3 + $0x89] sm:$0xff]
        %v3078 = vld [vmem:[#allocation3 + $0x91] sm:$0xff]
        %v3079 = vld [vmem:[#allocation3 + $0x99] sm:$0x1]
        %v3080 = vmax.f32 %v3074, %v3077
        %v3081 = vmax.f32 %v3075, %v3078
        %v3082 = vmax.f32 %v3076, %v3079
        %v3083 = vmax.f32 %v3056, %v3058
        %v3084 = vmax.f32 %v3057, %v3059
        %v3085 = vmax.f32 %v3058, %v3060
        %v3086 = vmax.f32 %v3059, %v3061
        %v3087 = vmax.f32 %v3060, %v3062
        %v3088 = vmax.f32 %v3061, %v3063
        %v3089 = vmax.f32 %v3062, %v3064
        %v3090 = vmax.f32 %v3063, %v3065
        %v3091 = vmax.f32 %v3064, %v3066
        %v3092 = vmax.f32 %v3065, %v3067
        %v3093 = vmax.f32 %v3066, %v3068
        %v3094 = vmax.f32 %v3067, %v3069
        %v3095 = vmax.f32 %v3068, %v3070
        %v3096 = vmax.f32 %v3069, %v3071
        %v3097 = vmax.f32 %v3070, %v3072
        %v3098 = vmax.f32 %v3071, %v3080
        %v3099 = vmax.f32 %v3072, %v3081
        %v3100 = vmax.f32 %v3073, %v3082
        %3101 = vst.msk [vmem:[#allocation4] sm:$0xff] %vm2998, %v3083
        %3102 = vst.msk [vmem:[#allocation4 + $0x8] sm:$0xff] %vm2998, %v3084
        %3103 = vst.msk [vmem:[#allocation4 + $0x10] sm:$0xff] %vm2998, %v3085
        %3104 = vst.msk [vmem:[#allocation4 + $0x18] sm:$0xff] %vm2998, %v3086
        %3105 = vst.msk [vmem:[#allocation4 + $0x20] sm:$0xff] %vm2998, %v3087
        %3106 = vst.msk [vmem:[#allocation4 + $0x28] sm:$0xff] %vm2998, %v3088
        %3107 = vst.msk [vmem:[#allocation4 + $0x30] sm:$0xff] %vm2998, %v3089
        %3108 = vst.msk [vmem:[#allocation4 + $0x38] sm:$0xff] %vm2998, %v3090
        %3109 = vst.msk [vmem:[#allocation4 + $0x40] sm:$0xff] %vm2998, %v3091
        %3110 = vst.msk [vmem:[#allocation4 + $0x48] sm:$0xff] %vm2998, %v3092
        %3111 = vst.msk [vmem:[#allocation4 + $0x50] sm:$0xff] %vm2998, %v3093
        %3112 = vst.msk [vmem:[#allocation4 + $0x58] sm:$0xff] %vm2998, %v3094
        %3113 = vst.msk [vmem:[#allocation4 + $0x60] sm:$0xff] %vm2998, %v3095
        %3114 = vst.msk [vmem:[#allocation4 + $0x68] sm:$0xff] %vm2998, %v3096
        %3115 = vst.msk [vmem:[#allocation4 + $0x70] sm:$0xff] %vm2998, %v3097
        %3116 = vst.msk [vmem:[#allocation4 + $0x78] sm:$0xff] %vm2998, %v3098
        %3117 = vst.msk [vmem:[#allocation4 + $0x80] sm:$0xff] %vm2998, %v3099
        %vm3118 = vcmask 122880
        %3119 = vst.msk [vmem:[#allocation4 + $0x88] sm:$0x1] %vm3118, %v3100
        %v3120 = vld [vmem:[#allocation4] sm:$0x1]
        %v3121 = vld [vmem:[%s5] sm:$0xff]
        %v3122 = vld [vmem:[%s5 + $0x8] sm:$0xff]
        %v3123 = vld [vmem:[#allocation4 + $0x2] sm:$0x1]
        %s3124 = scalar_lea.vmem %s5, 16
        %v3125 = vld [vmem:[%s3124] sm:$0xff]
        %v3126 = vld [vmem:[%s3124 + $0x8] sm:$0xff]
        %v3128 = vsel %vm2998, %v3123, 0
        %3130 = vmatpush.msra.mxu0 0.0
        %3131 = vmatpush.msra.mxu0 0.0
        %3132 = vmatpush.msra.mxu0 0.0
        %3133 = vmatpush.msra.mxu0 0.0
        %3134 = vmatpush.msra.mxu0 0.0
        %3135 = vmatpush.msra.mxu0 0.0
        %3136 = vmatpush.msra.mxu0 0.0
        %3137 = vmatpush.msra.mxu0 0.0
        %3138 = vmatpush.msra.mxu0 0.0
        %3139 = vmatpush.msra.mxu0 0.0
        %3140 = vmatpush.msra.mxu0 0.0
        %3141 = vmatpush.msra.mxu0 0.0
        %3142 = vmatpush.msra.mxu0 0.0
        %3143 = vmatpush.msra.mxu0 0.0
        %3144 = vmatpush.msra.mxu0 %v3126
        %3145 = vmatpush.msra.mxu0 %v3125
        %3146 = vmatmul.f32.gmra.mxu0 %v3128
        %v3147 = vpop.f32.mrf.mxu0
        %v3148 = vadd.f32 0.0, %v3147
        %3149 = vdwg.mxu0
        %v3151 = vsel %vm2998, %v3120, 0
        %3153 = vmatpush.msra.mxu0 0.0
        %3154 = vmatpush.msra.mxu0 0.0
        %3155 = vmatpush.msra.mxu0 0.0
        %3156 = vmatpush.msra.mxu0 0.0
        %3157 = vmatpush.msra.mxu0 0.0
        %3158 = vmatpush.msra.mxu0 0.0
        %3159 = vmatpush.msra.mxu0 0.0
        %3160 = vmatpush.msra.mxu0 0.0
        %3161 = vmatpush.msra.mxu0 0.0
        %3162 = vmatpush.msra.mxu0 0.0
        %3163 = vmatpush.msra.mxu0 0.0
        %3164 = vmatpush.msra.mxu0 0.0
        %3165 = vmatpush.msra.mxu0 0.0
        %3166 = vmatpush.msra.mxu0 0.0
        %3167 = vmatpush.msra.mxu0 %v3122
        %3168 = vmatpush.msra.mxu0 %v3121
        %3169 = vmatmul.f32.gmra.mxu0 %v3151
        %v3170 = vpop.f32.mrf.mxu0
        %v3171 = vadd.f32 %v3148, %v3170
        %3172 = vdwg.mxu0
        %v3173 = vld [vmem:[#allocation4 + $0x4] sm:$0x1]
        %s3174 = scalar_lea.vmem %s5, 32
        %v3175 = vld [vmem:[%s3174] sm:$0xff]
        %v3176 = vld [vmem:[%s3174 + $0x8] sm:$0xff]
        %v3178 = vsel %vm2998, %v3173, 0
        %3180 = vmatpush.msra.mxu0 0.0
        %3181 = vmatpush.msra.mxu0 0.0
        %3182 = vmatpush.msra.mxu0 0.0
        %3183 = vmatpush.msra.mxu0 0.0
        %3184 = vmatpush.msra.mxu0 0.0
        %3185 = vmatpush.msra.mxu0 0.0
        %3186 = vmatpush.msra.mxu0 0.0
        %3187 = vmatpush.msra.mxu0 0.0
        %3188 = vmatpush.msra.mxu0 0.0
        %3189 = vmatpush.msra.mxu0 0.0
        %3190 = vmatpush.msra.mxu0 0.0
        %3191 = vmatpush.msra.mxu0 0.0
        %3192 = vmatpush.msra.mxu0 0.0
        %3193 = vmatpush.msra.mxu0 0.0
        %3194 = vmatpush.msra.mxu0 %v3176
        %3195 = vmatpush.msra.mxu0 %v3175
        %3196 = vmatmul.f32.gmra.mxu0 %v3178
        %v3197 = vpop.f32.mrf.mxu0
        %v3198 = vadd.f32 0.0, %v3197
        %3199 = vdwg.mxu0
        %v3200 = vadd.f32 %v3171, %v3198
        %v3201 = vld [vmem:[#allocation4 + $0x6] sm:$0x1]
        %s3202 = scalar_lea.vmem %s5, 48
        %v3203 = vld [vmem:[%s3202] sm:$0xff]
        %v3204 = vld [vmem:[%s3202 + $0x8] sm:$0xff]
        %v3206 = vsel %vm2998, %v3201, 0
        %3208 = vmatpush.msra.mxu0 0.0
        %3209 = vmatpush.msra.mxu0 0.0
        %3210 = vmatpush.msra.mxu0 0.0
        %3211 = vmatpush.msra.mxu0 0.0
        %3212 = vmatpush.msra.mxu0 0.0
        %3213 = vmatpush.msra.mxu0 0.0
        %3214 = vmatpush.msra.mxu0 0.0
        %3215 = vmatpush.msra.mxu0 0.0
        %3216 = vmatpush.msra.mxu0 0.0
        %3217 = vmatpush.msra.mxu0 0.0
        %3218 = vmatpush.msra.mxu0 0.0
        %3219 = vmatpush.msra.mxu0 0.0
        %3220 = vmatpush.msra.mxu0 0.0
        %3221 = vmatpush.msra.mxu0 0.0
        %3222 = vmatpush.msra.mxu0 %v3204
        %3223 = vmatpush.msra.mxu0 %v3203
        %3224 = vmatmul.f32.gmra.mxu0 %v3206
        %v3225 = vpop.f32.mrf.mxu0
        %v3226 = vadd.f32 0.0, %v3225
        %3227 = vdwg.mxu0
        %v3228 = vadd.f32 %v3200, %v3226
        %v3229 = vld [vmem:[#allocation4 + $0x8] sm:$0x1]
        %s3230 = scalar_lea.vmem %s5, 64
        %v3231 = vld [vmem:[%s3230] sm:$0xff]
        %v3232 = vld [vmem:[%s3230 + $0x8] sm:$0xff]
        %v3234 = vsel %vm2998, %v3229, 0
        %3236 = vmatpush.msra.mxu0 0.0
        %3237 = vmatpush.msra.mxu0 0.0
        %3238 = vmatpush.msra.mxu0 0.0
        %3239 = vmatpush.msra.mxu0 0.0
        %3240 = vmatpush.msra.mxu0 0.0
        %3241 = vmatpush.msra.mxu0 0.0
        %3242 = vmatpush.msra.mxu0 0.0
        %3243 = vmatpush.msra.mxu0 0.0
        %3244 = vmatpush.msra.mxu0 0.0
        %3245 = vmatpush.msra.mxu0 0.0
        %3246 = vmatpush.msra.mxu0 0.0
        %3247 = vmatpush.msra.mxu0 0.0
        %3248 = vmatpush.msra.mxu0 0.0
        %3249 = vmatpush.msra.mxu0 0.0
        %3250 = vmatpush.msra.mxu0 %v3232
        %3251 = vmatpush.msra.mxu0 %v3231
        %3252 = vmatmul.f32.gmra.mxu0 %v3234
        %v3253 = vpop.f32.mrf.mxu0
        %v3254 = vadd.f32 0.0, %v3253
        %3255 = vdwg.mxu0
        %v3256 = vadd.f32 %v3228, %v3254
        %v3257 = vld [vmem:[#allocation4 + $0x20] sm:$0x1]
        %s3258 = scalar_lea.vmem %s5, 80
        %v3259 = vld [vmem:[%s3258] sm:$0xff]
        %v3260 = vld [vmem:[%s3258 + $0x8] sm:$0xff]
        %v3262 = vsel %vm2998, %v3257, 0
        %3264 = vmatpush.msra.mxu0 0.0
        %3265 = vmatpush.msra.mxu0 0.0
        %3266 = vmatpush.msra.mxu0 0.0
        %3267 = vmatpush.msra.mxu0 0.0
        %3268 = vmatpush.msra.mxu0 0.0
        %3269 = vmatpush.msra.mxu0 0.0
        %3270 = vmatpush.msra.mxu0 0.0
        %3271 = vmatpush.msra.mxu0 0.0
        %3272 = vmatpush.msra.mxu0 0.0
        %3273 = vmatpush.msra.mxu0 0.0
        %3274 = vmatpush.msra.mxu0 0.0
        %3275 = vmatpush.msra.mxu0 0.0
        %3276 = vmatpush.msra.mxu0 0.0
        %3277 = vmatpush.msra.mxu0 0.0
        %3278 = vmatpush.msra.mxu0 %v3260
        %3279 = vmatpush.msra.mxu0 %v3259
        %3280 = vmatmul.f32.gmra.mxu0 %v3262
        %v3281 = vpop.f32.mrf.mxu0
        %v3282 = vadd.f32 0.0, %v3281
        %3283 = vdwg.mxu0
        %v3284 = vadd.f32 %v3256, %v3282
        %v3285 = vld [vmem:[#allocation4 + $0x22] sm:$0x1]
        %s3286 = scalar_lea.vmem %s5, 96
        %v3287 = vld [vmem:[%s3286] sm:$0xff]
        %v3288 = vld [vmem:[%s3286 + $0x8] sm:$0xff]
        %v3290 = vsel %vm2998, %v3285, 0
        %3292 = vmatpush.msra.mxu0 0.0
        %3293 = vmatpush.msra.mxu0 0.0
        %3294 = vmatpush.msra.mxu0 0.0
        %3295 = vmatpush.msra.mxu0 0.0
        %3296 = vmatpush.msra.mxu0 0.0
        %3297 = vmatpush.msra.mxu0 0.0
        %3298 = vmatpush.msra.mxu0 0.0
        %3299 = vmatpush.msra.mxu0 0.0
        %3300 = vmatpush.msra.mxu0 0.0
        %3301 = vmatpush.msra.mxu0 0.0
        %3302 = vmatpush.msra.mxu0 0.0
        %3303 = vmatpush.msra.mxu0 0.0
        %3304 = vmatpush.msra.mxu0 0.0
        %3305 = vmatpush.msra.mxu0 0.0
        %3306 = vmatpush.msra.mxu0 %v3288
        %3307 = vmatpush.msra.mxu0 %v3287
        %3308 = vmatmul.f32.gmra.mxu0 %v3290
        %v3309 = vpop.f32.mrf.mxu0
        %v3310 = vadd.f32 0.0, %v3309
        %3311 = vdwg.mxu0
        %v3312 = vadd.f32 %v3284, %v3310
        %v3313 = vld [vmem:[#allocation4 + $0x24] sm:$0x1]
        %s3314 = scalar_lea.vmem %s5, 112
        %v3315 = vld [vmem:[%s3314] sm:$0xff]
        %v3316 = vld [vmem:[%s3314 + $0x8] sm:$0xff]
        %v3318 = vsel %vm2998, %v3313, 0
        %3320 = vmatpush.msra.mxu0 0.0
        %3321 = vmatpush.msra.mxu0 0.0
        %3322 = vmatpush.msra.mxu0 0.0
        %3323 = vmatpush.msra.mxu0 0.0
        %3324 = vmatpush.msra.mxu0 0.0
        %3325 = vmatpush.msra.mxu0 0.0
        %3326 = vmatpush.msra.mxu0 0.0
        %3327 = vmatpush.msra.mxu0 0.0
        %3328 = vmatpush.msra.mxu0 0.0
        %3329 = vmatpush.msra.mxu0 0.0
        %3330 = vmatpush.msra.mxu0 0.0
        %3331 = vmatpush.msra.mxu0 0.0
        %3332 = vmatpush.msra.mxu0 0.0
        %3333 = vmatpush.msra.mxu0 0.0
        %3334 = vmatpush.msra.mxu0 %v3316
        %3335 = vmatpush.msra.mxu0 %v3315
        %3336 = vmatmul.f32.gmra.mxu0 %v3318
        %v3337 = vpop.f32.mrf.mxu0
        %v3338 = vadd.f32 0.0, %v3337
        %3339 = vdwg.mxu0
        %v3340 = vadd.f32 %v3312, %v3338
        %v3341 = vld [vmem:[#allocation4 + $0x26] sm:$0x1]
        %s3342 = scalar_lea.vmem %s5, 128
        %v3343 = vld [vmem:[%s3342] sm:$0xff]
        %v3344 = vld [vmem:[%s3342 + $0x8] sm:$0xff]
        %v3346 = vsel %vm2998, %v3341, 0
        %3348 = vmatpush.msra.mxu0 0.0
        %3349 = vmatpush.msra.mxu0 0.0
        %3350 = vmatpush.msra.mxu0 0.0
        %3351 = vmatpush.msra.mxu0 0.0
        %3352 = vmatpush.msra.mxu0 0.0
        %3353 = vmatpush.msra.mxu0 0.0
        %3354 = vmatpush.msra.mxu0 0.0
        %3355 = vmatpush.msra.mxu0 0.0
        %3356 = vmatpush.msra.mxu0 0.0
        %3357 = vmatpush.msra.mxu0 0.0
        %3358 = vmatpush.msra.mxu0 0.0
        %3359 = vmatpush.msra.mxu0 0.0
        %3360 = vmatpush.msra.mxu0 0.0
        %3361 = vmatpush.msra.mxu0 0.0
        %3362 = vmatpush.msra.mxu0 %v3344
        %3363 = vmatpush.msra.mxu0 %v3343
        %3364 = vmatmul.f32.gmra.mxu0 %v3346
        %v3365 = vpop.f32.mrf.mxu0
        %v3366 = vadd.f32 0.0, %v3365
        %3367 = vdwg.mxu0
        %v3368 = vadd.f32 %v3340, %v3366
        %v3369 = vld [vmem:[#allocation4 + $0x28] sm:$0x1]
        %s3370 = scalar_lea.vmem %s5, 144
        %v3371 = vld [vmem:[%s3370] sm:$0xff]
        %v3372 = vld [vmem:[%s3370 + $0x8] sm:$0xff]
        %v3374 = vsel %vm2998, %v3369, 0
        %3376 = vmatpush.msra.mxu0 0.0
        %3377 = vmatpush.msra.mxu0 0.0
        %3378 = vmatpush.msra.mxu0 0.0
        %3379 = vmatpush.msra.mxu0 0.0
        %3380 = vmatpush.msra.mxu0 0.0
        %3381 = vmatpush.msra.mxu0 0.0
        %3382 = vmatpush.msra.mxu0 0.0
        %3383 = vmatpush.msra.mxu0 0.0
        %3384 = vmatpush.msra.mxu0 0.0
        %3385 = vmatpush.msra.mxu0 0.0
        %3386 = vmatpush.msra.mxu0 0.0
        %3387 = vmatpush.msra.mxu0 0.0
        %3388 = vmatpush.msra.mxu0 0.0
        %3389 = vmatpush.msra.mxu0 0.0
        %3390 = vmatpush.msra.mxu0 %v3372
        %3391 = vmatpush.msra.mxu0 %v3371
        %3392 = vmatmul.f32.gmra.mxu0 %v3374
        %v3393 = vpop.f32.mrf.mxu0
        %v3394 = vadd.f32 0.0, %v3393
        %3395 = vdwg.mxu0
        %v3396 = vadd.f32 %v3368, %v3394
        %v3397 = vld [vmem:[#allocation4 + $0x40] sm:$0x1]
        %s3398 = scalar_lea.vmem %s5, 160
        %v3399 = vld [vmem:[%s3398] sm:$0xff]
        %v3400 = vld [vmem:[%s3398 + $0x8] sm:$0xff]
        %v3402 = vsel %vm2998, %v3397, 0
        %3404 = vmatpush.msra.mxu0 0.0
        %3405 = vmatpush.msra.mxu0 0.0
        %3406 = vmatpush.msra.mxu0 0.0
        %3407 = vmatpush.msra.mxu0 0.0
        %3408 = vmatpush.msra.mxu0 0.0
        %3409 = vmatpush.msra.mxu0 0.0
        %3410 = vmatpush.msra.mxu0 0.0
        %3411 = vmatpush.msra.mxu0 0.0
        %3412 = vmatpush.msra.mxu0 0.0
        %3413 = vmatpush.msra.mxu0 0.0
        %3414 = vmatpush.msra.mxu0 0.0
        %3415 = vmatpush.msra.mxu0 0.0
        %3416 = vmatpush.msra.mxu0 0.0
        %3417 = vmatpush.msra.mxu0 0.0
        %3418 = vmatpush.msra.mxu0 %v3400
        %3419 = vmatpush.msra.mxu0 %v3399
        %3420 = vmatmul.f32.gmra.mxu0 %v3402
        %v3421 = vpop.f32.mrf.mxu0
        %v3422 = vadd.f32 0.0, %v3421
        %3423 = vdwg.mxu0
        %v3424 = vadd.f32 %v3396, %v3422
        %v3425 = vld [vmem:[#allocation4 + $0x42] sm:$0x1]
        %s3426 = scalar_lea.vmem %s5, 176
        %v3427 = vld [vmem:[%s3426] sm:$0xff]
        %v3428 = vld [vmem:[%s3426 + $0x8] sm:$0xff]
        %v3430 = vsel %vm2998, %v3425, 0
        %3432 = vmatpush.msra.mxu0 0.0
        %3433 = vmatpush.msra.mxu0 0.0
        %3434 = vmatpush.msra.mxu0 0.0
        %3435 = vmatpush.msra.mxu0 0.0
        %3436 = vmatpush.msra.mxu0 0.0
        %3437 = vmatpush.msra.mxu0 0.0
        %3438 = vmatpush.msra.mxu0 0.0
        %3439 = vmatpush.msra.mxu0 0.0
        %3440 = vmatpush.msra.mxu0 0.0
        %3441 = vmatpush.msra.mxu0 0.0
        %3442 = vmatpush.msra.mxu0 0.0
        %3443 = vmatpush.msra.mxu0 0.0
        %3444 = vmatpush.msra.mxu0 0.0
        %3445 = vmatpush.msra.mxu0 0.0
        %3446 = vmatpush.msra.mxu0 %v3428
        %3447 = vmatpush.msra.mxu0 %v3427
        %3448 = vmatmul.f32.gmra.mxu0 %v3430
        %v3449 = vpop.f32.mrf.mxu0
        %v3450 = vadd.f32 0.0, %v3449
        %3451 = vdwg.mxu0
        %v3452 = vadd.f32 %v3424, %v3450
        %v3453 = vld [vmem:[#allocation4 + $0x44] sm:$0x1]
        %s3454 = scalar_lea.vmem %s5, 192
        %v3455 = vld [vmem:[%s3454] sm:$0xff]
        %v3456 = vld [vmem:[%s3454 + $0x8] sm:$0xff]
        %v3458 = vsel %vm2998, %v3453, 0
        %3460 = vmatpush.msra.mxu0 0.0
        %3461 = vmatpush.msra.mxu0 0.0
        %3462 = vmatpush.msra.mxu0 0.0
        %3463 = vmatpush.msra.mxu0 0.0
        %3464 = vmatpush.msra.mxu0 0.0
        %3465 = vmatpush.msra.mxu0 0.0
        %3466 = vmatpush.msra.mxu0 0.0
        %3467 = vmatpush.msra.mxu0 0.0
        %3468 = vmatpush.msra.mxu0 0.0
        %3469 = vmatpush.msra.mxu0 0.0
        %3470 = vmatpush.msra.mxu0 0.0
        %3471 = vmatpush.msra.mxu0 0.0
        %3472 = vmatpush.msra.mxu0 0.0
        %3473 = vmatpush.msra.mxu0 0.0
        %3474 = vmatpush.msra.mxu0 %v3456
        %3475 = vmatpush.msra.mxu0 %v3455
        %3476 = vmatmul.f32.gmra.mxu0 %v3458
        %v3477 = vpop.f32.mrf.mxu0
        %v3478 = vadd.f32 0.0, %v3477
        %3479 = vdwg.mxu0
        %v3480 = vadd.f32 %v3452, %v3478
        %v3481 = vld [vmem:[#allocation4 + $0x46] sm:$0x1]
        %s3482 = scalar_lea.vmem %s5, 208
        %v3483 = vld [vmem:[%s3482] sm:$0xff]
        %v3484 = vld [vmem:[%s3482 + $0x8] sm:$0xff]
        %v3486 = vsel %vm2998, %v3481, 0
        %3488 = vmatpush.msra.mxu0 0.0
        %3489 = vmatpush.msra.mxu0 0.0
        %3490 = vmatpush.msra.mxu0 0.0
        %3491 = vmatpush.msra.mxu0 0.0
        %3492 = vmatpush.msra.mxu0 0.0
        %3493 = vmatpush.msra.mxu0 0.0
        %3494 = vmatpush.msra.mxu0 0.0
        %3495 = vmatpush.msra.mxu0 0.0
        %3496 = vmatpush.msra.mxu0 0.0
        %3497 = vmatpush.msra.mxu0 0.0
        %3498 = vmatpush.msra.mxu0 0.0
        %3499 = vmatpush.msra.mxu0 0.0
        %3500 = vmatpush.msra.mxu0 0.0
        %3501 = vmatpush.msra.mxu0 0.0
        %3502 = vmatpush.msra.mxu0 %v3484
        %3503 = vmatpush.msra.mxu0 %v3483
        %3504 = vmatmul.f32.gmra.mxu0 %v3486
        %v3505 = vpop.f32.mrf.mxu0
        %v3506 = vadd.f32 0.0, %v3505
        %3507 = vdwg.mxu0
        %v3508 = vadd.f32 %v3480, %v3506
        %v3509 = vld [vmem:[#allocation4 + $0x48] sm:$0x1]
        %s3510 = scalar_lea.vmem %s5, 224
        %v3511 = vld [vmem:[%s3510] sm:$0xff]
        %v3512 = vld [vmem:[%s3510 + $0x8] sm:$0xff]
        %v3514 = vsel %vm2998, %v3509, 0
        %3516 = vmatpush.msra.mxu0 0.0
        %3517 = vmatpush.msra.mxu0 0.0
        %3518 = vmatpush.msra.mxu0 0.0
        %3519 = vmatpush.msra.mxu0 0.0
        %3520 = vmatpush.msra.mxu0 0.0
        %3521 = vmatpush.msra.mxu0 0.0
        %3522 = vmatpush.msra.mxu0 0.0
        %3523 = vmatpush.msra.mxu0 0.0
        %3524 = vmatpush.msra.mxu0 0.0
        %3525 = vmatpush.msra.mxu0 0.0
        %3526 = vmatpush.msra.mxu0 0.0
        %3527 = vmatpush.msra.mxu0 0.0
        %3528 = vmatpush.msra.mxu0 0.0
        %3529 = vmatpush.msra.mxu0 0.0
        %3530 = vmatpush.msra.mxu0 %v3512
        %3531 = vmatpush.msra.mxu0 %v3511
        %3532 = vmatmul.f32.gmra.mxu0 %v3514
        %v3533 = vpop.f32.mrf.mxu0
        %v3534 = vadd.f32 0.0, %v3533
        %3535 = vdwg.mxu0
        %v3536 = vadd.f32 %v3508, %v3534
        %v3537 = vld [vmem:[#allocation4 + $0x60] sm:$0x1]
        %s3538 = scalar_lea.vmem %s5, 240
        %v3539 = vld [vmem:[%s3538] sm:$0xff]
        %v3540 = vld [vmem:[%s3538 + $0x8] sm:$0xff]
        %v3542 = vsel %vm2998, %v3537, 0
        %3544 = vmatpush.msra.mxu0 0.0
        %3545 = vmatpush.msra.mxu0 0.0
        %3546 = vmatpush.msra.mxu0 0.0
        %3547 = vmatpush.msra.mxu0 0.0
        %3548 = vmatpush.msra.mxu0 0.0
        %3549 = vmatpush.msra.mxu0 0.0
        %3550 = vmatpush.msra.mxu0 0.0
        %3551 = vmatpush.msra.mxu0 0.0
        %3552 = vmatpush.msra.mxu0 0.0
        %3553 = vmatpush.msra.mxu0 0.0
        %3554 = vmatpush.msra.mxu0 0.0
        %3555 = vmatpush.msra.mxu0 0.0
        %3556 = vmatpush.msra.mxu0 0.0
        %3557 = vmatpush.msra.mxu0 0.0
        %3558 = vmatpush.msra.mxu0 %v3540
        %3559 = vmatpush.msra.mxu0 %v3539
        %3560 = vmatmul.f32.gmra.mxu0 %v3542
        %v3561 = vpop.f32.mrf.mxu0
        %v3562 = vadd.f32 0.0, %v3561
        %3563 = vdwg.mxu0
        %v3564 = vadd.f32 %v3536, %v3562
        %v3565 = vld [vmem:[#allocation4 + $0x62] sm:$0x1]
        %s3566 = scalar_lea.vmem %s5, 256
        %v3567 = vld [vmem:[%s3566] sm:$0xff]
        %v3568 = vld [vmem:[%s3566 + $0x8] sm:$0xff]
        %v3570 = vsel %vm2998, %v3565, 0
        %3572 = vmatpush.msra.mxu0 0.0
        %3573 = vmatpush.msra.mxu0 0.0
        %3574 = vmatpush.msra.mxu0 0.0
        %3575 = vmatpush.msra.mxu0 0.0
        %3576 = vmatpush.msra.mxu0 0.0
        %3577 = vmatpush.msra.mxu0 0.0
        %3578 = vmatpush.msra.mxu0 0.0
        %3579 = vmatpush.msra.mxu0 0.0
        %3580 = vmatpush.msra.mxu0 0.0
        %3581 = vmatpush.msra.mxu0 0.0
        %3582 = vmatpush.msra.mxu0 0.0
        %3583 = vmatpush.msra.mxu0 0.0
        %3584 = vmatpush.msra.mxu0 0.0
        %3585 = vmatpush.msra.mxu0 0.0
        %3586 = vmatpush.msra.mxu0 %v3568
        %3587 = vmatpush.msra.mxu0 %v3567
        %3588 = vmatmul.f32.gmra.mxu0 %v3570
        %v3589 = vpop.f32.mrf.mxu0
        %v3590 = vadd.f32 0.0, %v3589
        %3591 = vdwg.mxu0
        %v3592 = vadd.f32 %v3564, %v3590
        %v3593 = vld [vmem:[#allocation4 + $0x64] sm:$0x1]
        %s3594 = scalar_lea.vmem %s5, 272
        %v3595 = vld [vmem:[%s3594] sm:$0xff]
        %v3596 = vld [vmem:[%s3594 + $0x8] sm:$0xff]
        %v3598 = vsel %vm2998, %v3593, 0
        %3600 = vmatpush.msra.mxu0 0.0
        %3601 = vmatpush.msra.mxu0 0.0
        %3602 = vmatpush.msra.mxu0 0.0
        %3603 = vmatpush.msra.mxu0 0.0
        %3604 = vmatpush.msra.mxu0 0.0
        %3605 = vmatpush.msra.mxu0 0.0
        %3606 = vmatpush.msra.mxu0 0.0
        %3607 = vmatpush.msra.mxu0 0.0
        %3608 = vmatpush.msra.mxu0 0.0
        %3609 = vmatpush.msra.mxu0 0.0
        %3610 = vmatpush.msra.mxu0 0.0
        %3611 = vmatpush.msra.mxu0 0.0
        %3612 = vmatpush.msra.mxu0 0.0
        %3613 = vmatpush.msra.mxu0 0.0
        %3614 = vmatpush.msra.mxu0 %v3596
        %3615 = vmatpush.msra.mxu0 %v3595
        %3616 = vmatmul.f32.gmra.mxu0 %v3598
        %v3617 = vpop.f32.mrf.mxu0
        %v3618 = vadd.f32 0.0, %v3617
        %3619 = vdwg.mxu0
        %v3620 = vadd.f32 %v3592, %v3618
        %v3621 = vld [vmem:[#allocation4 + $0x66] sm:$0x1]
        %s3622 = scalar_lea.vmem %s5, 288
        %v3623 = vld [vmem:[%s3622] sm:$0xff]
        %v3624 = vld [vmem:[%s3622 + $0x8] sm:$0xff]
        %v3626 = vsel %vm2998, %v3621, 0
        %3628 = vmatpush.msra.mxu0 0.0
        %3629 = vmatpush.msra.mxu0 0.0
        %3630 = vmatpush.msra.mxu0 0.0
        %3631 = vmatpush.msra.mxu0 0.0
        %3632 = vmatpush.msra.mxu0 0.0
        %3633 = vmatpush.msra.mxu0 0.0
        %3634 = vmatpush.msra.mxu0 0.0
        %3635 = vmatpush.msra.mxu0 0.0
        %3636 = vmatpush.msra.mxu0 0.0
        %3637 = vmatpush.msra.mxu0 0.0
        %3638 = vmatpush.msra.mxu0 0.0
        %3639 = vmatpush.msra.mxu0 0.0
        %3640 = vmatpush.msra.mxu0 0.0
        %3641 = vmatpush.msra.mxu0 0.0
        %3642 = vmatpush.msra.mxu0 %v3624
        %3643 = vmatpush.msra.mxu0 %v3623
        %3644 = vmatmul.f32.gmra.mxu0 %v3626
        %v3645 = vpop.f32.mrf.mxu0
        %v3646 = vadd.f32 0.0, %v3645
        %3647 = vdwg.mxu0
        %v3648 = vadd.f32 %v3620, %v3646
        %v3649 = vld [vmem:[#allocation4 + $0x68] sm:$0x1]
        %s3650 = scalar_lea.vmem %s5, 304
        %v3651 = vld [vmem:[%s3650] sm:$0xff]
        %v3652 = vld [vmem:[%s3650 + $0x8] sm:$0xff]
        %v3654 = vsel %vm2998, %v3649, 0
        %3656 = vmatpush.msra.mxu0 0.0
        %3657 = vmatpush.msra.mxu0 0.0
        %3658 = vmatpush.msra.mxu0 0.0
        %3659 = vmatpush.msra.mxu0 0.0
        %3660 = vmatpush.msra.mxu0 0.0
        %3661 = vmatpush.msra.mxu0 0.0
        %3662 = vmatpush.msra.mxu0 0.0
        %3663 = vmatpush.msra.mxu0 0.0
        %3664 = vmatpush.msra.mxu0 0.0
        %3665 = vmatpush.msra.mxu0 0.0
        %3666 = vmatpush.msra.mxu0 0.0
        %3667 = vmatpush.msra.mxu0 0.0
        %3668 = vmatpush.msra.mxu0 0.0
        %3669 = vmatpush.msra.mxu0 0.0
        %3670 = vmatpush.msra.mxu0 %v3652
        %3671 = vmatpush.msra.mxu0 %v3651
        %3672 = vmatmul.f32.gmra.mxu0 %v3654
        %v3673 = vpop.f32.mrf.mxu0
        %v3674 = vadd.f32 0.0, %v3673
        %3675 = vdwg.mxu0
        %v3676 = vadd.f32 %v3648, %v3674
        %v3677 = vld [vmem:[#allocation4 + $0x80] sm:$0x1]
        %s3678 = scalar_lea.vmem %s5, 320
        %v3679 = vld [vmem:[%s3678] sm:$0xff]
        %v3680 = vld [vmem:[%s3678 + $0x8] sm:$0xff]
        %v3682 = vsel %vm2998, %v3677, 0
        %3684 = vmatpush.msra.mxu0 0.0
        %3685 = vmatpush.msra.mxu0 0.0
        %3686 = vmatpush.msra.mxu0 0.0
        %3687 = vmatpush.msra.mxu0 0.0
        %3688 = vmatpush.msra.mxu0 0.0
        %3689 = vmatpush.msra.mxu0 0.0
        %3690 = vmatpush.msra.mxu0 0.0
        %3691 = vmatpush.msra.mxu0 0.0
        %3692 = vmatpush.msra.mxu0 0.0
        %3693 = vmatpush.msra.mxu0 0.0
        %3694 = vmatpush.msra.mxu0 0.0
        %3695 = vmatpush.msra.mxu0 0.0
        %3696 = vmatpush.msra.mxu0 0.0
        %3697 = vmatpush.msra.mxu0 0.0
        %3698 = vmatpush.msra.mxu0 %v3680
        %3699 = vmatpush.msra.mxu0 %v3679
        %3700 = vmatmul.f32.gmra.mxu0 %v3682
        %v3701 = vpop.f32.mrf.mxu0
        %v3702 = vadd.f32 0.0, %v3701
        %3703 = vdwg.mxu0
        %v3704 = vadd.f32 %v3676, %v3702
        %v3705 = vld [vmem:[#allocation4 + $0x82] sm:$0x1]
        %s3706 = scalar_lea.vmem %s5, 336
        %v3707 = vld [vmem:[%s3706] sm:$0xff]
        %v3708 = vld [vmem:[%s3706 + $0x8] sm:$0xff]
        %v3710 = vsel %vm2998, %v3705, 0
        %3712 = vmatpush.msra.mxu0 0.0
        %3713 = vmatpush.msra.mxu0 0.0
        %3714 = vmatpush.msra.mxu0 0.0
        %3715 = vmatpush.msra.mxu0 0.0
        %3716 = vmatpush.msra.mxu0 0.0
        %3717 = vmatpush.msra.mxu0 0.0
        %3718 = vmatpush.msra.mxu0 0.0
        %3719 = vmatpush.msra.mxu0 0.0
        %3720 = vmatpush.msra.mxu0 0.0
        %3721 = vmatpush.msra.mxu0 0.0
        %3722 = vmatpush.msra.mxu0 0.0
        %3723 = vmatpush.msra.mxu0 0.0
        %3724 = vmatpush.msra.mxu0 0.0
        %3725 = vmatpush.msra.mxu0 0.0
        %3726 = vmatpush.msra.mxu0 %v3708
        %3727 = vmatpush.msra.mxu0 %v3707
        %3728 = vmatmul.f32.gmra.mxu0 %v3710
        %v3729 = vpop.f32.mrf.mxu0
        %v3730 = vadd.f32 0.0, %v3729
        %3731 = vdwg.mxu0
        %v3732 = vadd.f32 %v3704, %v3730
        %v3733 = vld [vmem:[#allocation4 + $0x84] sm:$0x1]
        %s3734 = scalar_lea.vmem %s5, 352
        %v3735 = vld [vmem:[%s3734] sm:$0xff]
        %v3736 = vld [vmem:[%s3734 + $0x8] sm:$0xff]
        %v3738 = vsel %vm2998, %v3733, 0
        %3740 = vmatpush.msra.mxu0 0.0
        %3741 = vmatpush.msra.mxu0 0.0
        %3742 = vmatpush.msra.mxu0 0.0
        %3743 = vmatpush.msra.mxu0 0.0
        %3744 = vmatpush.msra.mxu0 0.0
        %3745 = vmatpush.msra.mxu0 0.0
        %3746 = vmatpush.msra.mxu0 0.0
        %3747 = vmatpush.msra.mxu0 0.0
        %3748 = vmatpush.msra.mxu0 0.0
        %3749 = vmatpush.msra.mxu0 0.0
        %3750 = vmatpush.msra.mxu0 0.0
        %3751 = vmatpush.msra.mxu0 0.0
        %3752 = vmatpush.msra.mxu0 0.0
        %3753 = vmatpush.msra.mxu0 0.0
        %3754 = vmatpush.msra.mxu0 %v3736
        %3755 = vmatpush.msra.mxu0 %v3735
        %3756 = vmatmul.f32.gmra.mxu0 %v3738
        %v3757 = vpop.f32.mrf.mxu0
        %v3758 = vadd.f32 0.0, %v3757
        %3759 = vdwg.mxu0
        %v3760 = vadd.f32 %v3732, %v3758
        %v3761 = vld [vmem:[#allocation4 + $0x86] sm:$0x1]
        %s3762 = scalar_lea.vmem %s5, 368
        %v3763 = vld [vmem:[%s3762] sm:$0xff]
        %v3764 = vld [vmem:[%s3762 + $0x8] sm:$0xff]
        %v3766 = vsel %vm2998, %v3761, 0
        %3768 = vmatpush.msra.mxu0 0.0
        %3769 = vmatpush.msra.mxu0 0.0
        %3770 = vmatpush.msra.mxu0 0.0
        %3771 = vmatpush.msra.mxu0 0.0
        %3772 = vmatpush.msra.mxu0 0.0
        %3773 = vmatpush.msra.mxu0 0.0
        %3774 = vmatpush.msra.mxu0 0.0
        %3775 = vmatpush.msra.mxu0 0.0
        %3776 = vmatpush.msra.mxu0 0.0
        %3777 = vmatpush.msra.mxu0 0.0
        %3778 = vmatpush.msra.mxu0 0.0
        %3779 = vmatpush.msra.mxu0 0.0
        %3780 = vmatpush.msra.mxu0 0.0
        %3781 = vmatpush.msra.mxu0 0.0
        %3782 = vmatpush.msra.mxu0 %v3764
        %3783 = vmatpush.msra.mxu0 %v3763
        %3784 = vmatmul.f32.gmra.mxu0 %v3766
        %v3785 = vpop.f32.mrf.mxu0
        %v3786 = vadd.f32 0.0, %v3785
        %3787 = vdwg.mxu0
        %v3788 = vadd.f32 %v3760, %v3786
        %v3789 = vld [vmem:[#allocation4 + $0x88] sm:$0x1]
        %s3790 = scalar_lea.vmem %s5, 384
        %v3791 = vld [vmem:[%s3790] sm:$0xff]
        %v3792 = vld [vmem:[%s3790 + $0x8] sm:$0xff]
        %v3794 = vsel %vm2998, %v3789, 0
        %3796 = vmatpush.msra.mxu0 0.0
        %3797 = vmatpush.msra.mxu0 0.0
        %3798 = vmatpush.msra.mxu0 0.0
        %3799 = vmatpush.msra.mxu0 0.0
        %3800 = vmatpush.msra.mxu0 0.0
        %3801 = vmatpush.msra.mxu0 0.0
        %3802 = vmatpush.msra.mxu0 0.0
        %3803 = vmatpush.msra.mxu0 0.0
        %3804 = vmatpush.msra.mxu0 0.0
        %3805 = vmatpush.msra.mxu0 0.0
        %3806 = vmatpush.msra.mxu0 0.0
        %3807 = vmatpush.msra.mxu0 0.0
        %3808 = vmatpush.msra.mxu0 0.0
        %3809 = vmatpush.msra.mxu0 0.0
        %3810 = vmatpush.msra.mxu0 %v3792
        %3811 = vmatpush.msra.mxu0 %v3791
        %3812 = vmatmul.f32.gmra.mxu0 %v3794
        %v3813 = vpop.f32.mrf.mxu0
        %v3814 = vadd.f32 0.0, %v3813
        %3815 = vdwg.mxu0
        %v3816 = vadd.f32 %v3788, %v3814
        %v3817 = vld [vmem:[%s6] sm:$0x1]
        %v3818 = vadd.f32 %v3816, %v3817
        %v3819 = vmax.f32 %v3818, 0.0
        %v3820 = vld [vmem:[%s7] sm:$0xff]
        %v3821 = vld [vmem:[%s7 + $0x8] sm:$0xff]
        %v3822 = vld [vmem:[%s7 + $0x10] sm:$0xff]
        %v3823 = vld [vmem:[%s7 + $0x18] sm:$0xff]
        %v3824 = vld [vmem:[%s7 + $0x20] sm:$0xff]
        %v3825 = vld [vmem:[%s7 + $0x28] sm:$0xff]
        %v3826 = vld [vmem:[%s7 + $0x30] sm:$0xff]
        %v3827 = vld [vmem:[%s7 + $0x38] sm:$0xff]
        %v3828 = vld [vmem:[%s7 + $0x40] sm:$0xff]
        %v3829 = vld [vmem:[%s7 + $0x48] sm:$0xff]
        %v3830 = vld [vmem:[%s7 + $0x50] sm:$0xff]
        %v3831 = vld [vmem:[%s7 + $0x58] sm:$0xff]
        %v3832 = vld [vmem:[%s7 + $0x60] sm:$0xff]
        %v3833 = vld [vmem:[%s7 + $0x68] sm:$0xff]
        %v3834 = vld [vmem:[%s7 + $0x70] sm:$0xff]
        %v3835 = vld [vmem:[%s7 + $0x78] sm:$0xff]
        %v3836 = vld [vmem:[%s8] sm:$0x1]
        %3837 = vmatpush.msra.mxu0 %v3835
        %3838 = vmatpush.msra.mxu0 %v3834
        %3839 = vmatpush.msra.mxu0 %v3833
        %3840 = vmatpush.msra.mxu0 %v3832
        %3841 = vmatpush.msra.mxu0 %v3831
        %3842 = vmatpush.msra.mxu0 %v3830
        %3843 = vmatpush.msra.mxu0 %v3829
        %3844 = vmatpush.msra.mxu0 %v3828
        %3845 = vmatpush.msra.mxu0 %v3827
        %3846 = vmatpush.msra.mxu0 %v3826
        %3847 = vmatpush.msra.mxu0 %v3825
        %3848 = vmatpush.msra.mxu0 %v3824
        %3849 = vmatpush.msra.mxu0 %v3823
        %3850 = vmatpush.msra.mxu0 %v3822
        %3851 = vmatpush.msra.mxu0 %v3821
        %3852 = vmatpush.msra.mxu0 %v3820
        %3853 = vmatmul.f32.gmra.mxu0 %v3819
        %v3854 = vpop.f32.mrf.mxu0
        %v3855 = vadd.f32 %v3836, %v3854
        %3856 = vdwg.mxu0
        %3857 = vst [vmem:[%s324] sm:$0x1] %v3855
        %s3858 = sand.u32 %s225, 1
        %s3859 = scalar_lea.sflag [#allocation6], %s3858
        %s3860 = sand.u32 %s225, 1
        %s3861 = scalar_lea.vmem [#allocation5], %s3860
        // Predicated region
        $region57: #{dql_forward.1} parent=55 // pred_check
          %p3862 = pneg %p235
        $region58: #{dql_forward.1} parent=55 // pred_check_branch
          %3864 = sbr.rel (%p3862) target = $region60
        $region59: #{dql_forward.1} parent=55 // pred_region
          %3866 = vsyncadd %s3859, 0
          %s3867 = scalar_lea.hbm %s9, %s23
          %s3869 = sshll.u32 %s3861, 4
          %s3870 = int_to_ptr.vmem [resolvable:$true] %s3869
          %s3871 = sshll.u32 %s3867, 4
          %s3872 = int_to_ptr.hbm [resolvable:$true] %s3871
          %3874 = dma.vmem_to_hbm [thread:$0]  %s3870, 16, %s3872, %s3859
        $region60: #{dql_forward.1} parent=55 // pred_fallthru
          _
      $region56: #{dql_forward.1} parent=5 // pred_fallthru
        _
      %p3875 = scmp.le.s32.totalorder 2, %s18
      // Predicated region
      $region61: #{dql_forward.1} parent=5 // pred_check
        %p3876 = pneg %p3875
      $region62: #{dql_forward.1} parent=5 // pred_check_branch
        %3878 = sbr.rel (%p3876) target = $region64
      $region63: #{dql_forward.1} parent=5 // pred_region
        %s3879 = ssub.s32 %s18, 2
        // Predicated region
        $region65: #{dql_forward.1} parent=63 // pred_check
          %p3880 = pneg %p241
        $region66: #{dql_forward.1} parent=63 // pred_check_branch
          %3882 = sbr.rel (%p3880) target = $region68
        $region67: #{dql_forward.1} parent=63 // pred_region
          %s3883 = sand.u32 %s226, 1
          %s3884 = scalar_lea.sflag [#allocation6], %s3883
          %s3885 = sand.u32 %s226, 1
          %s3886 = scalar_lea.vmem [#allocation5], %s3885
          %3888 = dma.done %s3884, 16
        $region68: #{dql_forward.1} parent=63 // pred_fallthru
          _
      $region64: #{dql_forward.1} parent=5 // pred_fallthru
        _
    $region6: #{dql_forward.1} parent=1 // loop_footer
      %s22 = sadd.s32 1, %s18
    $region7: #{dql_forward.1} parent=1 // loop_footer_branch
      %17 = sbr.rel target = $region3
    $region8: #{dql_forward.1} parent=1 // loop_exit
      _
    %3889 = vsyncpa [#allocation6], 1
    %s3890 = scalar_lea.sflag [#allocation6], 1
    %3891 = vsyncpa %s3890, 1

</llo_original>
